<compile_context>
chip_gen: v6e
topology: v6e:2x2x1
jax: 0.10.0
libtpu: 0.0.40
codegen_flags: <defaults>
</compile_context>

<pallas_src>
import functools

import jax
import jax.numpy as jnp
from jax.experimental import pallas as pl
from jax.experimental.pallas import tpu as pltpu

INPUT_DIM = 28 * 28          # 784
HIDDEN = 400                 # penultimate_dim
OUTPUT_DIM = 10


def _pad_to(n, m):
    return ((n + m - 1) // m) * m


def _cdiv(a, b):
    return -(-a // b)


IN_P = _pad_to(INPUT_DIM, 128)    # 896
HID_P = _pad_to(HIDDEN, 128)      # 512
OUT_P = _pad_to(OUTPUT_DIM, 128)  # 128

VMEM_LIMIT = 24 * 1024 * 1024     # explicit budget; safe on v5e/v6e/v7x


# ---------------------------------------------------------------------------
# Chip-aware batch tiling
# ---------------------------------------------------------------------------
@functools.lru_cache(maxsize=None)
def _chip_config():
    """(min_tiles, max_rows_per_tile). v7x has 2 TensorCores -> want grid >= 2."""
    try:
        kind = jax.devices()[0].device_kind.lower()
    except Exception:  # pragma: no cover - defensive
        kind = ""
    if "v7" in kind:
        return (2, 256)
    return (1, 512)


def _batch_tiling(b):
    """Padded batch size and batch-tile size (Python ints, chosen per chip)."""
    min_tiles, max_tile = _chip_config()
    b8 = _pad_to(max(b, 8), 8)
    n_tiles = max(min_tiles, _cdiv(b8, max_tile))
    n_tiles = max(1, min(n_tiles, b8 // 8))      # each tile keeps >= 8 rows
    tb = _pad_to(_cdiv(b8, n_tiles), 8)
    bp = tb * n_tiles
    return bp, tb


# ---------------------------------------------------------------------------
# Single-buffering probe for grid-invariant blocks (pl.Buffered(1))
# ---------------------------------------------------------------------------
@functools.lru_cache(maxsize=None)
def _single_buffer_supported():
    """Probe once (eagerly, outside jit) whether pipeline_mode=pl.Buffered(1)
    compiles and computes correctly on this Pallas/Mosaic version."""
    try:
        def _k(x_ref, o_ref):
            o_ref[...] = x_ref[...] + 0.0

        spec = pl.BlockSpec((8, 128), lambda i: (0, 0),
                            pipeline_mode=pl.Buffered(1))
        fn = pl.pallas_call(
            _k,
            out_shape=jax.ShapeDtypeStruct((8, 128), jnp.float32),
            grid=(1,),
            in_specs=[spec],
            out_specs=pl.BlockSpec((8, 128), lambda i: (0, 0)),
        )
        x = jnp.arange(8 * 128, dtype=jnp.float32).reshape(8, 128)
        out = jax.block_until_ready(fn(x))
        return bool(jnp.array_equal(out, x))
    except Exception:
        return False


def _const_spec(shape):
    """BlockSpec for a grid-invariant (weights / bias / class-mask) block."""
    if _single_buffer_supported():
        return pl.BlockSpec(shape, lambda i: (0, 0), pipeline_mode=pl.Buffered(1))
    return pl.BlockSpec(shape, lambda i: (0, 0))


def _compiler_params():
    return pltpu.CompilerParams(
        dimension_semantics=("parallel",),   # batch axis -> both TCs on v7x
        vmem_limit_bytes=VMEM_LIMIT,
    )


# ---------------------------------------------------------------------------
# Pallas kernels (sparsity masks already folded into w/b; class mask fused in)
# ---------------------------------------------------------------------------
def mlp_full_kernel(x_ref,
                    w1_ref, b1_ref,
                    w2_ref, b2_ref,
                    w3_ref, b3_ref,
                    w4_ref, b4_ref,
                    cmask_ref,
                    out_ref):
    """relu(l1) -> relu(l2) -> relu(l3) -> l4, class-masked, for one batch tile."""
    h = x_ref[...]                                                       # bf16
    h = jnp.dot(h, w1_ref[...], preferred_element_type=jnp.float32) + b1_ref[...]
    h = jnp.maximum(h, 0.0).astype(jnp.bfloat16)
    h = jnp.dot(h, w2_ref[...], preferred_element_type=jnp.float32) + b2_ref[...]
    h = jnp.maximum(h, 0.0).astype(jnp.bfloat16)
    h = jnp.dot(h, w3_ref[...], preferred_element_type=jnp.float32) + b3_ref[...]
    h = jnp.maximum(h, 0.0).astype(jnp.bfloat16)
    out = jnp.dot(h, w4_ref[...], preferred_element_type=jnp.float32) + b4_ref[...]
    out_ref[...] = out * cmask_ref[...]


def mlp_head_kernel(x_ref, w4_ref, b4_ref, cmask_ref, out_ref):
    """Shortcut branch of MLP.forward: x.shape[-1] == penultimate_dim -> layer4 only."""
    out = (jnp.dot(x_ref[...], w4_ref[...],
                   preferred_element_type=jnp.float32) + b4_ref[...])
    out_ref[...] = out * cmask_ref[...]


# ---------------------------------------------------------------------------
# Parameter construction (deterministic, in-script) + mask folding
# ---------------------------------------------------------------------------
def make_mlp_master_params(seed=0, mask_density=0.8):
    """f32 master weights in PyTorch (out, in) layout + binary sparsity masks."""
    key = jax.random.PRNGKey(seed)
    dims = [(INPUT_DIM, HIDDEN), (HIDDEN, HIDDEN), (HIDDEN, HIDDEN), (HIDDEN, OUTPUT_DIM)]
    masters = []
    for din, dout in dims:
        key, kw, kb, kwm, kbm = jax.random.split(key, 5)
        # nn.init.kaiming_normal_(mode='fan_out', nonlinearity='relu'): std = sqrt(2/out)
        std = (2.0 / dout) ** 0.5
        w_pt = jax.random.normal(kw, (dout, din), jnp.float32) * std
        # default nn.Linear bias init: U(-1/sqrt(fan_in), 1/sqrt(fan_in))
        bound = 1.0 / (din ** 0.5)
        b = jax.random.uniform(kb, (dout,), jnp.float32, -bound, bound)
        wm = (jax.random.uniform(kwm, (dout, din)) < mask_density).astype(jnp.float32)
        bm = (jax.random.uniform(kbm, (dout,)) < mask_density).astype(jnp.float32)
        masters.append(dict(w=w_pt, b=b, wm=wm, bm=bm))
    return masters


def fold_device_params(masters):
    """Fold masks into weights (MaskedLinearDynamic semantics), transpose to
    (in, out), pad to TPU tiles and cast weights to bf16.  Call again after any
    mask / weight update (NISPA prune/grow)."""
    # TODO(synk): on v7x store w1-w3 as fp8_e4m3 (per-tensor scale folded into bias)
    #             to halve the weight stream; keep bf16 on v5e/v6e.
    pads = [(IN_P, HID_P), (HID_P, HID_P), (HID_P, HID_P), (HID_P, OUT_P)]
    devs = []
    for m, (pin, pout) in zip(masters, pads):
        w = (m["w"] * m["wm"]).T            # (in, out), masked, f32
        b = m["b"] * m["bm"]                # (out,), masked, f32
        w_pad = jnp.zeros((pin, pout), jnp.bfloat16)
        w_pad = w_pad.at[: w.shape[0], : w.shape[1]].set(w.astype(jnp.bfloat16))
        b_pad = jnp.zeros((1, pout), jnp.float32).at[0, : b.shape[0]].set(b)
        devs.append(dict(w=w_pad, b=b_pad))
    return devs


# ---------------------------------------------------------------------------
# Wrapper (mirrors MLP.forward)
# ---------------------------------------------------------------------------
def _class_mask_padded(current_classes):
    """(1, OUT_P) f32 mask (ones over valid classes when current_classes is None)."""
    m = jnp.zeros((1, OUT_P), jnp.float32)
    if current_classes is None:
        return m.at[0, :OUTPUT_DIM].set(1.0)
    idx = jnp.asarray(current_classes, jnp.int32)
    return m.at[0, idx].set(1.0)


@jax.jit
def _mlp_forward_full(x, params, cmask_p):
    xb = x.reshape(-1, INPUT_DIM).astype(jnp.bfloat16)   # single cast, then pad
    b = xb.shape[0]
    bp, tb = _batch_tiling(b)
    xp = jnp.pad(xb, ((0, bp - b), (0, IN_P - INPUT_DIM)))

    in_specs = [pl.BlockSpec((tb, IN_P), lambda i: (i, 0))]
    flat_args = [xp]
    for p in params:
        # weights/biases are grid-invariant, single-buffered resident blocks
        in_specs.append(_const_spec(p["w"].shape))
        in_specs.append(_const_spec(p["b"].shape))
        flat_args += [p["w"], p["b"]]
    in_specs.append(_const_spec(cmask_p.shape))
    flat_args.append(cmask_p)

    out_p = pl.pallas_call(
        mlp_full_kernel,
        out_shape=jax.ShapeDtypeStruct((bp, OUT_P), jnp.float32),
        grid=(bp // tb,),
        in_specs=in_specs,
        out_specs=pl.BlockSpec((tb, OUT_P), lambda i: (i, 0)),
        compiler_params=_compiler_params(),
    )(*flat_args)
    return out_p[:b, :OUTPUT_DIM]


@jax.jit
def _mlp_forward_head(x, p4, cmask_p):
    lead = x.shape[:-1]
    xb = x.reshape(-1, HIDDEN).astype(jnp.bfloat16)
    b = xb.shape[0]
    bp, tb = _batch_tiling(b)
    xp = jnp.pad(xb, ((0, bp - b), (0, HID_P - HIDDEN)))

    out_p = pl.pallas_call(
        mlp_head_kernel,
        out_shape=jax.ShapeDtypeStruct((bp, OUT_P), jnp.float32),
        grid=(bp // tb,),
        in_specs=[pl.BlockSpec((tb, HID_P), lambda i: (i, 0)),
                  _const_spec(p4["w"].shape),
                  _const_spec(p4["b"].shape),
                  _const_spec(cmask_p.shape)],
        out_specs=pl.BlockSpec((tb, OUT_P), lambda i: (i, 0)),
        compiler_params=_compiler_params(),
    )(xp, p4["w"], p4["b"], cmask_p)
    return out_p[:b, :OUTPUT_DIM].reshape(lead + (OUTPUT_DIM,))


def mlp_forward(x, params, current_classes=None):
    """Equivalent of MLP.forward(x, current_classes). `params` are the folded
    device params from fold_device_params."""
    _single_buffer_supported()                     # resolve probe eagerly (cached)
    cmask_p = _class_mask_padded(current_classes)  # traced array -> no recompiles
    if x.shape[-1] == HIDDEN:
        return _mlp_forward_head(x, params[3], cmask_p)
    return _mlp_forward_full(x, params, cmask_p)


# ---------------------------------------------------------------------------
# Pure-JAX reference (same bf16-weight / f32-accumulate semantics)
# ---------------------------------------------------------------------------
def mlp_forward_reference(x, params, current_classes=None):
    cmask = _class_mask_padded(current_classes)[0, :OUTPUT_DIM]

    def lin(h, p, din, dout):
        w = p["w"][:din, :dout]                  # bf16, masks already folded in
        b = p["b"][0, :dout]                     # f32
        return jnp.dot(h.astype(jnp.bfloat16), w,
                       preferred_element_type=jnp.float32) + b

    if x.shape[-1] == HIDDEN:
        lead = x.shape[:-1]
        out = lin(x.reshape(-1, HIDDEN), params[3], HIDDEN, OUTPUT_DIM)
        return (out * cmask).reshape(lead + (OUTPUT_DIM,))
    h = x.reshape(-1, INPUT_DIM).astype(jnp.float32)
    h = jnp.maximum(lin(h, params[0], INPUT_DIM, HIDDEN), 0.0)
    h = jnp.maximum(lin(h, params[1], HIDDEN, HIDDEN), 0.0)
    h = jnp.maximum(lin(h, params[2], HIDDEN, HIDDEN), 0.0)
    out = lin(h, params[3], HIDDEN, OUTPUT_DIM)
    return out * cmask


if __name__ == "__main__":
    masters = make_mlp_master_params(seed=0, mask_density=0.8)
    params = fold_device_params(masters)   # refold after every NISPA mask update

    # MNIST-like input, NCHW as PyTorch would feed it: (batch=2, 1, 28, 28)
    x = jax.random.normal(jax.random.PRNGKey(0), (2, 1, 28, 28), jnp.float32)

    # full forward path
    y = jax.block_until_ready(mlp_forward(x, params, current_classes=None))
    y_ref = mlp_forward_reference(x, params, current_classes=None)
    assert y.shape == (2, OUTPUT_DIM)
    assert jnp.allclose(y, y_ref, atol=1e-2, rtol=1e-2)

    # class-masked path (current_classes = (0, 3, 7)) -- fused mask, no recompile
    ym = jax.block_until_ready(mlp_forward(x, params, current_classes=(0, 3, 7)))
    ym_ref = mlp_forward_reference(x, params, current_classes=(0, 3, 7))
    assert jnp.allclose(ym, ym_ref, atol=1e-2, rtol=1e-2)

    # shortcut path (x.shape[-1] == penultimate_dim == 400)
    xh = jax.random.normal(jax.random.PRNGKey(1), (2, HIDDEN), jnp.float32)
    yh = jax.block_until_ready(mlp_forward(xh, params))
    yh_ref = mlp_forward_reference(xh, params)
    assert jnp.allclose(yh, yh_ref, atol=1e-2, rtol=1e-2)

    # medium batch: right-sized last tile (304 rows, not 512); grid>=2 on v7x
    xb = jax.random.normal(jax.random.PRNGKey(2), (300, 1, 28, 28), jnp.float32)
    yb = jax.block_until_ready(mlp_forward(xb, params))
    yb_ref = mlp_forward_reference(xb, params)
    assert yb.shape == (300, OUTPUT_DIM)
    assert jnp.allclose(yb, yb_ref, atol=1e-2, rtol=1e-2)

    # large batch: exercises a multi-step grid on every chip generation
    xc = jax.random.normal(jax.random.PRNGKey(3), (600, 1, 28, 28), jnp.float32)
    yc = jax.block_until_ready(mlp_forward(xc, params))
    yc_ref = mlp_forward_reference(xc, params)
    assert yc.shape == (600, OUTPUT_DIM)
    assert jnp.allclose(yc, yc_ref, atol=1e-2, rtol=1e-2)

    print("KERNEL_OK")
</pallas_src>

<mosaic_0001>
module attributes {stable_mosaic.version = 11 : i64} {
  func.func @_k(%arg0: i32, %arg1: memref<8x128xf32, #tpu.memory_space<vmem>>, %arg2: memref<8x128xf32, #tpu.memory_space<vmem>>) attributes {dimension_semantics = [#tpu.dimension_semantics<arbitrary>], iteration_bounds = array<i64: 1>, scalar_prefetch = 0 : i64, scratch_operands = 0 : i64, tpu.core_type = #tpu.core_type<tc>, window_params = [{pipeline_mode = #tpu.pipeline_mode<synchronous>, transform_indices = @transform_0, window_bounds = array<i64: 8, 128>}, {pipeline_mode = #tpu.pipeline_mode<synchronous>, transform_indices = @transform_1, window_bounds = array<i64: 8, 128>}]} {
    %c0 = arith.constant 0 : index
    %c0_0 = arith.constant 0 : index
    %0 = vector.load %arg1[%c0, %c0_0] : memref<8x128xf32, #tpu.memory_space<vmem>>, vector<8x128xf32>
    %cst = arith.constant 0.000000e+00 : f32
    %1 = vector.broadcast %cst : f32 to vector<8x128xf32>
    %2 = arith.addf %0, %1 : vector<8x128xf32>
    %c0_1 = arith.constant 0 : index
    %c0_2 = arith.constant 0 : index
    %3 = vector.load %arg2[%c0_1, %c0_2] : memref<8x128xf32, #tpu.memory_space<vmem>>, vector<8x128xf32>
    tpu.vector_store %arg2[%c0_1, %c0_2], %2 {strides = array<i32>} : memref<8x128xf32, #tpu.memory_space<vmem>>, vector<8x128xf32>,
    return
  }
  func.func @transform_0(%arg0: i32) -> (i32, i32) {
    %c0_i32 = arith.constant 0 : i32
    %c0_i32_0 = arith.constant 0 : i32
    %c0_i32_1 = arith.constant 0 : i32
    return %c0_i32, %c0_i32_0 : i32, i32
  }
  func.func @transform_1(%arg0: i32) -> (i32, i32) {
    %c0_i32 = arith.constant 0 : i32
    %c0_i32_0 = arith.constant 0 : i32
    %c0_i32_1 = arith.constant 0 : i32
    return %c0_i32, %c0_i32_0 : i32, i32
  }
}

module attributes {stable_mosaic.version = 11 : i64} {
  func.func @mlp_full_kernel(%arg0: i32, %arg1: memref<8x896xbf16, #tpu.memory_space<vmem>>, %arg2: memref<896x512xbf16, #tpu.memory_space<vmem>>, %arg3: memref<1x512xf32, #tpu.memory_space<vmem>>, %arg4: memref<512x512xbf16, #tpu.memory_space<vmem>>, %arg5: memref<1x512xf32, #tpu.memory_space<vmem>>, %arg6: memref<512x512xbf16, #tpu.memory_space<vmem>>, %arg7: memref<1x512xf32, #tpu.memory_space<vmem>>, %arg8: memref<512x128xbf16, #tpu.memory_space<vmem>>, %arg9: memref<1x128xf32, #tpu.memory_space<vmem>>, %arg10: memref<1x128xf32, #tpu.memory_space<vmem>>, %arg11: memref<8x128xf32, #tpu.memory_space<vmem>>) attributes {dimension_semantics = [#tpu.dimension_semantics<parallel>], iteration_bounds = array<i64: 1>, scalar_prefetch = 0 : i64, scratch_operands = 0 : i64, tpu.core_type = #tpu.core_type<tc>, window_params = [{transform_indices = @transform_0, window_bounds = array<i64: 8, 896>}, {pipeline_mode = #tpu.pipeline_mode<synchronous>, transform_indices = @transform_1, window_bounds = array<i64: 896, 512>}, {pipeline_mode = #tpu.pipeline_mode<synchronous>, transform_indices = @transform_2, window_bounds = array<i64: 1, 512>}, {pipeline_mode = #tpu.pipeline_mode<synchronous>, transform_indices = @transform_3, window_bounds = array<i64: 512, 512>}, {pipeline_mode = #tpu.pipeline_mode<synchronous>, transform_indices = @transform_4, window_bounds = array<i64: 1, 512>}, {pipeline_mode = #tpu.pipeline_mode<synchronous>, transform_indices = @transform_5, window_bounds = array<i64: 512, 512>}, {pipeline_mode = #tpu.pipeline_mode<synchronous>, transform_indices = @transform_6, window_bounds = array<i64: 1, 512>}, {pipeline_mode = #tpu.pipeline_mode<synchronous>, transform_indices = @transform_7, window_bounds = array<i64: 512, 128>}, {pipeline_mode = #tpu.pipeline_mode<synchronous>, transform_indices = @transform_8, window_bounds = array<i64: 1, 128>}, {pipeline_mode = #tpu.pipeline_mode<synchronous>, transform_indices = @transform_9, window_bounds = array<i64: 1, 128>}, {transform_indices = @transform_10, window_bounds = array<i64: 8, 128>}]} {
    %c0 = arith.constant 0 : index
    %c0_0 = arith.constant 0 : index
    %0 = vector.load %arg1[%c0, %c0_0] : memref<8x896xbf16, #tpu.memory_space<vmem>>, vector<8x896xbf16>
    %c0_1 = arith.constant 0 : index
    %c0_2 = arith.constant 0 : index
    %1 = vector.load %arg2[%c0_1, %c0_2] : memref<896x512xbf16, #tpu.memory_space<vmem>>, vector<896x512xbf16>
    %cst = arith.constant dense<0.000000e+00> : vector<8x512xf32>
    %2 = tpu.matmul %0, %1, %cst {dimension_numbers = #tpu.dot_dimension_numbers<[1], [0], [0], [1], [0, 0, 1, 1], [], []>} : vector<8x896xbf16>, vector<896x512xbf16>, vector<8x512xf32> -> vector<8x512xf32>
    %c0_3 = arith.constant 0 : index
    %c0_4 = arith.constant 0 : index
    %3 = vector.load %arg3[%c0_3, %c0_4] : memref<1x512xf32, #tpu.memory_space<vmem>>, vector<1x512xf32>
    %4 = vector.broadcast %3 : vector<1x512xf32> to vector<8x512xf32>
    %5 = arith.addf %2, %4 : vector<8x512xf32>
    %cst_5 = arith.constant 0.000000e+00 : f32
    %6 = vector.broadcast %cst_5 : f32 to vector<8x512xf32>
    %7 = arith.maximumf %5, %6 : vector<8x512xf32>
    %8 = arith.truncf %7 : vector<8x512xf32> to vector<8x512xbf16>
    %c0_6 = arith.constant 0 : index
    %c0_7 = arith.constant 0 : index
    %9 = vector.load %arg4[%c0_6, %c0_7] : memref<512x512xbf16, #tpu.memory_space<vmem>>, vector<512x512xbf16>
    %cst_8 = arith.constant dense<0.000000e+00> : vector<8x512xf32>
    %10 = tpu.matmul %8, %9, %cst_8 {dimension_numbers = #tpu.dot_dimension_numbers<[1], [0], [0], [1], [0, 0, 1, 1], [], []>} : vector<8x512xbf16>, vector<512x512xbf16>, vector<8x512xf32> -> vector<8x512xf32>
    %c0_9 = arith.constant 0 : index
    %c0_10 = arith.constant 0 : index
    %11 = vector.load %arg5[%c0_9, %c0_10] : memref<1x512xf32, #tpu.memory_space<vmem>>, vector<1x512xf32>
    %12 = vector.broadcast %11 : vector<1x512xf32> to vector<8x512xf32>
    %13 = arith.addf %10, %12 : vector<8x512xf32>
    %cst_11 = arith.constant 0.000000e+00 : f32
    %14 = vector.broadcast %cst_11 : f32 to vector<8x512xf32>
    %15 = arith.maximumf %13, %14 : vector<8x512xf32>
    %16 = arith.truncf %15 : vector<8x512xf32> to vector<8x512xbf16>
    %c0_12 = arith.constant 0 : index
    %c0_13 = arith.constant 0 : index
    %17 = vector.load %arg6[%c0_12, %c0_13] : memref<512x512xbf16, #tpu.memory_space<vmem>>, vector<512x512xbf16>
    %cst_14 = arith.constant dense<0.000000e+00> : vector<8x512xf32>
    %18 = tpu.matmul %16, %17, %cst_14 {dimension_numbers = #tpu.dot_dimension_numbers<[1], [0], [0], [1], [0, 0, 1, 1], [], []>} : vector<8x512xbf16>, vector<512x512xbf16>, vector<8x512xf32> -> vector<8x512xf32>
    %c0_15 = arith.constant 0 : index
    %c0_16 = arith.constant 0 : index
    %19 = vector.load %arg7[%c0_15, %c0_16] : memref<1x512xf32, #tpu.memory_space<vmem>>, vector<1x512xf32>
    %20 = vector.broadcast %19 : vector<1x512xf32> to vector<8x512xf32>
    %21 = arith.addf %18, %20 : vector<8x512xf32>
    %cst_17 = arith.constant 0.000000e+00 : f32
    %22 = vector.broadcast %cst_17 : f32 to vector<8x512xf32>
    %23 = arith.maximumf %21, %22 : vector<8x512xf32>
    %24 = arith.truncf %23 : vector<8x512xf32> to vector<8x512xbf16>
    %c0_18 = arith.constant 0 : index
    %c0_19 = arith.constant 0 : index
    %25 = vector.load %arg8[%c0_18, %c0_19] : memref<512x128xbf16, #tpu.memory_space<vmem>>, vector<512x128xbf16>
    %cst_20 = arith.constant dense<0.000000e+00> : vector<8x128xf32>
    %26 = tpu.matmul %24, %25, %cst_20 {dimension_numbers = #tpu.dot_dimension_numbers<[1], [0], [0], [1], [0, 0, 1, 1], [], []>} : vector<8x512xbf16>, vector<512x128xbf16>, vector<8x128xf32> -> vector<8x128xf32>
    %c0_21 = arith.constant 0 : index
    %c0_22 = arith.constant 0 : index
    %27 = vector.load %arg9[%c0_21, %c0_22] : memref<1x128xf32, #tpu.memory_space<vmem>>, vector<1x128xf32>
    %28 = vector.broadcast %27 : vector<1x128xf32> to vector<8x128xf32>
    %29 = arith.addf %26, %28 : vector<8x128xf32>
    %c0_23 = arith.constant 0 : index
    %c0_24 = arith.constant 0 : index
    %30 = vector.load %arg10[%c0_23, %c0_24] : memref<1x128xf32, #tpu.memory_space<vmem>>, vector<1x128xf32>
    %31 = vector.broadcast %30 : vector<1x128xf32> to vector<8x128xf32>
    %32 = arith.mulf %29, %31 : vector<8x128xf32>
    %c0_25 = arith.constant 0 : index
    %c0_26 = arith.constant 0 : index
    %33 = vector.load %arg11[%c0_25, %c0_26] : memref<8x128xf32, #tpu.memory_space<vmem>>, vector<8x128xf32>
    tpu.vector_store %arg11[%c0_25, %c0_26], %32 {strides = array<i32>} : memref<8x128xf32, #tpu.memory_space<vmem>>, vector<8x128xf32>,
    return
  }
  func.func @transform_0(%arg0: i32) -> (i32, i32) {
    %c0_i32 = arith.constant 0 : i32
    %c0_i32_0 = arith.constant 0 : i32
    return %arg0, %c0_i32 : i32, i32
  }
  func.func @transform_1(%arg0: i32) -> (i32, i32) {
    %c0_i32 = arith.constant 0 : i32
    %c0_i32_0 = arith.constant 0 : i32
    %c0_i32_1 = arith.constant 0 : i32
    return %c0_i32, %c0_i32_0 : i32, i32
  }
  func.func @transform_2(%arg0: i32) -> (i32, i32) {
    %c0_i32 = arith.constant 0 : i32
    %c0_i32_0 = arith.constant 0 : i32
    %c0_i32_1 = arith.constant 0 : i32
    return %c0_i32, %c0_i32_0 : i32, i32
  }
  func.func @transform_3(%arg0: i32) -> (i32, i32) {
    %c0_i32 = arith.constant 0 : i32
    %c0_i32_0 = arith.constant 0 : i32
    %c0_i32_1 = arith.constant 0 : i32
    return %c0_i32, %c0_i32_0 : i32, i32
  }
  func.func @transform_4(%arg0: i32) -> (i32, i32) {
    %c0_i32 = arith.constant 0 : i32
    %c0_i32_0 = arith.constant 0 : i32
    %c0_i32_1 = arith.constant 0 : i32
    return %c0_i32, %c0_i32_0 : i32, i32
  }
  func.func @transform_5(%arg0: i32) -> (i32, i32) {
    %c0_i32 = arith.constant 0 : i32
    %c0_i32_0 = arith.constant 0 : i32
    %c0_i32_1 = arith.constant 0 : i32
    return %c0_i32, %c0_i32_0 : i32, i32
  }
  func.func @transform_6(%arg0: i32) -> (i32, i32) {
    %c0_i32 = arith.constant 0 : i32
    %c0_i32_0 = arith.constant 0 : i32
    %c0_i32_1 = arith.constant 0 : i32
    return %c0_i32, %c0_i32_0 : i32, i32
  }
  func.func @transform_7(%arg0: i32) -> (i32, i32) {
    %c0_i32 = arith.constant 0 : i32
    %c0_i32_0 = arith.constant 0 : i32
    %c0_i32_1 = arith.constant 0 : i32
    return %c0_i32, %c0_i32_0 : i32, i32
  }
  func.func @transform_8(%arg0: i32) -> (i32, i32) {
    %c0_i32 = arith.constant 0 : i32
    %c0_i32_0 = arith.constant 0 : i32
    %c0_i32_1 = arith.constant 0 : i32
    return %c0_i32, %c0_i32_0 : i32, i32
  }
  func.func @transform_9(%arg0: i32) -> (i32, i32) {
    %c0_i32 = arith.constant 0 : i32
    %c0_i32_0 = arith.constant 0 : i32
    %c0_i32_1 = arith.constant 0 : i32
    return %c0_i32, %c0_i32_0 : i32, i32
  }
  func.func @transform_10(%arg0: i32) -> (i32, i32) {
    %c0_i32 = arith.constant 0 : i32
    %c0_i32_0 = arith.constant 0 : i32
    return %arg0, %c0_i32 : i32, i32
  }
}

</mosaic_0001>

<llo_original>
// kernel: tpu_custom_call.1
$region0: #{tpu_custom_call.1}
  #allocation0 [shape = 'u32[]', space=smem, size = 0x4, offset = 0x4, fixed_abs, tag = 'smem constant byte address 0x4 - core index']
  #allocation1 [shape = 'u32[144,128]{1,0:T(1,128)}', space=vmem, size = 0x12000, scoped, tag = 'internal scratch']
  %s0 = inlined_call_operand.hbm [shape: f32[8,128], index: 0, kind: input, shape index: {}]
  %s1 = inlined_call_operand.hbm [shape: f32[8,128], index: 1, kind: output, shape index: {}]
  %s2 = sld [smem:[#allocation0]]
  $region18: #{tpu_custom_call.1} parent=0
    _
  %s4 = ssub.s32 1, %s2
  %s5 = scalar_select 0, %s4, %s2
  $region1: #{tpu_custom_call.1} parent=0
    #allocation2 [shape = 'u8[4096]{0}', space=vmem, size = 0x1000, scoped, tag = 'input window, operand 0, single buffered']
    #allocation3 [shape = 's32[1]{0}', space=sflag, size = 0x4, scoped, tag = 'scoped memory for tpu_custom_call.1']
    #allocation4 [shape = 's32[1]{0}', space=sflag, size = 0x4, scoped, tag = 'scoped memory for tpu_custom_call.1']
    #allocation5 [shape = 'u8[4096]{0}', space=vmem, size = 0x1000, scoped, tag = 'output window, operand 0, single buffered']
    %6 = vsyncpa [#allocation3], 0
    %7 = vsyncpa [#allocation4], 0
    // Predicated region
    $region2: #{tpu_custom_call.1} parent=1 // pred_check
      _
    $region3: #{tpu_custom_call.1} parent=1 // pred_check_branch
      %9 = sbr.rel (0) target = $region5
    $region4: #{tpu_custom_call.1} parent=1 // pred_region
      %s11 = ssub.s32 128, 128
      %12 = vsyncadd [#allocation3], %s11
      %s14 = sshll.u32 [#allocation2], 4
      %s15 = int_to_ptr.vmem [resolvable:$true] %s14
      %17 = dma.hbm_to_vmem [thread:$0]  %s0, 128, %s15, [#allocation3]
    $region5: #{tpu_custom_call.1} parent=1 // pred_fallthru
      _
    // Predicated region
    $region6: #{tpu_custom_call.1} parent=1 // pred_check
      _
    $region7: #{tpu_custom_call.1} parent=1 // pred_check_branch
      %19 = sbr.rel (0) target = $region9
    $region8: #{tpu_custom_call.1} parent=1 // pred_region
      %20 = dma.done [#allocation3], 128
    $region9: #{tpu_custom_call.1} parent=1 // pred_fallthru
      _
    %v21 = vld [vmem:[#allocation2] sm:$0xff]
    %v22 = vadd.f32 %v21, 0.0
    %23 = vst [vmem:[#allocation5] sm:$0xff] %v22
    // Predicated region
    $region10: #{tpu_custom_call.1} parent=1 // pred_check
      _
    $region11: #{tpu_custom_call.1} parent=1 // pred_check_branch
      %25 = sbr.rel (0) target = $region13
    $region12: #{tpu_custom_call.1} parent=1 // pred_region
      %s27 = ssub.s32 128, 128
      %28 = vsyncadd [#allocation4], %s27
      %s30 = sshll.u32 [#allocation5], 4
      %s31 = int_to_ptr.vmem [resolvable:$true] %s30
      %33 = dma.vmem_to_hbm [thread:$0]  %s31, 128, %s1, [#allocation4]
    $region13: #{tpu_custom_call.1} parent=1 // pred_fallthru
      _
    // Predicated region
    $region14: #{tpu_custom_call.1} parent=1 // pred_check
      _
    $region15: #{tpu_custom_call.1} parent=1 // pred_check_branch
      %35 = sbr.rel (0) target = $region17
    $region16: #{tpu_custom_call.1} parent=1 // pred_region
      %36 = dma.done [#allocation4], 128
    $region17: #{tpu_custom_call.1} parent=1 // pred_fallthru
      _
    %37 = vsyncpa [#allocation3], 1
    %38 = vsyncpa [#allocation4], 1

// kernel: _mlp_forward_full.1
$region0: #{_mlp_forward_full.1}
  #allocation0 [shape = 'u32[]', space=smem, size = 0x4, offset = 0x4, fixed_abs, tag = 'smem constant byte address 0x4 - core index']
  #allocation1 [shape = 'u32[144,128]{1,0:T(1,128)}', space=vmem, size = 0x12000, scoped, tag = 'internal scratch']
  %s0 = inlined_call_operand.vmem [shape: bf16[8,896], index: 0, kind: input, shape index: {}]
  %s1 = inlined_call_operand.hbm [shape: bf16[896,512], index: 1, kind: input, shape index: {}]
  %s2 = inlined_call_operand.vmem [shape: f32[1,512], index: 2, kind: input, shape index: {}]
  %s3 = inlined_call_operand.hbm [shape: bf16[512,512], index: 3, kind: input, shape index: {}]
  %s4 = inlined_call_operand.vmem [shape: f32[1,512], index: 4, kind: input, shape index: {}]
  %s5 = inlined_call_operand.hbm [shape: bf16[512,512], index: 5, kind: input, shape index: {}]
  %s6 = inlined_call_operand.vmem [shape: f32[1,512], index: 6, kind: input, shape index: {}]
  %s7 = inlined_call_operand.hbm [shape: bf16[512,128], index: 7, kind: input, shape index: {}]
  %s8 = inlined_call_operand.vmem [shape: f32[1,128], index: 8, kind: input, shape index: {}]
  %s9 = inlined_call_operand.vmem [shape: f32[1,128], index: 9, kind: input, shape index: {}]
  %s10 = inlined_call_operand.vmem [shape: f32[8,128], index: 10, kind: output, shape index: {}]
  %s11 = sld [smem:[#allocation0]]
  $region66: #{_mlp_forward_full.1} parent=0
    _
  %s13 = ssub.s32 1, %s11
  %s14 = scalar_select 0, %s13, %s11
  $region1: #{_mlp_forward_full.1} parent=0
    #allocation2 [shape = 'u8[917504]{0}', space=vmem, size = 0xe0000, scoped, tag = 'input window, operand 1, single buffered']
    #allocation3 [shape = 's32[1]{0}', space=sflag, size = 0x4, scoped, tag = 'scoped memory for _mlp_forward_full.1']
    #allocation4 [shape = 'u8[524288]{0}', space=vmem, size = 0x80000, scoped, tag = 'input window, operand 3, single buffered']
    #allocation5 [shape = 's32[1]{0}', space=sflag, size = 0x4, scoped, tag = 'scoped memory for _mlp_forward_full.1']
    #allocation6 [shape = 'u8[524288]{0}', space=vmem, size = 0x80000, scoped, tag = 'input window, operand 5, single buffered']
    #allocation7 [shape = 'u8[131072]{0}', space=vmem, size = 0x20000, scoped, tag = 'input window, operand 7, single buffered']
    #allocation8 [shape = 's32[1]{0}', space=sflag, size = 0x4, scoped, tag = 'scoped memory for _mlp_forward_full.1']
    %15 = vsyncpa [#allocation3], 0
    %16 = vsyncpa [#allocation5], 0
    %17 = vsyncpa [#allocation8], 0
    // Predicated region
    $region2: #{_mlp_forward_full.1} parent=1 // pred_check
      _
    $region3: #{_mlp_forward_full.1} parent=1 // pred_check_branch
      %19 = sbr.rel (0) target = $region5
    $region4: #{_mlp_forward_full.1} parent=1 // pred_region
      _
    $region5: #{_mlp_forward_full.1} parent=1 // pred_fallthru
      _
    // Predicated region
    $region6: #{_mlp_forward_full.1} parent=1 // pred_check
      _
    $region7: #{_mlp_forward_full.1} parent=1 // pred_check_branch
      %21 = sbr.rel (0) target = $region9
    $region8: #{_mlp_forward_full.1} parent=1 // pred_region
      %s23 = ssub.s32 28672, 28672
      %24 = vsyncadd [#allocation3], %s23
      %s25 = sshll.u32 [#allocation2], 4
      %s26 = int_to_ptr.vmem [resolvable:$true] %s25
      %31 = dma.hbm_to_vmem [thread:$0]  %s1, 28672, %s26, [#allocation3], 256, 256, 16
    $region9: #{_mlp_forward_full.1} parent=1 // pred_fallthru
      _
    // Predicated region
    $region10: #{_mlp_forward_full.1} parent=1 // pred_check
      _
    $region11: #{_mlp_forward_full.1} parent=1 // pred_check_branch
      %33 = sbr.rel (0) target = $region13
    $region12: #{_mlp_forward_full.1} parent=1 // pred_region
      _
    $region13: #{_mlp_forward_full.1} parent=1 // pred_fallthru
      _
    // Predicated region
    $region14: #{_mlp_forward_full.1} parent=1 // pred_check
      _
    $region15: #{_mlp_forward_full.1} parent=1 // pred_check_branch
      %35 = sbr.rel (0) target = $region17
    $region16: #{_mlp_forward_full.1} parent=1 // pred_region
      %s37 = ssub.s32 16384, 16384
      %38 = vsyncadd [#allocation5], %s37
      %s39 = sshll.u32 [#allocation4], 4
      %s40 = int_to_ptr.vmem [resolvable:$true] %s39
      %45 = dma.hbm_to_vmem [thread:$0]  %s3, 16384, %s40, [#allocation5], 256, 256, 16
    $region17: #{_mlp_forward_full.1} parent=1 // pred_fallthru
      _
    // Predicated region
    $region18: #{_mlp_forward_full.1} parent=1 // pred_check
      _
    $region19: #{_mlp_forward_full.1} parent=1 // pred_check_branch
      %47 = sbr.rel (0) target = $region21
    $region20: #{_mlp_forward_full.1} parent=1 // pred_region
      _
    $region21: #{_mlp_forward_full.1} parent=1 // pred_fallthru
      _
    // Predicated region
    $region22: #{_mlp_forward_full.1} parent=1 // pred_check
      _
    $region23: #{_mlp_forward_full.1} parent=1 // pred_check_branch
      %49 = sbr.rel (0) target = $region25
    $region24: #{_mlp_forward_full.1} parent=1 // pred_region
      %s51 = ssub.s32 16384, 16384
      %52 = vsyncadd [#allocation5], %s51
      %s53 = sshll.u32 [#allocation6], 4
      %s54 = int_to_ptr.vmem [resolvable:$true] %s53
      %59 = dma.hbm_to_vmem [thread:$0]  %s5, 16384, %s54, [#allocation5], 256, 256, 16
    $region25: #{_mlp_forward_full.1} parent=1 // pred_fallthru
      _
    // Predicated region
    $region26: #{_mlp_forward_full.1} parent=1 // pred_check
      _
    $region27: #{_mlp_forward_full.1} parent=1 // pred_check_branch
      %61 = sbr.rel (0) target = $region29
    $region28: #{_mlp_forward_full.1} parent=1 // pred_region
      _
    $region29: #{_mlp_forward_full.1} parent=1 // pred_fallthru
      _
    // Predicated region
    $region30: #{_mlp_forward_full.1} parent=1 // pred_check
      _
    $region31: #{_mlp_forward_full.1} parent=1 // pred_check_branch
      %63 = sbr.rel (0) target = $region33
    $region32: #{_mlp_forward_full.1} parent=1 // pred_region
      %s65 = ssub.s32 4096, 4096
      %66 = vsyncadd [#allocation8], %s65
      %s67 = sshll.u32 [#allocation7], 4
      %s68 = int_to_ptr.vmem [resolvable:$true] %s67
      %73 = dma.hbm_to_vmem [thread:$0]  %s7, 4096, %s68, [#allocation8], 64, 64, 4
    $region33: #{_mlp_forward_full.1} parent=1 // pred_fallthru
      _
    // Predicated region
    $region34: #{_mlp_forward_full.1} parent=1 // pred_check
      _
    $region35: #{_mlp_forward_full.1} parent=1 // pred_check_branch
      %75 = sbr.rel (0) target = $region37
    $region36: #{_mlp_forward_full.1} parent=1 // pred_region
      _
    $region37: #{_mlp_forward_full.1} parent=1 // pred_fallthru
      _
    // Predicated region
    $region38: #{_mlp_forward_full.1} parent=1 // pred_check
      _
    $region39: #{_mlp_forward_full.1} parent=1 // pred_check_branch
      %77 = sbr.rel (0) target = $region41
    $region40: #{_mlp_forward_full.1} parent=1 // pred_region
      _
    $region41: #{_mlp_forward_full.1} parent=1 // pred_fallthru
      _
    // Predicated region
    $region42: #{_mlp_forward_full.1} parent=1 // pred_check
      _
    $region43: #{_mlp_forward_full.1} parent=1 // pred_check_branch
      %79 = sbr.rel (0) target = $region45
    $region44: #{_mlp_forward_full.1} parent=1 // pred_region
      %80 = dma.done [#allocation3], 28672
    $region45: #{_mlp_forward_full.1} parent=1 // pred_fallthru
      _
    // Predicated region
    $region46: #{_mlp_forward_full.1} parent=1 // pred_check
      _
    $region47: #{_mlp_forward_full.1} parent=1 // pred_check_branch
      %82 = sbr.rel (0) target = $region49
    $region48: #{_mlp_forward_full.1} parent=1 // pred_region
      %83 = dma.done [#allocation5], 16384
    $region49: #{_mlp_forward_full.1} parent=1 // pred_fallthru
      _
    // Predicated region
    $region50: #{_mlp_forward_full.1} parent=1 // pred_check
      _
    $region51: #{_mlp_forward_full.1} parent=1 // pred_check_branch
      %85 = sbr.rel (0) target = $region53
    $region52: #{_mlp_forward_full.1} parent=1 // pred_region
      %86 = dma.done [#allocation5], 16384
    $region53: #{_mlp_forward_full.1} parent=1 // pred_fallthru
      _
    // Predicated region
    $region54: #{_mlp_forward_full.1} parent=1 // pred_check
      _
    $region55: #{_mlp_forward_full.1} parent=1 // pred_check_branch
      %88 = sbr.rel (0) target = $region57
    $region56: #{_mlp_forward_full.1} parent=1 // pred_region
      %89 = dma.done [#allocation8], 4096
    $region57: #{_mlp_forward_full.1} parent=1 // pred_fallthru
      _
    %v91 = vld [vmem:[%s0] sm:$0xff]
    %v92 = vld [vmem:[%s0 + $0x8] sm:$0xff]
    %v93 = vld [vmem:[%s0 + $0x10] sm:$0xff]
    %v94 = vld [vmem:[%s0 + $0x18] sm:$0xf]
    %v95 = vld [vmem:[#allocation2] sm:$0xff]
    %v96 = vld [vmem:[#allocation2 + $0x8] sm:$0xff]
    %v97 = vld [vmem:[#allocation2 + $0x10] sm:$0xff]
    %v98 = vld [vmem:[#allocation2 + $0x18] sm:$0xff]
    %v99 = vld [vmem:[#allocation2 + $0x20] sm:$0xff]
    %v100 = vld [vmem:[#allocation2 + $0x28] sm:$0xff]
    %v101 = vld [vmem:[#allocation2 + $0x30] sm:$0xff]
    %v102 = vld [vmem:[#allocation2 + $0x38] sm:$0xff]
    %v103 = vld [vmem:[#allocation2 + $0x40] sm:$0xff]
    %v104 = vld [vmem:[#allocation2 + $0x48] sm:$0xff]
    %v105 = vld [vmem:[#allocation2 + $0x50] sm:$0xff]
    %v106 = vld [vmem:[#allocation2 + $0x58] sm:$0xff]
    %v107 = vld [vmem:[#allocation2 + $0x60] sm:$0xff]
    %v108 = vld [vmem:[#allocation2 + $0x68] sm:$0xff]
    %v109 = vld [vmem:[#allocation2 + $0x70] sm:$0xff]
    %v110 = vld [vmem:[#allocation2 + $0x78] sm:$0xff]
    %v111 = vld [vmem:[#allocation2 + $0x80] sm:$0xff]
    %v112 = vld [vmem:[#allocation2 + $0x88] sm:$0xff]
    %v113 = vld [vmem:[#allocation2 + $0x90] sm:$0xff]
    %v114 = vld [vmem:[#allocation2 + $0x98] sm:$0xff]
    %v115 = vld [vmem:[#allocation2 + $0xa0] sm:$0xff]
    %v116 = vld [vmem:[#allocation2 + $0xa8] sm:$0xff]
    %v117 = vld [vmem:[#allocation2 + $0xb0] sm:$0xff]
    %v118 = vld [vmem:[#allocation2 + $0xb8] sm:$0xff]
    %v119 = vld [vmem:[#allocation2 + $0xc0] sm:$0xff]
    %v120 = vld [vmem:[#allocation2 + $0xc8] sm:$0xff]
    %v121 = vld [vmem:[#allocation2 + $0xd0] sm:$0xff]
    %v122 = vld [vmem:[#allocation2 + $0xd8] sm:$0xff]
    %v123 = vld [vmem:[#allocation2 + $0xe0] sm:$0xff]
    %v124 = vld [vmem:[#allocation2 + $0xe8] sm:$0xff]
    %v125 = vld [vmem:[#allocation2 + $0xf0] sm:$0xff]
    %v126 = vld [vmem:[#allocation2 + $0xf8] sm:$0xff]
    %v127 = vld [vmem:[#allocation2 + $0x100] sm:$0xff]
    %v128 = vld [vmem:[#allocation2 + $0x108] sm:$0xff]
    %v129 = vld [vmem:[#allocation2 + $0x110] sm:$0xff]
    %v130 = vld [vmem:[#allocation2 + $0x118] sm:$0xff]
    %v131 = vld [vmem:[#allocation2 + $0x120] sm:$0xff]
    %v132 = vld [vmem:[#allocation2 + $0x128] sm:$0xff]
    %v133 = vld [vmem:[#allocation2 + $0x130] sm:$0xff]
    %v134 = vld [vmem:[#allocation2 + $0x138] sm:$0xff]
    %v135 = vld [vmem:[#allocation2 + $0x140] sm:$0xff]
    %v136 = vld [vmem:[#allocation2 + $0x148] sm:$0xff]
    %v137 = vld [vmem:[#allocation2 + $0x150] sm:$0xff]
    %v138 = vld [vmem:[#allocation2 + $0x158] sm:$0xff]
    %v139 = vld [vmem:[#allocation2 + $0x160] sm:$0xff]
    %v140 = vld [vmem:[#allocation2 + $0x168] sm:$0xff]
    %v141 = vld [vmem:[#allocation2 + $0x170] sm:$0xff]
    %v142 = vld [vmem:[#allocation2 + $0x178] sm:$0xff]
    %v143 = vld [vmem:[#allocation2 + $0x180] sm:$0xff]
    %v144 = vld [vmem:[#allocation2 + $0x188] sm:$0xff]
    %v145 = vld [vmem:[#allocation2 + $0x190] sm:$0xff]
    %v146 = vld [vmem:[#allocation2 + $0x198] sm:$0xff]
    %v147 = vld [vmem:[#allocation2 + $0x1a0] sm:$0xff]
    %v148 = vld [vmem:[#allocation2 + $0x1a8] sm:$0xff]
    %v149 = vld [vmem:[#allocation2 + $0x1b0] sm:$0xff]
    %v150 = vld [vmem:[#allocation2 + $0x1b8] sm:$0xff]
    %v151 = vld [vmem:[#allocation2 + $0x1c0] sm:$0xff]
    %v152 = vld [vmem:[#allocation2 + $0x1c8] sm:$0xff]
    %v153 = vld [vmem:[#allocation2 + $0x1d0] sm:$0xff]
    %v154 = vld [vmem:[#allocation2 + $0x1d8] sm:$0xff]
    %v155 = vld [vmem:[#allocation2 + $0x1e0] sm:$0xff]
    %v156 = vld [vmem:[#allocation2 + $0x1e8] sm:$0xff]
    %v157 = vld [vmem:[#allocation2 + $0x1f0] sm:$0xff]
    %v158 = vld [vmem:[#allocation2 + $0x1f8] sm:$0xff]
    %v159 = vld [vmem:[#allocation2 + $0x200] sm:$0xff]
    %v160 = vld [vmem:[#allocation2 + $0x208] sm:$0xff]
    %v161 = vld [vmem:[#allocation2 + $0x210] sm:$0xff]
    %v162 = vld [vmem:[#allocation2 + $0x218] sm:$0xff]
    %v163 = vld [vmem:[#allocation2 + $0x220] sm:$0xff]
    %v164 = vld [vmem:[#allocation2 + $0x228] sm:$0xff]
    %v165 = vld [vmem:[#allocation2 + $0x230] sm:$0xff]
    %v166 = vld [vmem:[#allocation2 + $0x238] sm:$0xff]
    %v167 = vld [vmem:[#allocation2 + $0x240] sm:$0xff]
    %v168 = vld [vmem:[#allocation2 + $0x248] sm:$0xff]
    %v169 = vld [vmem:[#allocation2 + $0x250] sm:$0xff]
    %v170 = vld [vmem:[#allocation2 + $0x258] sm:$0xff]
    %v171 = vld [vmem:[#allocation2 + $0x260] sm:$0xff]
    %v172 = vld [vmem:[#allocation2 + $0x268] sm:$0xff]
    %v173 = vld [vmem:[#allocation2 + $0x270] sm:$0xff]
    %v174 = vld [vmem:[#allocation2 + $0x278] sm:$0xff]
    %v175 = vld [vmem:[#allocation2 + $0x280] sm:$0xff]
    %v176 = vld [vmem:[#allocation2 + $0x288] sm:$0xff]
    %v177 = vld [vmem:[#allocation2 + $0x290] sm:$0xff]
    %v178 = vld [vmem:[#allocation2 + $0x298] sm:$0xff]
    %v179 = vld [vmem:[#allocation2 + $0x2a0] sm:$0xff]
    %v180 = vld [vmem:[#allocation2 + $0x2a8] sm:$0xff]
    %v181 = vld [vmem:[#allocation2 + $0x2b0] sm:$0xff]
    %v182 = vld [vmem:[#allocation2 + $0x2b8] sm:$0xff]
    %v183 = vld [vmem:[#allocation2 + $0x2c0] sm:$0xff]
    %v184 = vld [vmem:[#allocation2 + $0x2c8] sm:$0xff]
    %v185 = vld [vmem:[#allocation2 + $0x2d0] sm:$0xff]
    %v186 = vld [vmem:[#allocation2 + $0x2d8] sm:$0xff]
    %v187 = vld [vmem:[#allocation2 + $0x2e0] sm:$0xff]
    %v188 = vld [vmem:[#allocation2 + $0x2e8] sm:$0xff]
    %v189 = vld [vmem:[#allocation2 + $0x2f0] sm:$0xff]
    %v190 = vld [vmem:[#allocation2 + $0x2f8] sm:$0xff]
    %v191 = vld [vmem:[#allocation2 + $0x300] sm:$0xff]
    %v192 = vld [vmem:[#allocation2 + $0x308] sm:$0xff]
    %v193 = vld [vmem:[#allocation2 + $0x310] sm:$0xff]
    %v194 = vld [vmem:[#allocation2 + $0x318] sm:$0xff]
    %v195 = vld [vmem:[#allocation2 + $0x320] sm:$0xff]
    %v196 = vld [vmem:[#allocation2 + $0x328] sm:$0xff]
    %v197 = vld [vmem:[#allocation2 + $0x330] sm:$0xff]
    %v198 = vld [vmem:[#allocation2 + $0x338] sm:$0xff]
    %v199 = vld [vmem:[#allocation2 + $0x340] sm:$0xff]
    %v200 = vld [vmem:[#allocation2 + $0x348] sm:$0xff]
    %v201 = vld [vmem:[#allocation2 + $0x350] sm:$0xff]
    %v202 = vld [vmem:[#allocation2 + $0x358] sm:$0xff]
    %v203 = vld [vmem:[#allocation2 + $0x360] sm:$0xff]
    %v204 = vld [vmem:[#allocation2 + $0x368] sm:$0xff]
    %v205 = vld [vmem:[#allocation2 + $0x370] sm:$0xff]
    %v206 = vld [vmem:[#allocation2 + $0x378] sm:$0xff]
    %v207 = vld [vmem:[#allocation2 + $0x380] sm:$0xff]
    %v208 = vld [vmem:[#allocation2 + $0x388] sm:$0xff]
    %v209 = vld [vmem:[#allocation2 + $0x390] sm:$0xff]
    %v210 = vld [vmem:[#allocation2 + $0x398] sm:$0xff]
    %v211 = vld [vmem:[#allocation2 + $0x3a0] sm:$0xff]
    %v212 = vld [vmem:[#allocation2 + $0x3a8] sm:$0xff]
    %v213 = vld [vmem:[#allocation2 + $0x3b0] sm:$0xff]
    %v214 = vld [vmem:[#allocation2 + $0x3b8] sm:$0xff]
    %v215 = vld [vmem:[#allocation2 + $0x3c0] sm:$0xff]
    %v216 = vld [vmem:[#allocation2 + $0x3c8] sm:$0xff]
    %v217 = vld [vmem:[#allocation2 + $0x3d0] sm:$0xff]
    %v218 = vld [vmem:[#allocation2 + $0x3d8] sm:$0xff]
    %v219 = vld [vmem:[#allocation2 + $0x3e0] sm:$0xff]
    %v220 = vld [vmem:[#allocation2 + $0x3e8] sm:$0xff]
    %v221 = vld [vmem:[#allocation2 + $0x3f0] sm:$0xff]
    %v222 = vld [vmem:[#allocation2 + $0x3f8] sm:$0xff]
    %v223 = vld [vmem:[#allocation2 + $0x400] sm:$0xff]
    %v224 = vld [vmem:[#allocation2 + $0x408] sm:$0xff]
    %v225 = vld [vmem:[#allocation2 + $0x410] sm:$0xff]
    %v226 = vld [vmem:[#allocation2 + $0x418] sm:$0xff]
    %v227 = vld [vmem:[#allocation2 + $0x420] sm:$0xff]
    %v228 = vld [vmem:[#allocation2 + $0x428] sm:$0xff]
    %v229 = vld [vmem:[#allocation2 + $0x430] sm:$0xff]
    %v230 = vld [vmem:[#allocation2 + $0x438] sm:$0xff]
    %v231 = vld [vmem:[#allocation2 + $0x440] sm:$0xff]
    %v232 = vld [vmem:[#allocation2 + $0x448] sm:$0xff]
    %v233 = vld [vmem:[#allocation2 + $0x450] sm:$0xff]
    %v234 = vld [vmem:[#allocation2 + $0x458] sm:$0xff]
    %v235 = vld [vmem:[#allocation2 + $0x460] sm:$0xff]
    %v236 = vld [vmem:[#allocation2 + $0x468] sm:$0xff]
    %v237 = vld [vmem:[#allocation2 + $0x470] sm:$0xff]
    %v238 = vld [vmem:[#allocation2 + $0x478] sm:$0xff]
    %v239 = vld [vmem:[#allocation2 + $0x480] sm:$0xff]
    %v240 = vld [vmem:[#allocation2 + $0x488] sm:$0xff]
    %v241 = vld [vmem:[#allocation2 + $0x490] sm:$0xff]
    %v242 = vld [vmem:[#allocation2 + $0x498] sm:$0xff]
    %v243 = vld [vmem:[#allocation2 + $0x4a0] sm:$0xff]
    %v244 = vld [vmem:[#allocation2 + $0x4a8] sm:$0xff]
    %v245 = vld [vmem:[#allocation2 + $0x4b0] sm:$0xff]
    %v246 = vld [vmem:[#allocation2 + $0x4b8] sm:$0xff]
    %v247 = vld [vmem:[#allocation2 + $0x4c0] sm:$0xff]
    %v248 = vld [vmem:[#allocation2 + $0x4c8] sm:$0xff]
    %v249 = vld [vmem:[#allocation2 + $0x4d0] sm:$0xff]
    %v250 = vld [vmem:[#allocation2 + $0x4d8] sm:$0xff]
    %v251 = vld [vmem:[#allocation2 + $0x4e0] sm:$0xff]
    %v252 = vld [vmem:[#allocation2 + $0x4e8] sm:$0xff]
    %v253 = vld [vmem:[#allocation2 + $0x4f0] sm:$0xff]
    %v254 = vld [vmem:[#allocation2 + $0x4f8] sm:$0xff]
    %v255 = vld [vmem:[#allocation2 + $0x500] sm:$0xff]
    %v256 = vld [vmem:[#allocation2 + $0x508] sm:$0xff]
    %v257 = vld [vmem:[#allocation2 + $0x510] sm:$0xff]
    %v258 = vld [vmem:[#allocation2 + $0x518] sm:$0xff]
    %v259 = vld [vmem:[#allocation2 + $0x520] sm:$0xff]
    %v260 = vld [vmem:[#allocation2 + $0x528] sm:$0xff]
    %v261 = vld [vmem:[#allocation2 + $0x530] sm:$0xff]
    %v262 = vld [vmem:[#allocation2 + $0x538] sm:$0xff]
    %v263 = vld [vmem:[#allocation2 + $0x540] sm:$0xff]
    %v264 = vld [vmem:[#allocation2 + $0x548] sm:$0xff]
    %v265 = vld [vmem:[#allocation2 + $0x550] sm:$0xff]
    %v266 = vld [vmem:[#allocation2 + $0x558] sm:$0xff]
    %v267 = vld [vmem:[#allocation2 + $0x560] sm:$0xff]
    %v268 = vld [vmem:[#allocation2 + $0x568] sm:$0xff]
    %v269 = vld [vmem:[#allocation2 + $0x570] sm:$0xff]
    %v270 = vld [vmem:[#allocation2 + $0x578] sm:$0xff]
    %v271 = vld [vmem:[#allocation2 + $0x580] sm:$0xff]
    %v272 = vld [vmem:[#allocation2 + $0x588] sm:$0xff]
    %v273 = vld [vmem:[#allocation2 + $0x590] sm:$0xff]
    %v274 = vld [vmem:[#allocation2 + $0x598] sm:$0xff]
    %v275 = vld [vmem:[#allocation2 + $0x5a0] sm:$0xff]
    %v276 = vld [vmem:[#allocation2 + $0x5a8] sm:$0xff]
    %v277 = vld [vmem:[#allocation2 + $0x5b0] sm:$0xff]
    %v278 = vld [vmem:[#allocation2 + $0x5b8] sm:$0xff]
    %v279 = vld [vmem:[#allocation2 + $0x5c0] sm:$0xff]
    %v280 = vld [vmem:[#allocation2 + $0x5c8] sm:$0xff]
    %v281 = vld [vmem:[#allocation2 + $0x5d0] sm:$0xff]
    %v282 = vld [vmem:[#allocation2 + $0x5d8] sm:$0xff]
    %v283 = vld [vmem:[#allocation2 + $0x5e0] sm:$0xff]
    %v284 = vld [vmem:[#allocation2 + $0x5e8] sm:$0xff]
    %v285 = vld [vmem:[#allocation2 + $0x5f0] sm:$0xff]
    %v286 = vld [vmem:[#allocation2 + $0x5f8] sm:$0xff]
    %v287 = vld [vmem:[#allocation2 + $0x600] sm:$0xff]
    %v288 = vld [vmem:[#allocation2 + $0x608] sm:$0xff]
    %v289 = vld [vmem:[#allocation2 + $0x610] sm:$0xff]
    %v290 = vld [vmem:[#allocation2 + $0x618] sm:$0xff]
    %v291 = vld [vmem:[#allocation2 + $0x620] sm:$0xff]
    %v292 = vld [vmem:[#allocation2 + $0x628] sm:$0xff]
    %v293 = vld [vmem:[#allocation2 + $0x630] sm:$0xff]
    %v294 = vld [vmem:[#allocation2 + $0x638] sm:$0xff]
    %v295 = vld [vmem:[#allocation2 + $0x640] sm:$0xff]
    %v296 = vld [vmem:[#allocation2 + $0x648] sm:$0xff]
    %v297 = vld [vmem:[#allocation2 + $0x650] sm:$0xff]
    %v298 = vld [vmem:[#allocation2 + $0x658] sm:$0xff]
    %v299 = vld [vmem:[#allocation2 + $0x660] sm:$0xff]
    %v300 = vld [vmem:[#allocation2 + $0x668] sm:$0xff]
    %v301 = vld [vmem:[#allocation2 + $0x670] sm:$0xff]
    %v302 = vld [vmem:[#allocation2 + $0x678] sm:$0xff]
    %v303 = vld [vmem:[#allocation2 + $0x680] sm:$0xff]
    %v304 = vld [vmem:[#allocation2 + $0x688] sm:$0xff]
    %v305 = vld [vmem:[#allocation2 + $0x690] sm:$0xff]
    %v306 = vld [vmem:[#allocation2 + $0x698] sm:$0xff]
    %v307 = vld [vmem:[#allocation2 + $0x6a0] sm:$0xff]
    %v308 = vld [vmem:[#allocation2 + $0x6a8] sm:$0xff]
    %v309 = vld [vmem:[#allocation2 + $0x6b0] sm:$0xff]
    %v310 = vld [vmem:[#allocation2 + $0x6b8] sm:$0xff]
    %v311 = vld [vmem:[#allocation2 + $0x6c0] sm:$0xff]
    %v312 = vld [vmem:[#allocation2 + $0x6c8] sm:$0xff]
    %v313 = vld [vmem:[#allocation2 + $0x6d0] sm:$0xff]
    %v314 = vld [vmem:[#allocation2 + $0x6d8] sm:$0xff]
    %v315 = vld [vmem:[#allocation2 + $0x6e0] sm:$0xff]
    %v316 = vld [vmem:[#allocation2 + $0x6e8] sm:$0xff]
    %v317 = vld [vmem:[#allocation2 + $0x6f0] sm:$0xff]
    %v318 = vld [vmem:[#allocation2 + $0x6f8] sm:$0xff]
    %v319 = vld [vmem:[%s2] sm:$0xf]
    %v321 = vlaneseq
    %v322 = vshrl.u32 %v321, 7
    %v323 = vsub.s32 0, %v322
    %v324 = vrot.slane %v319, %v323
    %v325 = vlaneseq
    %v326 = vshrl.u32 %v325, 7
    %v327 = vsub.s32 1, %v326
    %v328 = vrot.slane %v319, %v327
    %v329 = vlaneseq
    %v330 = vshrl.u32 %v329, 7
    %v331 = vsub.s32 2, %v330
    %v332 = vrot.slane %v319, %v331
    %v333 = vlaneseq
    %v334 = vshrl.u32 %v333, 7
    %v335 = vsub.s32 3, %v334
    %v336 = vrot.slane %v319, %v335
    %v345 = vunpack.c.l.b16 %v91
    %v346 = vunpack.c.h.b16 %v91
    %v347 = vunpack.c.l.b16 %v92
    %v348 = vunpack.c.h.b16 %v92
    %v349 = vunpack.c.l.b16 %v93
    %v350 = vunpack.c.h.b16 %v93
    %v351 = vunpack.c.l.b16 %v94
    %v352 = vpack.c.b16 %v345, %v345
    %v353 = vpack.c.b16 %v346, %v346
    %v354 = vpack.c.b16 %v347, %v347
    %v355 = vpack.c.b16 %v348, %v348
    %v356 = vpack.c.b16 %v349, %v349
    %v357 = vpack.c.b16 %v350, %v350
    %v358 = vpack.c.b16 %v351, %v351
    %v590 = vunpack.c.l.b16 %v95
    %v591 = vunpack.c.h.b16 %v95
    %v592 = vunpack.c.l.b16 %v96
    %v593 = vunpack.c.h.b16 %v96
    %v594 = vunpack.c.l.b16 %v97
    %v595 = vunpack.c.h.b16 %v97
    %v596 = vunpack.c.l.b16 %v98
    %v597 = vunpack.c.h.b16 %v98
    %v598 = vunpack.c.l.b16 %v99
    %v599 = vunpack.c.h.b16 %v99
    %v600 = vunpack.c.l.b16 %v100
    %v601 = vunpack.c.h.b16 %v100
    %v602 = vunpack.c.l.b16 %v101
    %v603 = vunpack.c.h.b16 %v101
    %v604 = vunpack.c.l.b16 %v102
    %v605 = vunpack.c.h.b16 %v102
    %v606 = vunpack.c.l.b16 %v103
    %v607 = vunpack.c.h.b16 %v103
    %v608 = vunpack.c.l.b16 %v104
    %v609 = vunpack.c.h.b16 %v104
    %v610 = vunpack.c.l.b16 %v105
    %v611 = vunpack.c.h.b16 %v105
    %v612 = vunpack.c.l.b16 %v106
    %v613 = vunpack.c.h.b16 %v106
    %v614 = vunpack.c.l.b16 %v107
    %v615 = vunpack.c.h.b16 %v107
    %v616 = vunpack.c.l.b16 %v108
    %v617 = vunpack.c.h.b16 %v108
    %v618 = vunpack.c.l.b16 %v109
    %v619 = vunpack.c.h.b16 %v109
    %v620 = vunpack.c.l.b16 %v110
    %v621 = vunpack.c.h.b16 %v110
    %v622 = vunpack.c.l.b16 %v111
    %v623 = vunpack.c.h.b16 %v111
    %v624 = vunpack.c.l.b16 %v112
    %v625 = vunpack.c.h.b16 %v112
    %v626 = vunpack.c.l.b16 %v113
    %v627 = vunpack.c.h.b16 %v113
    %v628 = vunpack.c.l.b16 %v114
    %v629 = vunpack.c.h.b16 %v114
    %v630 = vunpack.c.l.b16 %v115
    %v631 = vunpack.c.h.b16 %v115
    %v632 = vunpack.c.l.b16 %v116
    %v633 = vunpack.c.h.b16 %v116
    %v634 = vunpack.c.l.b16 %v117
    %v635 = vunpack.c.h.b16 %v117
    %v636 = vunpack.c.l.b16 %v118
    %v637 = vunpack.c.h.b16 %v118
    %v638 = vunpack.c.l.b16 %v119
    %v639 = vunpack.c.h.b16 %v119
    %v640 = vunpack.c.l.b16 %v120
    %v641 = vunpack.c.h.b16 %v120
    %v642 = vunpack.c.l.b16 %v121
    %v643 = vunpack.c.h.b16 %v121
    %v644 = vunpack.c.l.b16 %v122
    %v645 = vunpack.c.h.b16 %v122
    %v646 = vunpack.c.l.b16 %v123
    %v647 = vunpack.c.h.b16 %v123
    %v648 = vunpack.c.l.b16 %v124
    %v649 = vunpack.c.h.b16 %v124
    %v650 = vunpack.c.l.b16 %v125
    %v651 = vunpack.c.h.b16 %v125
    %v652 = vunpack.c.l.b16 %v126
    %v653 = vunpack.c.h.b16 %v126
    %v654 = vunpack.c.l.b16 %v127
    %v655 = vunpack.c.h.b16 %v127
    %v656 = vunpack.c.l.b16 %v128
    %v657 = vunpack.c.h.b16 %v128
    %v658 = vunpack.c.l.b16 %v129
    %v659 = vunpack.c.h.b16 %v129
    %v660 = vunpack.c.l.b16 %v130
    %v661 = vunpack.c.h.b16 %v130
    %v662 = vunpack.c.l.b16 %v131
    %v663 = vunpack.c.h.b16 %v131
    %v664 = vunpack.c.l.b16 %v132
    %v665 = vunpack.c.h.b16 %v132
    %v666 = vunpack.c.l.b16 %v133
    %v667 = vunpack.c.h.b16 %v133
    %v668 = vunpack.c.l.b16 %v134
    %v669 = vunpack.c.h.b16 %v134
    %v670 = vunpack.c.l.b16 %v135
    %v671 = vunpack.c.h.b16 %v135
    %v672 = vunpack.c.l.b16 %v136
    %v673 = vunpack.c.h.b16 %v136
    %v674 = vunpack.c.l.b16 %v137
    %v675 = vunpack.c.h.b16 %v137
    %v676 = vunpack.c.l.b16 %v138
    %v677 = vunpack.c.h.b16 %v138
    %v678 = vunpack.c.l.b16 %v139
    %v679 = vunpack.c.h.b16 %v139
    %v680 = vunpack.c.l.b16 %v140
    %v681 = vunpack.c.h.b16 %v140
    %v682 = vunpack.c.l.b16 %v141
    %v683 = vunpack.c.h.b16 %v141
    %v684 = vunpack.c.l.b16 %v142
    %v685 = vunpack.c.h.b16 %v142
    %v686 = vunpack.c.l.b16 %v143
    %v687 = vunpack.c.h.b16 %v143
    %v688 = vunpack.c.l.b16 %v144
    %v689 = vunpack.c.h.b16 %v144
    %v690 = vunpack.c.l.b16 %v145
    %v691 = vunpack.c.h.b16 %v145
    %v692 = vunpack.c.l.b16 %v146
    %v693 = vunpack.c.h.b16 %v146
    %v694 = vunpack.c.l.b16 %v147
    %v695 = vunpack.c.h.b16 %v147
    %v696 = vunpack.c.l.b16 %v148
    %v697 = vunpack.c.h.b16 %v148
    %v698 = vunpack.c.l.b16 %v149
    %v699 = vunpack.c.h.b16 %v149
    %v700 = vunpack.c.l.b16 %v150
    %v701 = vunpack.c.h.b16 %v150
    %v702 = vunpack.c.l.b16 %v151
    %v703 = vunpack.c.h.b16 %v151
    %v704 = vunpack.c.l.b16 %v152
    %v705 = vunpack.c.h.b16 %v152
    %v706 = vunpack.c.l.b16 %v153
    %v707 = vunpack.c.h.b16 %v153
    %v708 = vunpack.c.l.b16 %v154
    %v709 = vunpack.c.h.b16 %v154
    %v710 = vunpack.c.l.b16 %v155
    %v711 = vunpack.c.h.b16 %v155
    %v712 = vunpack.c.l.b16 %v156
    %v713 = vunpack.c.h.b16 %v156
    %v714 = vunpack.c.l.b16 %v157
    %v715 = vunpack.c.h.b16 %v157
    %v716 = vunpack.c.l.b16 %v158
    %v717 = vunpack.c.h.b16 %v158
    %v718 = vunpack.c.l.b16 %v159
    %v719 = vunpack.c.h.b16 %v159
    %v720 = vunpack.c.l.b16 %v160
    %v721 = vunpack.c.h.b16 %v160
    %v722 = vunpack.c.l.b16 %v161
    %v723 = vunpack.c.h.b16 %v161
    %v724 = vunpack.c.l.b16 %v162
    %v725 = vunpack.c.h.b16 %v162
    %v726 = vunpack.c.l.b16 %v163
    %v727 = vunpack.c.h.b16 %v163
    %v728 = vunpack.c.l.b16 %v164
    %v729 = vunpack.c.h.b16 %v164
    %v730 = vunpack.c.l.b16 %v165
    %v731 = vunpack.c.h.b16 %v165
    %v732 = vunpack.c.l.b16 %v166
    %v733 = vunpack.c.h.b16 %v166
    %v734 = vunpack.c.l.b16 %v167
    %v735 = vunpack.c.h.b16 %v167
    %v736 = vunpack.c.l.b16 %v168
    %v737 = vunpack.c.h.b16 %v168
    %v738 = vunpack.c.l.b16 %v169
    %v739 = vunpack.c.h.b16 %v169
    %v740 = vunpack.c.l.b16 %v170
    %v741 = vunpack.c.h.b16 %v170
    %v742 = vunpack.c.l.b16 %v171
    %v743 = vunpack.c.h.b16 %v171
    %v744 = vunpack.c.l.b16 %v172
    %v745 = vunpack.c.h.b16 %v172
    %v746 = vunpack.c.l.b16 %v173
    %v747 = vunpack.c.h.b16 %v173
    %v748 = vunpack.c.l.b16 %v174
    %v749 = vunpack.c.h.b16 %v174
    %v750 = vunpack.c.l.b16 %v175
    %v751 = vunpack.c.h.b16 %v175
    %v752 = vunpack.c.l.b16 %v176
    %v753 = vunpack.c.h.b16 %v176
    %v754 = vunpack.c.l.b16 %v177
    %v755 = vunpack.c.h.b16 %v177
    %v756 = vunpack.c.l.b16 %v178
    %v757 = vunpack.c.h.b16 %v178
    %v758 = vunpack.c.l.b16 %v179
    %v759 = vunpack.c.h.b16 %v179
    %v760 = vunpack.c.l.b16 %v180
    %v761 = vunpack.c.h.b16 %v180
    %v762 = vunpack.c.l.b16 %v181
    %v763 = vunpack.c.h.b16 %v181
    %v764 = vunpack.c.l.b16 %v182
    %v765 = vunpack.c.h.b16 %v182
    %v766 = vunpack.c.l.b16 %v183
    %v767 = vunpack.c.h.b16 %v183
    %v768 = vunpack.c.l.b16 %v184
    %v769 = vunpack.c.h.b16 %v184
    %v770 = vunpack.c.l.b16 %v185
    %v771 = vunpack.c.h.b16 %v185
    %v772 = vunpack.c.l.b16 %v186
    %v773 = vunpack.c.h.b16 %v186
    %v774 = vunpack.c.l.b16 %v187
    %v775 = vunpack.c.h.b16 %v187
    %v776 = vunpack.c.l.b16 %v188
    %v777 = vunpack.c.h.b16 %v188
    %v778 = vunpack.c.l.b16 %v189
    %v779 = vunpack.c.h.b16 %v189
    %v780 = vunpack.c.l.b16 %v190
    %v781 = vunpack.c.h.b16 %v190
    %v782 = vunpack.c.l.b16 %v191
    %v783 = vunpack.c.h.b16 %v191
    %v784 = vunpack.c.l.b16 %v192
    %v785 = vunpack.c.h.b16 %v192
    %v786 = vunpack.c.l.b16 %v193
    %v787 = vunpack.c.h.b16 %v193
    %v788 = vunpack.c.l.b16 %v194
    %v789 = vunpack.c.h.b16 %v194
    %v790 = vunpack.c.l.b16 %v195
    %v791 = vunpack.c.h.b16 %v195
    %v792 = vunpack.c.l.b16 %v196
    %v793 = vunpack.c.h.b16 %v196
    %v794 = vunpack.c.l.b16 %v197
    %v795 = vunpack.c.h.b16 %v197
    %v796 = vunpack.c.l.b16 %v198
    %v797 = vunpack.c.h.b16 %v198
    %v798 = vunpack.c.l.b16 %v199
    %v799 = vunpack.c.h.b16 %v199
    %v800 = vunpack.c.l.b16 %v200
    %v801 = vunpack.c.h.b16 %v200
    %v802 = vunpack.c.l.b16 %v201
    %v803 = vunpack.c.h.b16 %v201
    %v804 = vunpack.c.l.b16 %v202
    %v805 = vunpack.c.h.b16 %v202
    %v806 = vunpack.c.l.b16 %v203
    %v807 = vunpack.c.h.b16 %v203
    %v808 = vunpack.c.l.b16 %v204
    %v809 = vunpack.c.h.b16 %v204
    %v810 = vunpack.c.l.b16 %v205
    %v811 = vunpack.c.h.b16 %v205
    %v812 = vunpack.c.l.b16 %v206
    %v813 = vunpack.c.h.b16 %v206
    %v814 = vunpack.c.l.b16 %v207
    %v815 = vunpack.c.h.b16 %v207
    %v816 = vunpack.c.l.b16 %v208
    %v817 = vunpack.c.h.b16 %v208
    %v818 = vunpack.c.l.b16 %v209
    %v819 = vunpack.c.h.b16 %v209
    %v820 = vunpack.c.l.b16 %v210
    %v821 = vunpack.c.h.b16 %v210
    %v822 = vunpack.c.l.b16 %v211
    %v823 = vunpack.c.h.b16 %v211
    %v824 = vunpack.c.l.b16 %v212
    %v825 = vunpack.c.h.b16 %v212
    %v826 = vunpack.c.l.b16 %v213
    %v827 = vunpack.c.h.b16 %v213
    %v828 = vunpack.c.l.b16 %v214
    %v829 = vunpack.c.h.b16 %v214
    %v830 = vunpack.c.l.b16 %v215
    %v831 = vunpack.c.h.b16 %v215
    %v832 = vunpack.c.l.b16 %v216
    %v833 = vunpack.c.h.b16 %v216
    %v834 = vunpack.c.l.b16 %v217
    %v835 = vunpack.c.h.b16 %v217
    %v836 = vunpack.c.l.b16 %v218
    %v837 = vunpack.c.h.b16 %v218
    %v838 = vunpack.c.l.b16 %v219
    %v839 = vunpack.c.h.b16 %v219
    %v840 = vunpack.c.l.b16 %v220
    %v841 = vunpack.c.h.b16 %v220
    %v842 = vunpack.c.l.b16 %v221
    %v843 = vunpack.c.h.b16 %v221
    %v844 = vunpack.c.l.b16 %v222
    %v845 = vunpack.c.h.b16 %v222
    %v846 = vunpack.c.l.b16 %v223
    %v847 = vunpack.c.h.b16 %v223
    %v848 = vunpack.c.l.b16 %v224
    %v849 = vunpack.c.h.b16 %v224
    %v850 = vunpack.c.l.b16 %v225
    %v851 = vunpack.c.h.b16 %v225
    %v852 = vunpack.c.l.b16 %v226
    %v853 = vunpack.c.h.b16 %v226
    %v854 = vunpack.c.l.b16 %v227
    %v855 = vunpack.c.h.b16 %v227
    %v856 = vunpack.c.l.b16 %v228
    %v857 = vunpack.c.h.b16 %v228
    %v858 = vunpack.c.l.b16 %v229
    %v859 = vunpack.c.h.b16 %v229
    %v860 = vunpack.c.l.b16 %v230
    %v861 = vunpack.c.h.b16 %v230
    %v862 = vunpack.c.l.b16 %v231
    %v863 = vunpack.c.h.b16 %v231
    %v864 = vunpack.c.l.b16 %v232
    %v865 = vunpack.c.h.b16 %v232
    %v866 = vunpack.c.l.b16 %v233
    %v867 = vunpack.c.h.b16 %v233
    %v868 = vunpack.c.l.b16 %v234
    %v869 = vunpack.c.h.b16 %v234
    %v870 = vunpack.c.l.b16 %v235
    %v871 = vunpack.c.h.b16 %v235
    %v872 = vunpack.c.l.b16 %v236
    %v873 = vunpack.c.h.b16 %v236
    %v874 = vunpack.c.l.b16 %v237
    %v875 = vunpack.c.h.b16 %v237
    %v876 = vunpack.c.l.b16 %v238
    %v877 = vunpack.c.h.b16 %v238
    %v878 = vunpack.c.l.b16 %v239
    %v879 = vunpack.c.h.b16 %v239
    %v880 = vunpack.c.l.b16 %v240
    %v881 = vunpack.c.h.b16 %v240
    %v882 = vunpack.c.l.b16 %v241
    %v883 = vunpack.c.h.b16 %v241
    %v884 = vunpack.c.l.b16 %v242
    %v885 = vunpack.c.h.b16 %v242
    %v886 = vunpack.c.l.b16 %v243
    %v887 = vunpack.c.h.b16 %v243
    %v888 = vunpack.c.l.b16 %v244
    %v889 = vunpack.c.h.b16 %v244
    %v890 = vunpack.c.l.b16 %v245
    %v891 = vunpack.c.h.b16 %v245
    %v892 = vunpack.c.l.b16 %v246
    %v893 = vunpack.c.h.b16 %v246
    %v894 = vunpack.c.l.b16 %v247
    %v895 = vunpack.c.h.b16 %v247
    %v896 = vunpack.c.l.b16 %v248
    %v897 = vunpack.c.h.b16 %v248
    %v898 = vunpack.c.l.b16 %v249
    %v899 = vunpack.c.h.b16 %v249
    %v900 = vunpack.c.l.b16 %v250
    %v901 = vunpack.c.h.b16 %v250
    %v902 = vunpack.c.l.b16 %v251
    %v903 = vunpack.c.h.b16 %v251
    %v904 = vunpack.c.l.b16 %v252
    %v905 = vunpack.c.h.b16 %v252
    %v906 = vunpack.c.l.b16 %v253
    %v907 = vunpack.c.h.b16 %v253
    %v908 = vunpack.c.l.b16 %v254
    %v909 = vunpack.c.h.b16 %v254
    %v910 = vunpack.c.l.b16 %v255
    %v911 = vunpack.c.h.b16 %v255
    %v912 = vunpack.c.l.b16 %v256
    %v913 = vunpack.c.h.b16 %v256
    %v914 = vunpack.c.l.b16 %v257
    %v915 = vunpack.c.h.b16 %v257
    %v916 = vunpack.c.l.b16 %v258
    %v917 = vunpack.c.h.b16 %v258
    %v918 = vunpack.c.l.b16 %v259
    %v919 = vunpack.c.h.b16 %v259
    %v920 = vunpack.c.l.b16 %v260
    %v921 = vunpack.c.h.b16 %v260
    %v922 = vunpack.c.l.b16 %v261
    %v923 = vunpack.c.h.b16 %v261
    %v924 = vunpack.c.l.b16 %v262
    %v925 = vunpack.c.h.b16 %v262
    %v926 = vunpack.c.l.b16 %v263
    %v927 = vunpack.c.h.b16 %v263
    %v928 = vunpack.c.l.b16 %v264
    %v929 = vunpack.c.h.b16 %v264
    %v930 = vunpack.c.l.b16 %v265
    %v931 = vunpack.c.h.b16 %v265
    %v932 = vunpack.c.l.b16 %v266
    %v933 = vunpack.c.h.b16 %v266
    %v934 = vunpack.c.l.b16 %v267
    %v935 = vunpack.c.h.b16 %v267
    %v936 = vunpack.c.l.b16 %v268
    %v937 = vunpack.c.h.b16 %v268
    %v938 = vunpack.c.l.b16 %v269
    %v939 = vunpack.c.h.b16 %v269
    %v940 = vunpack.c.l.b16 %v270
    %v941 = vunpack.c.h.b16 %v270
    %v942 = vunpack.c.l.b16 %v271
    %v943 = vunpack.c.h.b16 %v271
    %v944 = vunpack.c.l.b16 %v272
    %v945 = vunpack.c.h.b16 %v272
    %v946 = vunpack.c.l.b16 %v273
    %v947 = vunpack.c.h.b16 %v273
    %v948 = vunpack.c.l.b16 %v274
    %v949 = vunpack.c.h.b16 %v274
    %v950 = vunpack.c.l.b16 %v275
    %v951 = vunpack.c.h.b16 %v275
    %v952 = vunpack.c.l.b16 %v276
    %v953 = vunpack.c.h.b16 %v276
    %v954 = vunpack.c.l.b16 %v277
    %v955 = vunpack.c.h.b16 %v277
    %v956 = vunpack.c.l.b16 %v278
    %v957 = vunpack.c.h.b16 %v278
    %v958 = vunpack.c.l.b16 %v279
    %v959 = vunpack.c.h.b16 %v279
    %v960 = vunpack.c.l.b16 %v280
    %v961 = vunpack.c.h.b16 %v280
    %v962 = vunpack.c.l.b16 %v281
    %v963 = vunpack.c.h.b16 %v281
    %v964 = vunpack.c.l.b16 %v282
    %v965 = vunpack.c.h.b16 %v282
    %v966 = vunpack.c.l.b16 %v283
    %v967 = vunpack.c.h.b16 %v283
    %v968 = vunpack.c.l.b16 %v284
    %v969 = vunpack.c.h.b16 %v284
    %v970 = vunpack.c.l.b16 %v285
    %v971 = vunpack.c.h.b16 %v285
    %v972 = vunpack.c.l.b16 %v286
    %v973 = vunpack.c.h.b16 %v286
    %v974 = vunpack.c.l.b16 %v287
    %v975 = vunpack.c.h.b16 %v287
    %v976 = vunpack.c.l.b16 %v288
    %v977 = vunpack.c.h.b16 %v288
    %v978 = vunpack.c.l.b16 %v289
    %v979 = vunpack.c.h.b16 %v289
    %v980 = vunpack.c.l.b16 %v290
    %v981 = vunpack.c.h.b16 %v290
    %v982 = vunpack.c.l.b16 %v291
    %v983 = vunpack.c.h.b16 %v291
    %v984 = vunpack.c.l.b16 %v292
    %v985 = vunpack.c.h.b16 %v292
    %v986 = vunpack.c.l.b16 %v293
    %v987 = vunpack.c.h.b16 %v293
    %v988 = vunpack.c.l.b16 %v294
    %v989 = vunpack.c.h.b16 %v294
    %v990 = vunpack.c.l.b16 %v295
    %v991 = vunpack.c.h.b16 %v295
    %v992 = vunpack.c.l.b16 %v296
    %v993 = vunpack.c.h.b16 %v296
    %v994 = vunpack.c.l.b16 %v297
    %v995 = vunpack.c.h.b16 %v297
    %v996 = vunpack.c.l.b16 %v298
    %v997 = vunpack.c.h.b16 %v298
    %v998 = vunpack.c.l.b16 %v299
    %v999 = vunpack.c.h.b16 %v299
    %v1000 = vunpack.c.l.b16 %v300
    %v1001 = vunpack.c.h.b16 %v300
    %v1002 = vunpack.c.l.b16 %v301
    %v1003 = vunpack.c.h.b16 %v301
    %v1004 = vunpack.c.l.b16 %v302
    %v1005 = vunpack.c.h.b16 %v302
    %v1006 = vunpack.c.l.b16 %v303
    %v1007 = vunpack.c.h.b16 %v303
    %v1008 = vunpack.c.l.b16 %v304
    %v1009 = vunpack.c.h.b16 %v304
    %v1010 = vunpack.c.l.b16 %v305
    %v1011 = vunpack.c.h.b16 %v305
    %v1012 = vunpack.c.l.b16 %v306
    %v1013 = vunpack.c.h.b16 %v306
    %v1014 = vunpack.c.l.b16 %v307
    %v1015 = vunpack.c.h.b16 %v307
    %v1016 = vunpack.c.l.b16 %v308
    %v1017 = vunpack.c.h.b16 %v308
    %v1018 = vunpack.c.l.b16 %v309
    %v1019 = vunpack.c.h.b16 %v309
    %v1020 = vunpack.c.l.b16 %v310
    %v1021 = vunpack.c.h.b16 %v310
    %v1022 = vunpack.c.l.b16 %v311
    %v1023 = vunpack.c.h.b16 %v311
    %v1024 = vunpack.c.l.b16 %v312
    %v1025 = vunpack.c.h.b16 %v312
    %v1026 = vunpack.c.l.b16 %v313
    %v1027 = vunpack.c.h.b16 %v313
    %v1028 = vunpack.c.l.b16 %v314
    %v1029 = vunpack.c.h.b16 %v314
    %v1030 = vunpack.c.l.b16 %v315
    %v1031 = vunpack.c.h.b16 %v315
    %v1032 = vunpack.c.l.b16 %v316
    %v1033 = vunpack.c.h.b16 %v316
    %v1034 = vunpack.c.l.b16 %v317
    %v1035 = vunpack.c.h.b16 %v317
    %v1036 = vunpack.c.l.b16 %v318
    %v1037 = vunpack.c.h.b16 %v318
    %v1038 = vpack.c.b16 %v594, %v590
    %v1039 = vpack.c.b16 %v595, %v591
    %v1040 = vpack.c.b16 %v596, %v592
    %v1041 = vpack.c.b16 %v597, %v593
    %v1042 = vpack.c.b16 %v602, %v598
    %v1043 = vpack.c.b16 %v603, %v599
    %v1044 = vpack.c.b16 %v604, %v600
    %v1045 = vpack.c.b16 %v605, %v601
    %v1046 = vpack.c.b16 %v610, %v606
    %v1047 = vpack.c.b16 %v611, %v607
    %v1048 = vpack.c.b16 %v612, %v608
    %v1049 = vpack.c.b16 %v613, %v609
    %v1050 = vpack.c.b16 %v618, %v614
    %v1051 = vpack.c.b16 %v619, %v615
    %v1052 = vpack.c.b16 %v620, %v616
    %v1053 = vpack.c.b16 %v621, %v617
    %v1054 = vpack.c.b16 %v626, %v622
    %v1055 = vpack.c.b16 %v627, %v623
    %v1056 = vpack.c.b16 %v628, %v624
    %v1057 = vpack.c.b16 %v629, %v625
    %v1058 = vpack.c.b16 %v634, %v630
    %v1059 = vpack.c.b16 %v635, %v631
    %v1060 = vpack.c.b16 %v636, %v632
    %v1061 = vpack.c.b16 %v637, %v633
    %v1062 = vpack.c.b16 %v642, %v638
    %v1063 = vpack.c.b16 %v643, %v639
    %v1064 = vpack.c.b16 %v644, %v640
    %v1065 = vpack.c.b16 %v645, %v641
    %v1066 = vpack.c.b16 %v650, %v646
    %v1067 = vpack.c.b16 %v651, %v647
    %v1068 = vpack.c.b16 %v652, %v648
    %v1069 = vpack.c.b16 %v653, %v649
    %v1070 = vpack.c.b16 %v658, %v654
    %v1071 = vpack.c.b16 %v659, %v655
    %v1072 = vpack.c.b16 %v660, %v656
    %v1073 = vpack.c.b16 %v661, %v657
    %v1074 = vpack.c.b16 %v666, %v662
    %v1075 = vpack.c.b16 %v667, %v663
    %v1076 = vpack.c.b16 %v668, %v664
    %v1077 = vpack.c.b16 %v669, %v665
    %v1078 = vpack.c.b16 %v674, %v670
    %v1079 = vpack.c.b16 %v675, %v671
    %v1080 = vpack.c.b16 %v676, %v672
    %v1081 = vpack.c.b16 %v677, %v673
    %v1082 = vpack.c.b16 %v682, %v678
    %v1083 = vpack.c.b16 %v683, %v679
    %v1084 = vpack.c.b16 %v684, %v680
    %v1085 = vpack.c.b16 %v685, %v681
    %v1086 = vpack.c.b16 %v690, %v686
    %v1087 = vpack.c.b16 %v691, %v687
    %v1088 = vpack.c.b16 %v692, %v688
    %v1089 = vpack.c.b16 %v693, %v689
    %v1090 = vpack.c.b16 %v698, %v694
    %v1091 = vpack.c.b16 %v699, %v695
    %v1092 = vpack.c.b16 %v700, %v696
    %v1093 = vpack.c.b16 %v701, %v697
    %v1094 = vpack.c.b16 %v706, %v702
    %v1095 = vpack.c.b16 %v707, %v703
    %v1096 = vpack.c.b16 %v708, %v704
    %v1097 = vpack.c.b16 %v709, %v705
    %v1098 = vpack.c.b16 %v714, %v710
    %v1099 = vpack.c.b16 %v715, %v711
    %v1100 = vpack.c.b16 %v716, %v712
    %v1101 = vpack.c.b16 %v717, %v713
    %v1102 = vpack.c.b16 %v722, %v718
    %v1103 = vpack.c.b16 %v723, %v719
    %v1104 = vpack.c.b16 %v724, %v720
    %v1105 = vpack.c.b16 %v725, %v721
    %v1106 = vpack.c.b16 %v730, %v726
    %v1107 = vpack.c.b16 %v731, %v727
    %v1108 = vpack.c.b16 %v732, %v728
    %v1109 = vpack.c.b16 %v733, %v729
    %v1110 = vpack.c.b16 %v738, %v734
    %v1111 = vpack.c.b16 %v739, %v735
    %v1112 = vpack.c.b16 %v740, %v736
    %v1113 = vpack.c.b16 %v741, %v737
    %v1114 = vpack.c.b16 %v746, %v742
    %v1115 = vpack.c.b16 %v747, %v743
    %v1116 = vpack.c.b16 %v748, %v744
    %v1117 = vpack.c.b16 %v749, %v745
    %v1118 = vpack.c.b16 %v754, %v750
    %v1119 = vpack.c.b16 %v755, %v751
    %v1120 = vpack.c.b16 %v756, %v752
    %v1121 = vpack.c.b16 %v757, %v753
    %v1122 = vpack.c.b16 %v762, %v758
    %v1123 = vpack.c.b16 %v763, %v759
    %v1124 = vpack.c.b16 %v764, %v760
    %v1125 = vpack.c.b16 %v765, %v761
    %v1126 = vpack.c.b16 %v770, %v766
    %v1127 = vpack.c.b16 %v771, %v767
    %v1128 = vpack.c.b16 %v772, %v768
    %v1129 = vpack.c.b16 %v773, %v769
    %v1130 = vpack.c.b16 %v778, %v774
    %v1131 = vpack.c.b16 %v779, %v775
    %v1132 = vpack.c.b16 %v780, %v776
    %v1133 = vpack.c.b16 %v781, %v777
    %v1134 = vpack.c.b16 %v786, %v782
    %v1135 = vpack.c.b16 %v787, %v783
    %v1136 = vpack.c.b16 %v788, %v784
    %v1137 = vpack.c.b16 %v789, %v785
    %v1138 = vpack.c.b16 %v794, %v790
    %v1139 = vpack.c.b16 %v795, %v791
    %v1140 = vpack.c.b16 %v796, %v792
    %v1141 = vpack.c.b16 %v797, %v793
    %v1142 = vpack.c.b16 %v802, %v798
    %v1143 = vpack.c.b16 %v803, %v799
    %v1144 = vpack.c.b16 %v804, %v800
    %v1145 = vpack.c.b16 %v805, %v801
    %v1146 = vpack.c.b16 %v810, %v806
    %v1147 = vpack.c.b16 %v811, %v807
    %v1148 = vpack.c.b16 %v812, %v808
    %v1149 = vpack.c.b16 %v813, %v809
    %v1150 = vpack.c.b16 %v818, %v814
    %v1151 = vpack.c.b16 %v819, %v815
    %v1152 = vpack.c.b16 %v820, %v816
    %v1153 = vpack.c.b16 %v821, %v817
    %v1154 = vpack.c.b16 %v826, %v822
    %v1155 = vpack.c.b16 %v827, %v823
    %v1156 = vpack.c.b16 %v828, %v824
    %v1157 = vpack.c.b16 %v829, %v825
    %v1158 = vpack.c.b16 %v834, %v830
    %v1159 = vpack.c.b16 %v835, %v831
    %v1160 = vpack.c.b16 %v836, %v832
    %v1161 = vpack.c.b16 %v837, %v833
    %v1162 = vpack.c.b16 %v842, %v838
    %v1163 = vpack.c.b16 %v843, %v839
    %v1164 = vpack.c.b16 %v844, %v840
    %v1165 = vpack.c.b16 %v845, %v841
    %v1166 = vpack.c.b16 %v850, %v846
    %v1167 = vpack.c.b16 %v851, %v847
    %v1168 = vpack.c.b16 %v852, %v848
    %v1169 = vpack.c.b16 %v853, %v849
    %v1170 = vpack.c.b16 %v858, %v854
    %v1171 = vpack.c.b16 %v859, %v855
    %v1172 = vpack.c.b16 %v860, %v856
    %v1173 = vpack.c.b16 %v861, %v857
    %v1174 = vpack.c.b16 %v866, %v862
    %v1175 = vpack.c.b16 %v867, %v863
    %v1176 = vpack.c.b16 %v868, %v864
    %v1177 = vpack.c.b16 %v869, %v865
    %v1178 = vpack.c.b16 %v874, %v870
    %v1179 = vpack.c.b16 %v875, %v871
    %v1180 = vpack.c.b16 %v876, %v872
    %v1181 = vpack.c.b16 %v877, %v873
    %v1182 = vpack.c.b16 %v882, %v878
    %v1183 = vpack.c.b16 %v883, %v879
    %v1184 = vpack.c.b16 %v884, %v880
    %v1185 = vpack.c.b16 %v885, %v881
    %v1186 = vpack.c.b16 %v890, %v886
    %v1187 = vpack.c.b16 %v891, %v887
    %v1188 = vpack.c.b16 %v892, %v888
    %v1189 = vpack.c.b16 %v893, %v889
    %v1190 = vpack.c.b16 %v898, %v894
    %v1191 = vpack.c.b16 %v899, %v895
    %v1192 = vpack.c.b16 %v900, %v896
    %v1193 = vpack.c.b16 %v901, %v897
    %v1194 = vpack.c.b16 %v906, %v902
    %v1195 = vpack.c.b16 %v907, %v903
    %v1196 = vpack.c.b16 %v908, %v904
    %v1197 = vpack.c.b16 %v909, %v905
    %v1198 = vpack.c.b16 %v914, %v910
    %v1199 = vpack.c.b16 %v915, %v911
    %v1200 = vpack.c.b16 %v916, %v912
    %v1201 = vpack.c.b16 %v917, %v913
    %v1202 = vpack.c.b16 %v922, %v918
    %v1203 = vpack.c.b16 %v923, %v919
    %v1204 = vpack.c.b16 %v924, %v920
    %v1205 = vpack.c.b16 %v925, %v921
    %v1206 = vpack.c.b16 %v930, %v926
    %v1207 = vpack.c.b16 %v931, %v927
    %v1208 = vpack.c.b16 %v932, %v928
    %v1209 = vpack.c.b16 %v933, %v929
    %v1210 = vpack.c.b16 %v938, %v934
    %v1211 = vpack.c.b16 %v939, %v935
    %v1212 = vpack.c.b16 %v940, %v936
    %v1213 = vpack.c.b16 %v941, %v937
    %v1214 = vpack.c.b16 %v946, %v942
    %v1215 = vpack.c.b16 %v947, %v943
    %v1216 = vpack.c.b16 %v948, %v944
    %v1217 = vpack.c.b16 %v949, %v945
    %v1218 = vpack.c.b16 %v954, %v950
    %v1219 = vpack.c.b16 %v955, %v951
    %v1220 = vpack.c.b16 %v956, %v952
    %v1221 = vpack.c.b16 %v957, %v953
    %v1222 = vpack.c.b16 %v962, %v958
    %v1223 = vpack.c.b16 %v963, %v959
    %v1224 = vpack.c.b16 %v964, %v960
    %v1225 = vpack.c.b16 %v965, %v961
    %v1226 = vpack.c.b16 %v970, %v966
    %v1227 = vpack.c.b16 %v971, %v967
    %v1228 = vpack.c.b16 %v972, %v968
    %v1229 = vpack.c.b16 %v973, %v969
    %v1230 = vpack.c.b16 %v978, %v974
    %v1231 = vpack.c.b16 %v979, %v975
    %v1232 = vpack.c.b16 %v980, %v976
    %v1233 = vpack.c.b16 %v981, %v977
    %v1234 = vpack.c.b16 %v986, %v982
    %v1235 = vpack.c.b16 %v987, %v983
    %v1236 = vpack.c.b16 %v988, %v984
    %v1237 = vpack.c.b16 %v989, %v985
    %v1238 = vpack.c.b16 %v994, %v990
    %v1239 = vpack.c.b16 %v995, %v991
    %v1240 = vpack.c.b16 %v996, %v992
    %v1241 = vpack.c.b16 %v997, %v993
    %v1242 = vpack.c.b16 %v1002, %v998
    %v1243 = vpack.c.b16 %v1003, %v999
    %v1244 = vpack.c.b16 %v1004, %v1000
    %v1245 = vpack.c.b16 %v1005, %v1001
    %v1246 = vpack.c.b16 %v1010, %v1006
    %v1247 = vpack.c.b16 %v1011, %v1007
    %v1248 = vpack.c.b16 %v1012, %v1008
    %v1249 = vpack.c.b16 %v1013, %v1009
    %v1250 = vpack.c.b16 %v1018, %v1014
    %v1251 = vpack.c.b16 %v1019, %v1015
    %v1252 = vpack.c.b16 %v1020, %v1016
    %v1253 = vpack.c.b16 %v1021, %v1017
    %v1254 = vpack.c.b16 %v1026, %v1022
    %v1255 = vpack.c.b16 %v1027, %v1023
    %v1256 = vpack.c.b16 %v1028, %v1024
    %v1257 = vpack.c.b16 %v1029, %v1025
    %v1258 = vpack.c.b16 %v1034, %v1030
    %v1259 = vpack.c.b16 %v1035, %v1031
    %v1260 = vpack.c.b16 %v1036, %v1032
    %v1261 = vpack.c.b16 %v1037, %v1033
    %1486 = vmatprep.subr.bf16.mxu0 %v1067
    %1487 = vmatpush1.bf16.msra.mxu0 %v1066
    %1488 = vmatprep.subr.bf16.mxu0 %v1063
    %1489 = vmatpush1.bf16.msra.mxu0 %v1062
    %1490 = vmatprep.subr.bf16.mxu0 %v1059
    %1491 = vmatpush1.bf16.msra.mxu0 %v1058
    %1492 = vmatprep.subr.bf16.mxu0 %v1055
    %1493 = vmatpush1.bf16.msra.mxu0 %v1054
    %1494 = vmatprep.subr.bf16.mxu0 %v1051
    %1495 = vmatpush1.bf16.msra.mxu0 %v1050
    %1496 = vmatprep.subr.bf16.mxu0 %v1047
    %1497 = vmatpush1.bf16.msra.mxu0 %v1046
    %1498 = vmatprep.subr.bf16.mxu0 %v1043
    %1499 = vmatpush1.bf16.msra.mxu0 %v1042
    %1500 = vmatprep.subr.bf16.mxu0 %v1039
    %1501 = vmatpush1.bf16.msra.mxu0 %v1038
    %1502 = vmatprep.subr.bf16.mxu0 %v1099
    %1503 = vmatpush2.bf16.msra.mxu0 %v1098
    %1504 = vmatprep.subr.bf16.mxu0 %v1095
    %1505 = vmatpush2.bf16.msra.mxu0 %v1094
    %1506 = vmatprep.subr.bf16.mxu0 %v1091
    %1507 = vmatpush2.bf16.msra.mxu0 %v1090
    %1508 = vmatprep.subr.bf16.mxu0 %v1087
    %1509 = vmatpush2.bf16.msra.mxu0 %v1086
    %1510 = vmatprep.subr.bf16.mxu0 %v1083
    %1511 = vmatpush2.bf16.msra.mxu0 %v1082
    %1512 = vmatprep.subr.bf16.mxu0 %v1079
    %1513 = vmatpush2.bf16.msra.mxu0 %v1078
    %1514 = vmatprep.subr.bf16.mxu0 %v1075
    %1515 = vmatpush2.bf16.msra.mxu0 %v1074
    %1516 = vmatprep.subr.bf16.mxu0 %v1071
    %1517 = vmatpush2.bf16.msra.mxu0 %v1070
    %1518 = vmatprep.mubr.bf16.mxu0 %v353
    %1519 = vmatmul.mubr.bf16.gmra.mxu0 %v352
    %v1520 = vpop.f32.mrf.mxu0
    %v1521 = vadd.f32 %v324, %v1520
    %v1522 = vpop.f32.mrf.mxu0
    %v1523 = vadd.f32 %v328, %v1522
    %v1524 = vpop.f32.mrf.mxu0
    %v1525 = vpop.f32.mrf.mxu0
    %1526 = vdwg.mxu0
    %1527 = vmatprep.subr.bf16.mxu0 %v1131
    %1528 = vmatpush1.bf16.msra.mxu0 %v1130
    %1529 = vmatprep.subr.bf16.mxu0 %v1127
    %1530 = vmatpush1.bf16.msra.mxu0 %v1126
    %1531 = vmatprep.subr.bf16.mxu0 %v1123
    %1532 = vmatpush1.bf16.msra.mxu0 %v1122
    %1533 = vmatprep.subr.bf16.mxu0 %v1119
    %1534 = vmatpush1.bf16.msra.mxu0 %v1118
    %1535 = vmatprep.subr.bf16.mxu0 %v1115
    %1536 = vmatpush1.bf16.msra.mxu0 %v1114
    %1537 = vmatprep.subr.bf16.mxu0 %v1111
    %1538 = vmatpush1.bf16.msra.mxu0 %v1110
    %1539 = vmatprep.subr.bf16.mxu0 %v1107
    %1540 = vmatpush1.bf16.msra.mxu0 %v1106
    %1541 = vmatprep.subr.bf16.mxu0 %v1103
    %1542 = vmatpush1.bf16.msra.mxu0 %v1102
    %1543 = vmatprep.subr.bf16.mxu0 %v1163
    %1544 = vmatpush2.bf16.msra.mxu0 %v1162
    %1545 = vmatprep.subr.bf16.mxu0 %v1159
    %1546 = vmatpush2.bf16.msra.mxu0 %v1158
    %1547 = vmatprep.subr.bf16.mxu0 %v1155
    %1548 = vmatpush2.bf16.msra.mxu0 %v1154
    %1549 = vmatprep.subr.bf16.mxu0 %v1151
    %1550 = vmatpush2.bf16.msra.mxu0 %v1150
    %1551 = vmatprep.subr.bf16.mxu0 %v1147
    %1552 = vmatpush2.bf16.msra.mxu0 %v1146
    %1553 = vmatprep.subr.bf16.mxu0 %v1143
    %1554 = vmatpush2.bf16.msra.mxu0 %v1142
    %1555 = vmatprep.subr.bf16.mxu0 %v1139
    %1556 = vmatpush2.bf16.msra.mxu0 %v1138
    %1557 = vmatprep.subr.bf16.mxu0 %v1135
    %1558 = vmatpush2.bf16.msra.mxu0 %v1134
    %1559 = vmatprep.mubr.bf16.mxu0 %v355
    %1560 = vmatmul.mubr.bf16.gmra.mxu0 %v354
    %v1561 = vpop.f32.mrf.mxu0
    %v1562 = vadd.f32 %v1521, %v1561
    %v1563 = vpop.f32.mrf.mxu0
    %v1564 = vadd.f32 %v1523, %v1563
    %v1565 = vpop.f32.mrf.mxu0
    %v1566 = vpop.f32.mrf.mxu0
    %1567 = vdwg.mxu0
    %1568 = vmatprep.subr.bf16.mxu0 %v1195
    %1569 = vmatpush1.bf16.msra.mxu0 %v1194
    %1570 = vmatprep.subr.bf16.mxu0 %v1191
    %1571 = vmatpush1.bf16.msra.mxu0 %v1190
    %1572 = vmatprep.subr.bf16.mxu0 %v1187
    %1573 = vmatpush1.bf16.msra.mxu0 %v1186
    %1574 = vmatprep.subr.bf16.mxu0 %v1183
    %1575 = vmatpush1.bf16.msra.mxu0 %v1182
    %1576 = vmatprep.subr.bf16.mxu0 %v1179
    %1577 = vmatpush1.bf16.msra.mxu0 %v1178
    %1578 = vmatprep.subr.bf16.mxu0 %v1175
    %1579 = vmatpush1.bf16.msra.mxu0 %v1174
    %1580 = vmatprep.subr.bf16.mxu0 %v1171
    %1581 = vmatpush1.bf16.msra.mxu0 %v1170
    %1582 = vmatprep.subr.bf16.mxu0 %v1167
    %1583 = vmatpush1.bf16.msra.mxu0 %v1166
    %1584 = vmatprep.subr.bf16.mxu0 %v1227
    %1585 = vmatpush2.bf16.msra.mxu0 %v1226
    %1586 = vmatprep.subr.bf16.mxu0 %v1223
    %1587 = vmatpush2.bf16.msra.mxu0 %v1222
    %1588 = vmatprep.subr.bf16.mxu0 %v1219
    %1589 = vmatpush2.bf16.msra.mxu0 %v1218
    %1590 = vmatprep.subr.bf16.mxu0 %v1215
    %1591 = vmatpush2.bf16.msra.mxu0 %v1214
    %1592 = vmatprep.subr.bf16.mxu0 %v1211
    %1593 = vmatpush2.bf16.msra.mxu0 %v1210
    %1594 = vmatprep.subr.bf16.mxu0 %v1207
    %1595 = vmatpush2.bf16.msra.mxu0 %v1206
    %1596 = vmatprep.subr.bf16.mxu0 %v1203
    %1597 = vmatpush2.bf16.msra.mxu0 %v1202
    %1598 = vmatprep.subr.bf16.mxu0 %v1199
    %1599 = vmatpush2.bf16.msra.mxu0 %v1198
    %1600 = vmatprep.mubr.bf16.mxu0 %v357
    %1601 = vmatmul.mubr.bf16.gmra.mxu0 %v356
    %v1602 = vpop.f32.mrf.mxu0
    %v1603 = vadd.f32 %v1562, %v1602
    %v1604 = vpop.f32.mrf.mxu0
    %v1605 = vadd.f32 %v1564, %v1604
    %v1606 = vpop.f32.mrf.mxu0
    %v1607 = vpop.f32.mrf.mxu0
    %1608 = vdwg.mxu0
    %1609 = vmatprep.subr.bf16.mxu0 %v1259
    %1610 = vmatpush1.bf16.msra.mxu0 %v1258
    %1611 = vmatprep.subr.bf16.mxu0 %v1255
    %1612 = vmatpush1.bf16.msra.mxu0 %v1254
    %1613 = vmatprep.subr.bf16.mxu0 %v1251
    %1614 = vmatpush1.bf16.msra.mxu0 %v1250
    %1615 = vmatprep.subr.bf16.mxu0 %v1247
    %1616 = vmatpush1.bf16.msra.mxu0 %v1246
    %1617 = vmatprep.subr.bf16.mxu0 %v1243
    %1618 = vmatpush1.bf16.msra.mxu0 %v1242
    %1619 = vmatprep.subr.bf16.mxu0 %v1239
    %1620 = vmatpush1.bf16.msra.mxu0 %v1238
    %1621 = vmatprep.subr.bf16.mxu0 %v1235
    %1622 = vmatpush1.bf16.msra.mxu0 %v1234
    %1623 = vmatprep.subr.bf16.mxu0 %v1231
    %1624 = vmatpush1.bf16.msra.mxu0 %v1230
    %1625 = vmatprep.subr.bf16.mxu0 0
    %1626 = vmatpush2.bf16.msra.mxu0 0
    %1627 = vmatprep.subr.bf16.mxu0 0
    %1628 = vmatpush2.bf16.msra.mxu0 0
    %1629 = vmatprep.subr.bf16.mxu0 0
    %1630 = vmatpush2.bf16.msra.mxu0 0
    %1631 = vmatprep.subr.bf16.mxu0 0
    %1632 = vmatpush2.bf16.msra.mxu0 0
    %1633 = vmatprep.subr.bf16.mxu0 0
    %1634 = vmatpush2.bf16.msra.mxu0 0
    %1635 = vmatprep.subr.bf16.mxu0 0
    %1636 = vmatpush2.bf16.msra.mxu0 0
    %1637 = vmatprep.subr.bf16.mxu0 0
    %1638 = vmatpush2.bf16.msra.mxu0 0
    %1639 = vmatprep.subr.bf16.mxu0 0
    %1640 = vmatpush2.bf16.msra.mxu0 0
    %1641 = vmatprep.mubr.bf16.mxu0 0
    %1642 = vmatmul.mubr.bf16.gmra.mxu0 %v358
    %v1643 = vpop.f32.mrf.mxu0
    %v1644 = vadd.f32 %v1603, %v1643
    %v1645 = vpop.f32.mrf.mxu0
    %v1646 = vadd.f32 %v1605, %v1645
    %v1647 = vpop.f32.mrf.mxu0
    %v1648 = vpop.f32.mrf.mxu0
    %1649 = vdwg.mxu0
    %1650 = vmatprep.subr.bf16.mxu0 %v1069
    %1651 = vmatpush1.bf16.msra.mxu0 %v1068
    %1652 = vmatprep.subr.bf16.mxu0 %v1065
    %1653 = vmatpush1.bf16.msra.mxu0 %v1064
    %1654 = vmatprep.subr.bf16.mxu0 %v1061
    %1655 = vmatpush1.bf16.msra.mxu0 %v1060
    %1656 = vmatprep.subr.bf16.mxu0 %v1057
    %1657 = vmatpush1.bf16.msra.mxu0 %v1056
    %1658 = vmatprep.subr.bf16.mxu0 %v1053
    %1659 = vmatpush1.bf16.msra.mxu0 %v1052
    %1660 = vmatprep.subr.bf16.mxu0 %v1049
    %1661 = vmatpush1.bf16.msra.mxu0 %v1048
    %1662 = vmatprep.subr.bf16.mxu0 %v1045
    %1663 = vmatpush1.bf16.msra.mxu0 %v1044
    %1664 = vmatprep.subr.bf16.mxu0 %v1041
    %1665 = vmatpush1.bf16.msra.mxu0 %v1040
    %1666 = vmatprep.subr.bf16.mxu0 %v1101
    %1667 = vmatpush2.bf16.msra.mxu0 %v1100
    %1668 = vmatprep.subr.bf16.mxu0 %v1097
    %1669 = vmatpush2.bf16.msra.mxu0 %v1096
    %1670 = vmatprep.subr.bf16.mxu0 %v1093
    %1671 = vmatpush2.bf16.msra.mxu0 %v1092
    %1672 = vmatprep.subr.bf16.mxu0 %v1089
    %1673 = vmatpush2.bf16.msra.mxu0 %v1088
    %1674 = vmatprep.subr.bf16.mxu0 %v1085
    %1675 = vmatpush2.bf16.msra.mxu0 %v1084
    %1676 = vmatprep.subr.bf16.mxu0 %v1081
    %1677 = vmatpush2.bf16.msra.mxu0 %v1080
    %1678 = vmatprep.subr.bf16.mxu0 %v1077
    %1679 = vmatpush2.bf16.msra.mxu0 %v1076
    %1680 = vmatprep.subr.bf16.mxu0 %v1073
    %1681 = vmatpush2.bf16.msra.mxu0 %v1072
    %1682 = vmatprep.mubr.bf16.mxu0 %v353
    %1683 = vmatmul.mubr.bf16.gmra.mxu0 %v352
    %v1684 = vpop.f32.mrf.mxu0
    %v1685 = vadd.f32 %v332, %v1684
    %v1686 = vpop.f32.mrf.mxu0
    %v1687 = vadd.f32 %v336, %v1686
    %v1688 = vpop.f32.mrf.mxu0
    %v1689 = vpop.f32.mrf.mxu0
    %1690 = vdwg.mxu0
    %1691 = vmatprep.subr.bf16.mxu0 %v1133
    %1692 = vmatpush1.bf16.msra.mxu0 %v1132
    %1693 = vmatprep.subr.bf16.mxu0 %v1129
    %1694 = vmatpush1.bf16.msra.mxu0 %v1128
    %1695 = vmatprep.subr.bf16.mxu0 %v1125
    %1696 = vmatpush1.bf16.msra.mxu0 %v1124
    %1697 = vmatprep.subr.bf16.mxu0 %v1121
    %1698 = vmatpush1.bf16.msra.mxu0 %v1120
    %1699 = vmatprep.subr.bf16.mxu0 %v1117
    %1700 = vmatpush1.bf16.msra.mxu0 %v1116
    %1701 = vmatprep.subr.bf16.mxu0 %v1113
    %1702 = vmatpush1.bf16.msra.mxu0 %v1112
    %1703 = vmatprep.subr.bf16.mxu0 %v1109
    %1704 = vmatpush1.bf16.msra.mxu0 %v1108
    %1705 = vmatprep.subr.bf16.mxu0 %v1105
    %1706 = vmatpush1.bf16.msra.mxu0 %v1104
    %1707 = vmatprep.subr.bf16.mxu0 %v1165
    %1708 = vmatpush2.bf16.msra.mxu0 %v1164
    %1709 = vmatprep.subr.bf16.mxu0 %v1161
    %1710 = vmatpush2.bf16.msra.mxu0 %v1160
    %1711 = vmatprep.subr.bf16.mxu0 %v1157
    %1712 = vmatpush2.bf16.msra.mxu0 %v1156
    %1713 = vmatprep.subr.bf16.mxu0 %v1153
    %1714 = vmatpush2.bf16.msra.mxu0 %v1152
    %1715 = vmatprep.subr.bf16.mxu0 %v1149
    %1716 = vmatpush2.bf16.msra.mxu0 %v1148
    %1717 = vmatprep.subr.bf16.mxu0 %v1145
    %1718 = vmatpush2.bf16.msra.mxu0 %v1144
    %1719 = vmatprep.subr.bf16.mxu0 %v1141
    %1720 = vmatpush2.bf16.msra.mxu0 %v1140
    %1721 = vmatprep.subr.bf16.mxu0 %v1137
    %1722 = vmatpush2.bf16.msra.mxu0 %v1136
    %1723 = vmatprep.mubr.bf16.mxu0 %v355
    %1724 = vmatmul.mubr.bf16.gmra.mxu0 %v354
    %v1725 = vpop.f32.mrf.mxu0
    %v1726 = vadd.f32 %v1685, %v1725
    %v1727 = vpop.f32.mrf.mxu0
    %v1728 = vadd.f32 %v1687, %v1727
    %v1729 = vpop.f32.mrf.mxu0
    %v1730 = vpop.f32.mrf.mxu0
    %1731 = vdwg.mxu0
    %1732 = vmatprep.subr.bf16.mxu0 %v1197
    %1733 = vmatpush1.bf16.msra.mxu0 %v1196
    %1734 = vmatprep.subr.bf16.mxu0 %v1193
    %1735 = vmatpush1.bf16.msra.mxu0 %v1192
    %1736 = vmatprep.subr.bf16.mxu0 %v1189
    %1737 = vmatpush1.bf16.msra.mxu0 %v1188
    %1738 = vmatprep.subr.bf16.mxu0 %v1185
    %1739 = vmatpush1.bf16.msra.mxu0 %v1184
    %1740 = vmatprep.subr.bf16.mxu0 %v1181
    %1741 = vmatpush1.bf16.msra.mxu0 %v1180
    %1742 = vmatprep.subr.bf16.mxu0 %v1177
    %1743 = vmatpush1.bf16.msra.mxu0 %v1176
    %1744 = vmatprep.subr.bf16.mxu0 %v1173
    %1745 = vmatpush1.bf16.msra.mxu0 %v1172
    %1746 = vmatprep.subr.bf16.mxu0 %v1169
    %1747 = vmatpush1.bf16.msra.mxu0 %v1168
    %1748 = vmatprep.subr.bf16.mxu0 %v1229
    %1749 = vmatpush2.bf16.msra.mxu0 %v1228
    %1750 = vmatprep.subr.bf16.mxu0 %v1225
    %1751 = vmatpush2.bf16.msra.mxu0 %v1224
    %1752 = vmatprep.subr.bf16.mxu0 %v1221
    %1753 = vmatpush2.bf16.msra.mxu0 %v1220
    %1754 = vmatprep.subr.bf16.mxu0 %v1217
    %1755 = vmatpush2.bf16.msra.mxu0 %v1216
    %1756 = vmatprep.subr.bf16.mxu0 %v1213
    %1757 = vmatpush2.bf16.msra.mxu0 %v1212
    %1758 = vmatprep.subr.bf16.mxu0 %v1209
    %1759 = vmatpush2.bf16.msra.mxu0 %v1208
    %1760 = vmatprep.subr.bf16.mxu0 %v1205
    %1761 = vmatpush2.bf16.msra.mxu0 %v1204
    %1762 = vmatprep.subr.bf16.mxu0 %v1201
    %1763 = vmatpush2.bf16.msra.mxu0 %v1200
    %1764 = vmatprep.mubr.bf16.mxu0 %v357
    %1765 = vmatmul.mubr.bf16.gmra.mxu0 %v356
    %v1766 = vpop.f32.mrf.mxu0
    %v1767 = vadd.f32 %v1726, %v1766
    %v1768 = vpop.f32.mrf.mxu0
    %v1769 = vadd.f32 %v1728, %v1768
    %v1770 = vpop.f32.mrf.mxu0
    %v1771 = vpop.f32.mrf.mxu0
    %1772 = vdwg.mxu0
    %1773 = vmatprep.subr.bf16.mxu0 %v1261
    %1774 = vmatpush1.bf16.msra.mxu0 %v1260
    %1775 = vmatprep.subr.bf16.mxu0 %v1257
    %1776 = vmatpush1.bf16.msra.mxu0 %v1256
    %1777 = vmatprep.subr.bf16.mxu0 %v1253
    %1778 = vmatpush1.bf16.msra.mxu0 %v1252
    %1779 = vmatprep.subr.bf16.mxu0 %v1249
    %1780 = vmatpush1.bf16.msra.mxu0 %v1248
    %1781 = vmatprep.subr.bf16.mxu0 %v1245
    %1782 = vmatpush1.bf16.msra.mxu0 %v1244
    %1783 = vmatprep.subr.bf16.mxu0 %v1241
    %1784 = vmatpush1.bf16.msra.mxu0 %v1240
    %1785 = vmatprep.subr.bf16.mxu0 %v1237
    %1786 = vmatpush1.bf16.msra.mxu0 %v1236
    %1787 = vmatprep.subr.bf16.mxu0 %v1233
    %1788 = vmatpush1.bf16.msra.mxu0 %v1232
    %1789 = vmatprep.subr.bf16.mxu0 0
    %1790 = vmatpush2.bf16.msra.mxu0 0
    %1791 = vmatprep.subr.bf16.mxu0 0
    %1792 = vmatpush2.bf16.msra.mxu0 0
    %1793 = vmatprep.subr.bf16.mxu0 0
    %1794 = vmatpush2.bf16.msra.mxu0 0
    %1795 = vmatprep.subr.bf16.mxu0 0
    %1796 = vmatpush2.bf16.msra.mxu0 0
    %1797 = vmatprep.subr.bf16.mxu0 0
    %1798 = vmatpush2.bf16.msra.mxu0 0
    %1799 = vmatprep.subr.bf16.mxu0 0
    %1800 = vmatpush2.bf16.msra.mxu0 0
    %1801 = vmatprep.subr.bf16.mxu0 0
    %1802 = vmatpush2.bf16.msra.mxu0 0
    %1803 = vmatprep.subr.bf16.mxu0 0
    %1804 = vmatpush2.bf16.msra.mxu0 0
    %1805 = vmatprep.mubr.bf16.mxu0 0
    %1806 = vmatmul.mubr.bf16.gmra.mxu0 %v358
    %v1807 = vpop.f32.mrf.mxu0
    %v1808 = vadd.f32 %v1767, %v1807
    %v1809 = vpop.f32.mrf.mxu0
    %v1810 = vadd.f32 %v1769, %v1809
    %v1811 = vpop.f32.mrf.mxu0
    %v1812 = vpop.f32.mrf.mxu0
    %1813 = vdwg.mxu0
    %v1814 = vmax.f32 %v1644, 0.0
    %v1815 = vmax.f32 %v1646, 0.0
    %v1816 = vmax.f32 %v1808, 0.0
    %v1817 = vmax.f32 %v1810, 0.0
    %v1818 = vpack.c.bf16 %v1814, %v1814
    %v1819 = vpack.c.bf16 %v1815, %v1815
    %v1820 = vpack.c.bf16 %v1816, %v1816
    %v1821 = vpack.c.bf16 %v1817, %v1817
    %v1822 = vld [vmem:[#allocation4] sm:$0xff]
    %v1823 = vld [vmem:[#allocation4 + $0x8] sm:$0xff]
    %v1824 = vld [vmem:[#allocation4 + $0x10] sm:$0xff]
    %v1825 = vld [vmem:[#allocation4 + $0x18] sm:$0xff]
    %v1826 = vld [vmem:[#allocation4 + $0x20] sm:$0xff]
    %v1827 = vld [vmem:[#allocation4 + $0x28] sm:$0xff]
    %v1828 = vld [vmem:[#allocation4 + $0x30] sm:$0xff]
    %v1829 = vld [vmem:[#allocation4 + $0x38] sm:$0xff]
    %v1830 = vld [vmem:[#allocation4 + $0x40] sm:$0xff]
    %v1831 = vld [vmem:[#allocation4 + $0x48] sm:$0xff]
    %v1832 = vld [vmem:[#allocation4 + $0x50] sm:$0xff]
    %v1833 = vld [vmem:[#allocation4 + $0x58] sm:$0xff]
    %v1834 = vld [vmem:[#allocation4 + $0x60] sm:$0xff]
    %v1835 = vld [vmem:[#allocation4 + $0x68] sm:$0xff]
    %v1836 = vld [vmem:[#allocation4 + $0x70] sm:$0xff]
    %v1837 = vld [vmem:[#allocation4 + $0x78] sm:$0xff]
    %v1838 = vld [vmem:[#allocation4 + $0x80] sm:$0xff]
    %v1839 = vld [vmem:[#allocation4 + $0x88] sm:$0xff]
    %v1840 = vld [vmem:[#allocation4 + $0x90] sm:$0xff]
    %v1841 = vld [vmem:[#allocation4 + $0x98] sm:$0xff]
    %v1842 = vld [vmem:[#allocation4 + $0xa0] sm:$0xff]
    %v1843 = vld [vmem:[#allocation4 + $0xa8] sm:$0xff]
    %v1844 = vld [vmem:[#allocation4 + $0xb0] sm:$0xff]
    %v1845 = vld [vmem:[#allocation4 + $0xb8] sm:$0xff]
    %v1846 = vld [vmem:[#allocation4 + $0xc0] sm:$0xff]
    %v1847 = vld [vmem:[#allocation4 + $0xc8] sm:$0xff]
    %v1848 = vld [vmem:[#allocation4 + $0xd0] sm:$0xff]
    %v1849 = vld [vmem:[#allocation4 + $0xd8] sm:$0xff]
    %v1850 = vld [vmem:[#allocation4 + $0xe0] sm:$0xff]
    %v1851 = vld [vmem:[#allocation4 + $0xe8] sm:$0xff]
    %v1852 = vld [vmem:[#allocation4 + $0xf0] sm:$0xff]
    %v1853 = vld [vmem:[#allocation4 + $0xf8] sm:$0xff]
    %v1854 = vld [vmem:[#allocation4 + $0x100] sm:$0xff]
    %v1855 = vld [vmem:[#allocation4 + $0x108] sm:$0xff]
    %v1856 = vld [vmem:[#allocation4 + $0x110] sm:$0xff]
    %v1857 = vld [vmem:[#allocation4 + $0x118] sm:$0xff]
    %v1858 = vld [vmem:[#allocation4 + $0x120] sm:$0xff]
    %v1859 = vld [vmem:[#allocation4 + $0x128] sm:$0xff]
    %v1860 = vld [vmem:[#allocation4 + $0x130] sm:$0xff]
    %v1861 = vld [vmem:[#allocation4 + $0x138] sm:$0xff]
    %v1862 = vld [vmem:[#allocation4 + $0x140] sm:$0xff]
    %v1863 = vld [vmem:[#allocation4 + $0x148] sm:$0xff]
    %v1864 = vld [vmem:[#allocation4 + $0x150] sm:$0xff]
    %v1865 = vld [vmem:[#allocation4 + $0x158] sm:$0xff]
    %v1866 = vld [vmem:[#allocation4 + $0x160] sm:$0xff]
    %v1867 = vld [vmem:[#allocation4 + $0x168] sm:$0xff]
    %v1868 = vld [vmem:[#allocation4 + $0x170] sm:$0xff]
    %v1869 = vld [vmem:[#allocation4 + $0x178] sm:$0xff]
    %v1870 = vld [vmem:[#allocation4 + $0x180] sm:$0xff]
    %v1871 = vld [vmem:[#allocation4 + $0x188] sm:$0xff]
    %v1872 = vld [vmem:[#allocation4 + $0x190] sm:$0xff]
    %v1873 = vld [vmem:[#allocation4 + $0x198] sm:$0xff]
    %v1874 = vld [vmem:[#allocation4 + $0x1a0] sm:$0xff]
    %v1875 = vld [vmem:[#allocation4 + $0x1a8] sm:$0xff]
    %v1876 = vld [vmem:[#allocation4 + $0x1b0] sm:$0xff]
    %v1877 = vld [vmem:[#allocation4 + $0x1b8] sm:$0xff]
    %v1878 = vld [vmem:[#allocation4 + $0x1c0] sm:$0xff]
    %v1879 = vld [vmem:[#allocation4 + $0x1c8] sm:$0xff]
    %v1880 = vld [vmem:[#allocation4 + $0x1d0] sm:$0xff]
    %v1881 = vld [vmem:[#allocation4 + $0x1d8] sm:$0xff]
    %v1882 = vld [vmem:[#allocation4 + $0x1e0] sm:$0xff]
    %v1883 = vld [vmem:[#allocation4 + $0x1e8] sm:$0xff]
    %v1884 = vld [vmem:[#allocation4 + $0x1f0] sm:$0xff]
    %v1885 = vld [vmem:[#allocation4 + $0x1f8] sm:$0xff]
    %v1886 = vld [vmem:[#allocation4 + $0x200] sm:$0xff]
    %v1887 = vld [vmem:[#allocation4 + $0x208] sm:$0xff]
    %v1888 = vld [vmem:[#allocation4 + $0x210] sm:$0xff]
    %v1889 = vld [vmem:[#allocation4 + $0x218] sm:$0xff]
    %v1890 = vld [vmem:[#allocation4 + $0x220] sm:$0xff]
    %v1891 = vld [vmem:[#allocation4 + $0x228] sm:$0xff]
    %v1892 = vld [vmem:[#allocation4 + $0x230] sm:$0xff]
    %v1893 = vld [vmem:[#allocation4 + $0x238] sm:$0xff]
    %v1894 = vld [vmem:[#allocation4 + $0x240] sm:$0xff]
    %v1895 = vld [vmem:[#allocation4 + $0x248] sm:$0xff]
    %v1896 = vld [vmem:[#allocation4 + $0x250] sm:$0xff]
    %v1897 = vld [vmem:[#allocation4 + $0x258] sm:$0xff]
    %v1898 = vld [vmem:[#allocation4 + $0x260] sm:$0xff]
    %v1899 = vld [vmem:[#allocation4 + $0x268] sm:$0xff]
    %v1900 = vld [vmem:[#allocation4 + $0x270] sm:$0xff]
    %v1901 = vld [vmem:[#allocation4 + $0x278] sm:$0xff]
    %v1902 = vld [vmem:[#allocation4 + $0x280] sm:$0xff]
    %v1903 = vld [vmem:[#allocation4 + $0x288] sm:$0xff]
    %v1904 = vld [vmem:[#allocation4 + $0x290] sm:$0xff]
    %v1905 = vld [vmem:[#allocation4 + $0x298] sm:$0xff]
    %v1906 = vld [vmem:[#allocation4 + $0x2a0] sm:$0xff]
    %v1907 = vld [vmem:[#allocation4 + $0x2a8] sm:$0xff]
    %v1908 = vld [vmem:[#allocation4 + $0x2b0] sm:$0xff]
    %v1909 = vld [vmem:[#allocation4 + $0x2b8] sm:$0xff]
    %v1910 = vld [vmem:[#allocation4 + $0x2c0] sm:$0xff]
    %v1911 = vld [vmem:[#allocation4 + $0x2c8] sm:$0xff]
    %v1912 = vld [vmem:[#allocation4 + $0x2d0] sm:$0xff]
    %v1913 = vld [vmem:[#allocation4 + $0x2d8] sm:$0xff]
    %v1914 = vld [vmem:[#allocation4 + $0x2e0] sm:$0xff]
    %v1915 = vld [vmem:[#allocation4 + $0x2e8] sm:$0xff]
    %v1916 = vld [vmem:[#allocation4 + $0x2f0] sm:$0xff]
    %v1917 = vld [vmem:[#allocation4 + $0x2f8] sm:$0xff]
    %v1918 = vld [vmem:[#allocation4 + $0x300] sm:$0xff]
    %v1919 = vld [vmem:[#allocation4 + $0x308] sm:$0xff]
    %v1920 = vld [vmem:[#allocation4 + $0x310] sm:$0xff]
    %v1921 = vld [vmem:[#allocation4 + $0x318] sm:$0xff]
    %v1922 = vld [vmem:[#allocation4 + $0x320] sm:$0xff]
    %v1923 = vld [vmem:[#allocation4 + $0x328] sm:$0xff]
    %v1924 = vld [vmem:[#allocation4 + $0x330] sm:$0xff]
    %v1925 = vld [vmem:[#allocation4 + $0x338] sm:$0xff]
    %v1926 = vld [vmem:[#allocation4 + $0x340] sm:$0xff]
    %v1927 = vld [vmem:[#allocation4 + $0x348] sm:$0xff]
    %v1928 = vld [vmem:[#allocation4 + $0x350] sm:$0xff]
    %v1929 = vld [vmem:[#allocation4 + $0x358] sm:$0xff]
    %v1930 = vld [vmem:[#allocation4 + $0x360] sm:$0xff]
    %v1931 = vld [vmem:[#allocation4 + $0x368] sm:$0xff]
    %v1932 = vld [vmem:[#allocation4 + $0x370] sm:$0xff]
    %v1933 = vld [vmem:[#allocation4 + $0x378] sm:$0xff]
    %v1934 = vld [vmem:[#allocation4 + $0x380] sm:$0xff]
    %v1935 = vld [vmem:[#allocation4 + $0x388] sm:$0xff]
    %v1936 = vld [vmem:[#allocation4 + $0x390] sm:$0xff]
    %v1937 = vld [vmem:[#allocation4 + $0x398] sm:$0xff]
    %v1938 = vld [vmem:[#allocation4 + $0x3a0] sm:$0xff]
    %v1939 = vld [vmem:[#allocation4 + $0x3a8] sm:$0xff]
    %v1940 = vld [vmem:[#allocation4 + $0x3b0] sm:$0xff]
    %v1941 = vld [vmem:[#allocation4 + $0x3b8] sm:$0xff]
    %v1942 = vld [vmem:[#allocation4 + $0x3c0] sm:$0xff]
    %v1943 = vld [vmem:[#allocation4 + $0x3c8] sm:$0xff]
    %v1944 = vld [vmem:[#allocation4 + $0x3d0] sm:$0xff]
    %v1945 = vld [vmem:[#allocation4 + $0x3d8] sm:$0xff]
    %v1946 = vld [vmem:[#allocation4 + $0x3e0] sm:$0xff]
    %v1947 = vld [vmem:[#allocation4 + $0x3e8] sm:$0xff]
    %v1948 = vld [vmem:[#allocation4 + $0x3f0] sm:$0xff]
    %v1949 = vld [vmem:[#allocation4 + $0x3f8] sm:$0xff]
    %v1950 = vld [vmem:[%s4] sm:$0xf]
    %v1952 = vlaneseq
    %v1953 = vshrl.u32 %v1952, 7
    %v1954 = vsub.s32 0, %v1953
    %v1955 = vrot.slane %v1950, %v1954
    %v1956 = vlaneseq
    %v1957 = vshrl.u32 %v1956, 7
    %v1958 = vsub.s32 1, %v1957
    %v1959 = vrot.slane %v1950, %v1958
    %v1960 = vlaneseq
    %v1961 = vshrl.u32 %v1960, 7
    %v1962 = vsub.s32 2, %v1961
    %v1963 = vrot.slane %v1950, %v1962
    %v1964 = vlaneseq
    %v1965 = vshrl.u32 %v1964, 7
    %v1966 = vsub.s32 3, %v1965
    %v1967 = vrot.slane %v1950, %v1966
    %v2100 = vunpack.c.l.b16 %v1822
    %v2101 = vunpack.c.h.b16 %v1822
    %v2102 = vunpack.c.l.b16 %v1823
    %v2103 = vunpack.c.h.b16 %v1823
    %v2104 = vunpack.c.l.b16 %v1824
    %v2105 = vunpack.c.h.b16 %v1824
    %v2106 = vunpack.c.l.b16 %v1825
    %v2107 = vunpack.c.h.b16 %v1825
    %v2108 = vunpack.c.l.b16 %v1826
    %v2109 = vunpack.c.h.b16 %v1826
    %v2110 = vunpack.c.l.b16 %v1827
    %v2111 = vunpack.c.h.b16 %v1827
    %v2112 = vunpack.c.l.b16 %v1828
    %v2113 = vunpack.c.h.b16 %v1828
    %v2114 = vunpack.c.l.b16 %v1829
    %v2115 = vunpack.c.h.b16 %v1829
    %v2116 = vunpack.c.l.b16 %v1830
    %v2117 = vunpack.c.h.b16 %v1830
    %v2118 = vunpack.c.l.b16 %v1831
    %v2119 = vunpack.c.h.b16 %v1831
    %v2120 = vunpack.c.l.b16 %v1832
    %v2121 = vunpack.c.h.b16 %v1832
    %v2122 = vunpack.c.l.b16 %v1833
    %v2123 = vunpack.c.h.b16 %v1833
    %v2124 = vunpack.c.l.b16 %v1834
    %v2125 = vunpack.c.h.b16 %v1834
    %v2126 = vunpack.c.l.b16 %v1835
    %v2127 = vunpack.c.h.b16 %v1835
    %v2128 = vunpack.c.l.b16 %v1836
    %v2129 = vunpack.c.h.b16 %v1836
    %v2130 = vunpack.c.l.b16 %v1837
    %v2131 = vunpack.c.h.b16 %v1837
    %v2132 = vunpack.c.l.b16 %v1838
    %v2133 = vunpack.c.h.b16 %v1838
    %v2134 = vunpack.c.l.b16 %v1839
    %v2135 = vunpack.c.h.b16 %v1839
    %v2136 = vunpack.c.l.b16 %v1840
    %v2137 = vunpack.c.h.b16 %v1840
    %v2138 = vunpack.c.l.b16 %v1841
    %v2139 = vunpack.c.h.b16 %v1841
    %v2140 = vunpack.c.l.b16 %v1842
    %v2141 = vunpack.c.h.b16 %v1842
    %v2142 = vunpack.c.l.b16 %v1843
    %v2143 = vunpack.c.h.b16 %v1843
    %v2144 = vunpack.c.l.b16 %v1844
    %v2145 = vunpack.c.h.b16 %v1844
    %v2146 = vunpack.c.l.b16 %v1845
    %v2147 = vunpack.c.h.b16 %v1845
    %v2148 = vunpack.c.l.b16 %v1846
    %v2149 = vunpack.c.h.b16 %v1846
    %v2150 = vunpack.c.l.b16 %v1847
    %v2151 = vunpack.c.h.b16 %v1847
    %v2152 = vunpack.c.l.b16 %v1848
    %v2153 = vunpack.c.h.b16 %v1848
    %v2154 = vunpack.c.l.b16 %v1849
    %v2155 = vunpack.c.h.b16 %v1849
    %v2156 = vunpack.c.l.b16 %v1850
    %v2157 = vunpack.c.h.b16 %v1850
    %v2158 = vunpack.c.l.b16 %v1851
    %v2159 = vunpack.c.h.b16 %v1851
    %v2160 = vunpack.c.l.b16 %v1852
    %v2161 = vunpack.c.h.b16 %v1852
    %v2162 = vunpack.c.l.b16 %v1853
    %v2163 = vunpack.c.h.b16 %v1853
    %v2164 = vunpack.c.l.b16 %v1854
    %v2165 = vunpack.c.h.b16 %v1854
    %v2166 = vunpack.c.l.b16 %v1855
    %v2167 = vunpack.c.h.b16 %v1855
    %v2168 = vunpack.c.l.b16 %v1856
    %v2169 = vunpack.c.h.b16 %v1856
    %v2170 = vunpack.c.l.b16 %v1857
    %v2171 = vunpack.c.h.b16 %v1857
    %v2172 = vunpack.c.l.b16 %v1858
    %v2173 = vunpack.c.h.b16 %v1858
    %v2174 = vunpack.c.l.b16 %v1859
    %v2175 = vunpack.c.h.b16 %v1859
    %v2176 = vunpack.c.l.b16 %v1860
    %v2177 = vunpack.c.h.b16 %v1860
    %v2178 = vunpack.c.l.b16 %v1861
    %v2179 = vunpack.c.h.b16 %v1861
    %v2180 = vunpack.c.l.b16 %v1862
    %v2181 = vunpack.c.h.b16 %v1862
    %v2182 = vunpack.c.l.b16 %v1863
    %v2183 = vunpack.c.h.b16 %v1863
    %v2184 = vunpack.c.l.b16 %v1864
    %v2185 = vunpack.c.h.b16 %v1864
    %v2186 = vunpack.c.l.b16 %v1865
    %v2187 = vunpack.c.h.b16 %v1865
    %v2188 = vunpack.c.l.b16 %v1866
    %v2189 = vunpack.c.h.b16 %v1866
    %v2190 = vunpack.c.l.b16 %v1867
    %v2191 = vunpack.c.h.b16 %v1867
    %v2192 = vunpack.c.l.b16 %v1868
    %v2193 = vunpack.c.h.b16 %v1868
    %v2194 = vunpack.c.l.b16 %v1869
    %v2195 = vunpack.c.h.b16 %v1869
    %v2196 = vunpack.c.l.b16 %v1870
    %v2197 = vunpack.c.h.b16 %v1870
    %v2198 = vunpack.c.l.b16 %v1871
    %v2199 = vunpack.c.h.b16 %v1871
    %v2200 = vunpack.c.l.b16 %v1872
    %v2201 = vunpack.c.h.b16 %v1872
    %v2202 = vunpack.c.l.b16 %v1873
    %v2203 = vunpack.c.h.b16 %v1873
    %v2204 = vunpack.c.l.b16 %v1874
    %v2205 = vunpack.c.h.b16 %v1874
    %v2206 = vunpack.c.l.b16 %v1875
    %v2207 = vunpack.c.h.b16 %v1875
    %v2208 = vunpack.c.l.b16 %v1876
    %v2209 = vunpack.c.h.b16 %v1876
    %v2210 = vunpack.c.l.b16 %v1877
    %v2211 = vunpack.c.h.b16 %v1877
    %v2212 = vunpack.c.l.b16 %v1878
    %v2213 = vunpack.c.h.b16 %v1878
    %v2214 = vunpack.c.l.b16 %v1879
    %v2215 = vunpack.c.h.b16 %v1879
    %v2216 = vunpack.c.l.b16 %v1880
    %v2217 = vunpack.c.h.b16 %v1880
    %v2218 = vunpack.c.l.b16 %v1881
    %v2219 = vunpack.c.h.b16 %v1881
    %v2220 = vunpack.c.l.b16 %v1882
    %v2221 = vunpack.c.h.b16 %v1882
    %v2222 = vunpack.c.l.b16 %v1883
    %v2223 = vunpack.c.h.b16 %v1883
    %v2224 = vunpack.c.l.b16 %v1884
    %v2225 = vunpack.c.h.b16 %v1884
    %v2226 = vunpack.c.l.b16 %v1885
    %v2227 = vunpack.c.h.b16 %v1885
    %v2228 = vunpack.c.l.b16 %v1886
    %v2229 = vunpack.c.h.b16 %v1886
    %v2230 = vunpack.c.l.b16 %v1887
    %v2231 = vunpack.c.h.b16 %v1887
    %v2232 = vunpack.c.l.b16 %v1888
    %v2233 = vunpack.c.h.b16 %v1888
    %v2234 = vunpack.c.l.b16 %v1889
    %v2235 = vunpack.c.h.b16 %v1889
    %v2236 = vunpack.c.l.b16 %v1890
    %v2237 = vunpack.c.h.b16 %v1890
    %v2238 = vunpack.c.l.b16 %v1891
    %v2239 = vunpack.c.h.b16 %v1891
    %v2240 = vunpack.c.l.b16 %v1892
    %v2241 = vunpack.c.h.b16 %v1892
    %v2242 = vunpack.c.l.b16 %v1893
    %v2243 = vunpack.c.h.b16 %v1893
    %v2244 = vunpack.c.l.b16 %v1894
    %v2245 = vunpack.c.h.b16 %v1894
    %v2246 = vunpack.c.l.b16 %v1895
    %v2247 = vunpack.c.h.b16 %v1895
    %v2248 = vunpack.c.l.b16 %v1896
    %v2249 = vunpack.c.h.b16 %v1896
    %v2250 = vunpack.c.l.b16 %v1897
    %v2251 = vunpack.c.h.b16 %v1897
    %v2252 = vunpack.c.l.b16 %v1898
    %v2253 = vunpack.c.h.b16 %v1898
    %v2254 = vunpack.c.l.b16 %v1899
    %v2255 = vunpack.c.h.b16 %v1899
    %v2256 = vunpack.c.l.b16 %v1900
    %v2257 = vunpack.c.h.b16 %v1900
    %v2258 = vunpack.c.l.b16 %v1901
    %v2259 = vunpack.c.h.b16 %v1901
    %v2260 = vunpack.c.l.b16 %v1902
    %v2261 = vunpack.c.h.b16 %v1902
    %v2262 = vunpack.c.l.b16 %v1903
    %v2263 = vunpack.c.h.b16 %v1903
    %v2264 = vunpack.c.l.b16 %v1904
    %v2265 = vunpack.c.h.b16 %v1904
    %v2266 = vunpack.c.l.b16 %v1905
    %v2267 = vunpack.c.h.b16 %v1905
    %v2268 = vunpack.c.l.b16 %v1906
    %v2269 = vunpack.c.h.b16 %v1906
    %v2270 = vunpack.c.l.b16 %v1907
    %v2271 = vunpack.c.h.b16 %v1907
    %v2272 = vunpack.c.l.b16 %v1908
    %v2273 = vunpack.c.h.b16 %v1908
    %v2274 = vunpack.c.l.b16 %v1909
    %v2275 = vunpack.c.h.b16 %v1909
    %v2276 = vunpack.c.l.b16 %v1910
    %v2277 = vunpack.c.h.b16 %v1910
    %v2278 = vunpack.c.l.b16 %v1911
    %v2279 = vunpack.c.h.b16 %v1911
    %v2280 = vunpack.c.l.b16 %v1912
    %v2281 = vunpack.c.h.b16 %v1912
    %v2282 = vunpack.c.l.b16 %v1913
    %v2283 = vunpack.c.h.b16 %v1913
    %v2284 = vunpack.c.l.b16 %v1914
    %v2285 = vunpack.c.h.b16 %v1914
    %v2286 = vunpack.c.l.b16 %v1915
    %v2287 = vunpack.c.h.b16 %v1915
    %v2288 = vunpack.c.l.b16 %v1916
    %v2289 = vunpack.c.h.b16 %v1916
    %v2290 = vunpack.c.l.b16 %v1917
    %v2291 = vunpack.c.h.b16 %v1917
    %v2292 = vunpack.c.l.b16 %v1918
    %v2293 = vunpack.c.h.b16 %v1918
    %v2294 = vunpack.c.l.b16 %v1919
    %v2295 = vunpack.c.h.b16 %v1919
    %v2296 = vunpack.c.l.b16 %v1920
    %v2297 = vunpack.c.h.b16 %v1920
    %v2298 = vunpack.c.l.b16 %v1921
    %v2299 = vunpack.c.h.b16 %v1921
    %v2300 = vunpack.c.l.b16 %v1922
    %v2301 = vunpack.c.h.b16 %v1922
    %v2302 = vunpack.c.l.b16 %v1923
    %v2303 = vunpack.c.h.b16 %v1923
    %v2304 = vunpack.c.l.b16 %v1924
    %v2305 = vunpack.c.h.b16 %v1924
    %v2306 = vunpack.c.l.b16 %v1925
    %v2307 = vunpack.c.h.b16 %v1925
    %v2308 = vunpack.c.l.b16 %v1926
    %v2309 = vunpack.c.h.b16 %v1926
    %v2310 = vunpack.c.l.b16 %v1927
    %v2311 = vunpack.c.h.b16 %v1927
    %v2312 = vunpack.c.l.b16 %v1928
    %v2313 = vunpack.c.h.b16 %v1928
    %v2314 = vunpack.c.l.b16 %v1929
    %v2315 = vunpack.c.h.b16 %v1929
    %v2316 = vunpack.c.l.b16 %v1930
    %v2317 = vunpack.c.h.b16 %v1930
    %v2318 = vunpack.c.l.b16 %v1931
    %v2319 = vunpack.c.h.b16 %v1931
    %v2320 = vunpack.c.l.b16 %v1932
    %v2321 = vunpack.c.h.b16 %v1932
    %v2322 = vunpack.c.l.b16 %v1933
    %v2323 = vunpack.c.h.b16 %v1933
    %v2324 = vunpack.c.l.b16 %v1934
    %v2325 = vunpack.c.h.b16 %v1934
    %v2326 = vunpack.c.l.b16 %v1935
    %v2327 = vunpack.c.h.b16 %v1935
    %v2328 = vunpack.c.l.b16 %v1936
    %v2329 = vunpack.c.h.b16 %v1936
    %v2330 = vunpack.c.l.b16 %v1937
    %v2331 = vunpack.c.h.b16 %v1937
    %v2332 = vunpack.c.l.b16 %v1938
    %v2333 = vunpack.c.h.b16 %v1938
    %v2334 = vunpack.c.l.b16 %v1939
    %v2335 = vunpack.c.h.b16 %v1939
    %v2336 = vunpack.c.l.b16 %v1940
    %v2337 = vunpack.c.h.b16 %v1940
    %v2338 = vunpack.c.l.b16 %v1941
    %v2339 = vunpack.c.h.b16 %v1941
    %v2340 = vunpack.c.l.b16 %v1942
    %v2341 = vunpack.c.h.b16 %v1942
    %v2342 = vunpack.c.l.b16 %v1943
    %v2343 = vunpack.c.h.b16 %v1943
    %v2344 = vunpack.c.l.b16 %v1944
    %v2345 = vunpack.c.h.b16 %v1944
    %v2346 = vunpack.c.l.b16 %v1945
    %v2347 = vunpack.c.h.b16 %v1945
    %v2348 = vunpack.c.l.b16 %v1946
    %v2349 = vunpack.c.h.b16 %v1946
    %v2350 = vunpack.c.l.b16 %v1947
    %v2351 = vunpack.c.h.b16 %v1947
    %v2352 = vunpack.c.l.b16 %v1948
    %v2353 = vunpack.c.h.b16 %v1948
    %v2354 = vunpack.c.l.b16 %v1949
    %v2355 = vunpack.c.h.b16 %v1949
    %v2356 = vpack.c.b16 %v2104, %v2100
    %v2357 = vpack.c.b16 %v2105, %v2101
    %v2358 = vpack.c.b16 %v2106, %v2102
    %v2359 = vpack.c.b16 %v2107, %v2103
    %v2360 = vpack.c.b16 %v2112, %v2108
    %v2361 = vpack.c.b16 %v2113, %v2109
    %v2362 = vpack.c.b16 %v2114, %v2110
    %v2363 = vpack.c.b16 %v2115, %v2111
    %v2364 = vpack.c.b16 %v2120, %v2116
    %v2365 = vpack.c.b16 %v2121, %v2117
    %v2366 = vpack.c.b16 %v2122, %v2118
    %v2367 = vpack.c.b16 %v2123, %v2119
    %v2368 = vpack.c.b16 %v2128, %v2124
    %v2369 = vpack.c.b16 %v2129, %v2125
    %v2370 = vpack.c.b16 %v2130, %v2126
    %v2371 = vpack.c.b16 %v2131, %v2127
    %v2372 = vpack.c.b16 %v2136, %v2132
    %v2373 = vpack.c.b16 %v2137, %v2133
    %v2374 = vpack.c.b16 %v2138, %v2134
    %v2375 = vpack.c.b16 %v2139, %v2135
    %v2376 = vpack.c.b16 %v2144, %v2140
    %v2377 = vpack.c.b16 %v2145, %v2141
    %v2378 = vpack.c.b16 %v2146, %v2142
    %v2379 = vpack.c.b16 %v2147, %v2143
    %v2380 = vpack.c.b16 %v2152, %v2148
    %v2381 = vpack.c.b16 %v2153, %v2149
    %v2382 = vpack.c.b16 %v2154, %v2150
    %v2383 = vpack.c.b16 %v2155, %v2151
    %v2384 = vpack.c.b16 %v2160, %v2156
    %v2385 = vpack.c.b16 %v2161, %v2157
    %v2386 = vpack.c.b16 %v2162, %v2158
    %v2387 = vpack.c.b16 %v2163, %v2159
    %v2388 = vpack.c.b16 %v2168, %v2164
    %v2389 = vpack.c.b16 %v2169, %v2165
    %v2390 = vpack.c.b16 %v2170, %v2166
    %v2391 = vpack.c.b16 %v2171, %v2167
    %v2392 = vpack.c.b16 %v2176, %v2172
    %v2393 = vpack.c.b16 %v2177, %v2173
    %v2394 = vpack.c.b16 %v2178, %v2174
    %v2395 = vpack.c.b16 %v2179, %v2175
    %v2396 = vpack.c.b16 %v2184, %v2180
    %v2397 = vpack.c.b16 %v2185, %v2181
    %v2398 = vpack.c.b16 %v2186, %v2182
    %v2399 = vpack.c.b16 %v2187, %v2183
    %v2400 = vpack.c.b16 %v2192, %v2188
    %v2401 = vpack.c.b16 %v2193, %v2189
    %v2402 = vpack.c.b16 %v2194, %v2190
    %v2403 = vpack.c.b16 %v2195, %v2191
    %v2404 = vpack.c.b16 %v2200, %v2196
    %v2405 = vpack.c.b16 %v2201, %v2197
    %v2406 = vpack.c.b16 %v2202, %v2198
    %v2407 = vpack.c.b16 %v2203, %v2199
    %v2408 = vpack.c.b16 %v2208, %v2204
    %v2409 = vpack.c.b16 %v2209, %v2205
    %v2410 = vpack.c.b16 %v2210, %v2206
    %v2411 = vpack.c.b16 %v2211, %v2207
    %v2412 = vpack.c.b16 %v2216, %v2212
    %v2413 = vpack.c.b16 %v2217, %v2213
    %v2414 = vpack.c.b16 %v2218, %v2214
    %v2415 = vpack.c.b16 %v2219, %v2215
    %v2416 = vpack.c.b16 %v2224, %v2220
    %v2417 = vpack.c.b16 %v2225, %v2221
    %v2418 = vpack.c.b16 %v2226, %v2222
    %v2419 = vpack.c.b16 %v2227, %v2223
    %v2420 = vpack.c.b16 %v2232, %v2228
    %v2421 = vpack.c.b16 %v2233, %v2229
    %v2422 = vpack.c.b16 %v2234, %v2230
    %v2423 = vpack.c.b16 %v2235, %v2231
    %v2424 = vpack.c.b16 %v2240, %v2236
    %v2425 = vpack.c.b16 %v2241, %v2237
    %v2426 = vpack.c.b16 %v2242, %v2238
    %v2427 = vpack.c.b16 %v2243, %v2239
    %v2428 = vpack.c.b16 %v2248, %v2244
    %v2429 = vpack.c.b16 %v2249, %v2245
    %v2430 = vpack.c.b16 %v2250, %v2246
    %v2431 = vpack.c.b16 %v2251, %v2247
    %v2432 = vpack.c.b16 %v2256, %v2252
    %v2433 = vpack.c.b16 %v2257, %v2253
    %v2434 = vpack.c.b16 %v2258, %v2254
    %v2435 = vpack.c.b16 %v2259, %v2255
    %v2436 = vpack.c.b16 %v2264, %v2260
    %v2437 = vpack.c.b16 %v2265, %v2261
    %v2438 = vpack.c.b16 %v2266, %v2262
    %v2439 = vpack.c.b16 %v2267, %v2263
    %v2440 = vpack.c.b16 %v2272, %v2268
    %v2441 = vpack.c.b16 %v2273, %v2269
    %v2442 = vpack.c.b16 %v2274, %v2270
    %v2443 = vpack.c.b16 %v2275, %v2271
    %v2444 = vpack.c.b16 %v2280, %v2276
    %v2445 = vpack.c.b16 %v2281, %v2277
    %v2446 = vpack.c.b16 %v2282, %v2278
    %v2447 = vpack.c.b16 %v2283, %v2279
    %v2448 = vpack.c.b16 %v2288, %v2284
    %v2449 = vpack.c.b16 %v2289, %v2285
    %v2450 = vpack.c.b16 %v2290, %v2286
    %v2451 = vpack.c.b16 %v2291, %v2287
    %v2452 = vpack.c.b16 %v2296, %v2292
    %v2453 = vpack.c.b16 %v2297, %v2293
    %v2454 = vpack.c.b16 %v2298, %v2294
    %v2455 = vpack.c.b16 %v2299, %v2295
    %v2456 = vpack.c.b16 %v2304, %v2300
    %v2457 = vpack.c.b16 %v2305, %v2301
    %v2458 = vpack.c.b16 %v2306, %v2302
    %v2459 = vpack.c.b16 %v2307, %v2303
    %v2460 = vpack.c.b16 %v2312, %v2308
    %v2461 = vpack.c.b16 %v2313, %v2309
    %v2462 = vpack.c.b16 %v2314, %v2310
    %v2463 = vpack.c.b16 %v2315, %v2311
    %v2464 = vpack.c.b16 %v2320, %v2316
    %v2465 = vpack.c.b16 %v2321, %v2317
    %v2466 = vpack.c.b16 %v2322, %v2318
    %v2467 = vpack.c.b16 %v2323, %v2319
    %v2468 = vpack.c.b16 %v2328, %v2324
    %v2469 = vpack.c.b16 %v2329, %v2325
    %v2470 = vpack.c.b16 %v2330, %v2326
    %v2471 = vpack.c.b16 %v2331, %v2327
    %v2472 = vpack.c.b16 %v2336, %v2332
    %v2473 = vpack.c.b16 %v2337, %v2333
    %v2474 = vpack.c.b16 %v2338, %v2334
    %v2475 = vpack.c.b16 %v2339, %v2335
    %v2476 = vpack.c.b16 %v2344, %v2340
    %v2477 = vpack.c.b16 %v2345, %v2341
    %v2478 = vpack.c.b16 %v2346, %v2342
    %v2479 = vpack.c.b16 %v2347, %v2343
    %v2480 = vpack.c.b16 %v2352, %v2348
    %v2481 = vpack.c.b16 %v2353, %v2349
    %v2482 = vpack.c.b16 %v2354, %v2350
    %v2483 = vpack.c.b16 %v2355, %v2351
    %2612 = vmatprep.subr.bf16.mxu0 %v2385
    %2613 = vmatpush1.bf16.msra.mxu0 %v2384
    %2614 = vmatprep.subr.bf16.mxu0 %v2381
    %2615 = vmatpush1.bf16.msra.mxu0 %v2380
    %2616 = vmatprep.subr.bf16.mxu0 %v2377
    %2617 = vmatpush1.bf16.msra.mxu0 %v2376
    %2618 = vmatprep.subr.bf16.mxu0 %v2373
    %2619 = vmatpush1.bf16.msra.mxu0 %v2372
    %2620 = vmatprep.subr.bf16.mxu0 %v2369
    %2621 = vmatpush1.bf16.msra.mxu0 %v2368
    %2622 = vmatprep.subr.bf16.mxu0 %v2365
    %2623 = vmatpush1.bf16.msra.mxu0 %v2364
    %2624 = vmatprep.subr.bf16.mxu0 %v2361
    %2625 = vmatpush1.bf16.msra.mxu0 %v2360
    %2626 = vmatprep.subr.bf16.mxu0 %v2357
    %2627 = vmatpush1.bf16.msra.mxu0 %v2356
    %2628 = vmatprep.subr.bf16.mxu0 %v2417
    %2629 = vmatpush2.bf16.msra.mxu0 %v2416
    %2630 = vmatprep.subr.bf16.mxu0 %v2413
    %2631 = vmatpush2.bf16.msra.mxu0 %v2412
    %2632 = vmatprep.subr.bf16.mxu0 %v2409
    %2633 = vmatpush2.bf16.msra.mxu0 %v2408
    %2634 = vmatprep.subr.bf16.mxu0 %v2405
    %2635 = vmatpush2.bf16.msra.mxu0 %v2404
    %2636 = vmatprep.subr.bf16.mxu0 %v2401
    %2637 = vmatpush2.bf16.msra.mxu0 %v2400
    %2638 = vmatprep.subr.bf16.mxu0 %v2397
    %2639 = vmatpush2.bf16.msra.mxu0 %v2396
    %2640 = vmatprep.subr.bf16.mxu0 %v2393
    %2641 = vmatpush2.bf16.msra.mxu0 %v2392
    %2642 = vmatprep.subr.bf16.mxu0 %v2389
    %2643 = vmatpush2.bf16.msra.mxu0 %v2388
    %2644 = vmatprep.mubr.bf16.mxu0 %v1819
    %2645 = vmatmul.mubr.bf16.gmra.mxu0 %v1818
    %v2646 = vpop.f32.mrf.mxu0
    %v2647 = vadd.f32 %v1955, %v2646
    %v2648 = vpop.f32.mrf.mxu0
    %v2649 = vadd.f32 %v1959, %v2648
    %v2650 = vpop.f32.mrf.mxu0
    %v2651 = vpop.f32.mrf.mxu0
    %2652 = vdwg.mxu0
    %2653 = vmatprep.subr.bf16.mxu0 %v2449
    %2654 = vmatpush1.bf16.msra.mxu0 %v2448
    %2655 = vmatprep.subr.bf16.mxu0 %v2445
    %2656 = vmatpush1.bf16.msra.mxu0 %v2444
    %2657 = vmatprep.subr.bf16.mxu0 %v2441
    %2658 = vmatpush1.bf16.msra.mxu0 %v2440
    %2659 = vmatprep.subr.bf16.mxu0 %v2437
    %2660 = vmatpush1.bf16.msra.mxu0 %v2436
    %2661 = vmatprep.subr.bf16.mxu0 %v2433
    %2662 = vmatpush1.bf16.msra.mxu0 %v2432
    %2663 = vmatprep.subr.bf16.mxu0 %v2429
    %2664 = vmatpush1.bf16.msra.mxu0 %v2428
    %2665 = vmatprep.subr.bf16.mxu0 %v2425
    %2666 = vmatpush1.bf16.msra.mxu0 %v2424
    %2667 = vmatprep.subr.bf16.mxu0 %v2421
    %2668 = vmatpush1.bf16.msra.mxu0 %v2420
    %2669 = vmatprep.subr.bf16.mxu0 %v2481
    %2670 = vmatpush2.bf16.msra.mxu0 %v2480
    %2671 = vmatprep.subr.bf16.mxu0 %v2477
    %2672 = vmatpush2.bf16.msra.mxu0 %v2476
    %2673 = vmatprep.subr.bf16.mxu0 %v2473
    %2674 = vmatpush2.bf16.msra.mxu0 %v2472
    %2675 = vmatprep.subr.bf16.mxu0 %v2469
    %2676 = vmatpush2.bf16.msra.mxu0 %v2468
    %2677 = vmatprep.subr.bf16.mxu0 %v2465
    %2678 = vmatpush2.bf16.msra.mxu0 %v2464
    %2679 = vmatprep.subr.bf16.mxu0 %v2461
    %2680 = vmatpush2.bf16.msra.mxu0 %v2460
    %2681 = vmatprep.subr.bf16.mxu0 %v2457
    %2682 = vmatpush2.bf16.msra.mxu0 %v2456
    %2683 = vmatprep.subr.bf16.mxu0 %v2453
    %2684 = vmatpush2.bf16.msra.mxu0 %v2452
    %2685 = vmatprep.mubr.bf16.mxu0 %v1821
    %2686 = vmatmul.mubr.bf16.gmra.mxu0 %v1820
    %v2687 = vpop.f32.mrf.mxu0
    %v2688 = vadd.f32 %v2647, %v2687
    %v2689 = vpop.f32.mrf.mxu0
    %v2690 = vadd.f32 %v2649, %v2689
    %v2691 = vpop.f32.mrf.mxu0
    %v2692 = vpop.f32.mrf.mxu0
    %2693 = vdwg.mxu0
    %2694 = vmatprep.subr.bf16.mxu0 %v2387
    %2695 = vmatpush1.bf16.msra.mxu0 %v2386
    %2696 = vmatprep.subr.bf16.mxu0 %v2383
    %2697 = vmatpush1.bf16.msra.mxu0 %v2382
    %2698 = vmatprep.subr.bf16.mxu0 %v2379
    %2699 = vmatpush1.bf16.msra.mxu0 %v2378
    %2700 = vmatprep.subr.bf16.mxu0 %v2375
    %2701 = vmatpush1.bf16.msra.mxu0 %v2374
    %2702 = vmatprep.subr.bf16.mxu0 %v2371
    %2703 = vmatpush1.bf16.msra.mxu0 %v2370
    %2704 = vmatprep.subr.bf16.mxu0 %v2367
    %2705 = vmatpush1.bf16.msra.mxu0 %v2366
    %2706 = vmatprep.subr.bf16.mxu0 %v2363
    %2707 = vmatpush1.bf16.msra.mxu0 %v2362
    %2708 = vmatprep.subr.bf16.mxu0 %v2359
    %2709 = vmatpush1.bf16.msra.mxu0 %v2358
    %2710 = vmatprep.subr.bf16.mxu0 %v2419
    %2711 = vmatpush2.bf16.msra.mxu0 %v2418
    %2712 = vmatprep.subr.bf16.mxu0 %v2415
    %2713 = vmatpush2.bf16.msra.mxu0 %v2414
    %2714 = vmatprep.subr.bf16.mxu0 %v2411
    %2715 = vmatpush2.bf16.msra.mxu0 %v2410
    %2716 = vmatprep.subr.bf16.mxu0 %v2407
    %2717 = vmatpush2.bf16.msra.mxu0 %v2406
    %2718 = vmatprep.subr.bf16.mxu0 %v2403
    %2719 = vmatpush2.bf16.msra.mxu0 %v2402
    %2720 = vmatprep.subr.bf16.mxu0 %v2399
    %2721 = vmatpush2.bf16.msra.mxu0 %v2398
    %2722 = vmatprep.subr.bf16.mxu0 %v2395
    %2723 = vmatpush2.bf16.msra.mxu0 %v2394
    %2724 = vmatprep.subr.bf16.mxu0 %v2391
    %2725 = vmatpush2.bf16.msra.mxu0 %v2390
    %2726 = vmatprep.mubr.bf16.mxu0 %v1819
    %2727 = vmatmul.mubr.bf16.gmra.mxu0 %v1818
    %v2728 = vpop.f32.mrf.mxu0
    %v2729 = vadd.f32 %v1963, %v2728
    %v2730 = vpop.f32.mrf.mxu0
    %v2731 = vadd.f32 %v1967, %v2730
    %v2732 = vpop.f32.mrf.mxu0
    %v2733 = vpop.f32.mrf.mxu0
    %2734 = vdwg.mxu0
    %2735 = vmatprep.subr.bf16.mxu0 %v2451
    %2736 = vmatpush1.bf16.msra.mxu0 %v2450
    %2737 = vmatprep.subr.bf16.mxu0 %v2447
    %2738 = vmatpush1.bf16.msra.mxu0 %v2446
    %2739 = vmatprep.subr.bf16.mxu0 %v2443
    %2740 = vmatpush1.bf16.msra.mxu0 %v2442
    %2741 = vmatprep.subr.bf16.mxu0 %v2439
    %2742 = vmatpush1.bf16.msra.mxu0 %v2438
    %2743 = vmatprep.subr.bf16.mxu0 %v2435
    %2744 = vmatpush1.bf16.msra.mxu0 %v2434
    %2745 = vmatprep.subr.bf16.mxu0 %v2431
    %2746 = vmatpush1.bf16.msra.mxu0 %v2430
    %2747 = vmatprep.subr.bf16.mxu0 %v2427
    %2748 = vmatpush1.bf16.msra.mxu0 %v2426
    %2749 = vmatprep.subr.bf16.mxu0 %v2423
    %2750 = vmatpush1.bf16.msra.mxu0 %v2422
    %2751 = vmatprep.subr.bf16.mxu0 %v2483
    %2752 = vmatpush2.bf16.msra.mxu0 %v2482
    %2753 = vmatprep.subr.bf16.mxu0 %v2479
    %2754 = vmatpush2.bf16.msra.mxu0 %v2478
    %2755 = vmatprep.subr.bf16.mxu0 %v2475
    %2756 = vmatpush2.bf16.msra.mxu0 %v2474
    %2757 = vmatprep.subr.bf16.mxu0 %v2471
    %2758 = vmatpush2.bf16.msra.mxu0 %v2470
    %2759 = vmatprep.subr.bf16.mxu0 %v2467
    %2760 = vmatpush2.bf16.msra.mxu0 %v2466
    %2761 = vmatprep.subr.bf16.mxu0 %v2463
    %2762 = vmatpush2.bf16.msra.mxu0 %v2462
    %2763 = vmatprep.subr.bf16.mxu0 %v2459
    %2764 = vmatpush2.bf16.msra.mxu0 %v2458
    %2765 = vmatprep.subr.bf16.mxu0 %v2455
    %2766 = vmatpush2.bf16.msra.mxu0 %v2454
    %2767 = vmatprep.mubr.bf16.mxu0 %v1821
    %2768 = vmatmul.mubr.bf16.gmra.mxu0 %v1820
    %v2769 = vpop.f32.mrf.mxu0
    %v2770 = vadd.f32 %v2729, %v2769
    %v2771 = vpop.f32.mrf.mxu0
    %v2772 = vadd.f32 %v2731, %v2771
    %v2773 = vpop.f32.mrf.mxu0
    %v2774 = vpop.f32.mrf.mxu0
    %2775 = vdwg.mxu0
    %v2776 = vmax.f32 %v2688, 0.0
    %v2777 = vmax.f32 %v2690, 0.0
    %v2778 = vmax.f32 %v2770, 0.0
    %v2779 = vmax.f32 %v2772, 0.0
    %v2780 = vpack.c.bf16 %v2776, %v2776
    %v2781 = vpack.c.bf16 %v2777, %v2777
    %v2782 = vpack.c.bf16 %v2778, %v2778
    %v2783 = vpack.c.bf16 %v2779, %v2779
    %v2784 = vld [vmem:[#allocation6] sm:$0xff]
    %v2785 = vld [vmem:[#allocation6 + $0x8] sm:$0xff]
    %v2786 = vld [vmem:[#allocation6 + $0x10] sm:$0xff]
    %v2787 = vld [vmem:[#allocation6 + $0x18] sm:$0xff]
    %v2788 = vld [vmem:[#allocation6 + $0x20] sm:$0xff]
    %v2789 = vld [vmem:[#allocation6 + $0x28] sm:$0xff]
    %v2790 = vld [vmem:[#allocation6 + $0x30] sm:$0xff]
    %v2791 = vld [vmem:[#allocation6 + $0x38] sm:$0xff]
    %v2792 = vld [vmem:[#allocation6 + $0x40] sm:$0xff]
    %v2793 = vld [vmem:[#allocation6 + $0x48] sm:$0xff]
    %v2794 = vld [vmem:[#allocation6 + $0x50] sm:$0xff]
    %v2795 = vld [vmem:[#allocation6 + $0x58] sm:$0xff]
    %v2796 = vld [vmem:[#allocation6 + $0x60] sm:$0xff]
    %v2797 = vld [vmem:[#allocation6 + $0x68] sm:$0xff]
    %v2798 = vld [vmem:[#allocation6 + $0x70] sm:$0xff]
    %v2799 = vld [vmem:[#allocation6 + $0x78] sm:$0xff]
    %v2800 = vld [vmem:[#allocation6 + $0x80] sm:$0xff]
    %v2801 = vld [vmem:[#allocation6 + $0x88] sm:$0xff]
    %v2802 = vld [vmem:[#allocation6 + $0x90] sm:$0xff]
    %v2803 = vld [vmem:[#allocation6 + $0x98] sm:$0xff]
    %v2804 = vld [vmem:[#allocation6 + $0xa0] sm:$0xff]
    %v2805 = vld [vmem:[#allocation6 + $0xa8] sm:$0xff]
    %v2806 = vld [vmem:[#allocation6 + $0xb0] sm:$0xff]
    %v2807 = vld [vmem:[#allocation6 + $0xb8] sm:$0xff]
    %v2808 = vld [vmem:[#allocation6 + $0xc0] sm:$0xff]
    %v2809 = vld [vmem:[#allocation6 + $0xc8] sm:$0xff]
    %v2810 = vld [vmem:[#allocation6 + $0xd0] sm:$0xff]
    %v2811 = vld [vmem:[#allocation6 + $0xd8] sm:$0xff]
    %v2812 = vld [vmem:[#allocation6 + $0xe0] sm:$0xff]
    %v2813 = vld [vmem:[#allocation6 + $0xe8] sm:$0xff]
    %v2814 = vld [vmem:[#allocation6 + $0xf0] sm:$0xff]
    %v2815 = vld [vmem:[#allocation6 + $0xf8] sm:$0xff]
    %v2816 = vld [vmem:[#allocation6 + $0x100] sm:$0xff]
    %v2817 = vld [vmem:[#allocation6 + $0x108] sm:$0xff]
    %v2818 = vld [vmem:[#allocation6 + $0x110] sm:$0xff]
    %v2819 = vld [vmem:[#allocation6 + $0x118] sm:$0xff]
    %v2820 = vld [vmem:[#allocation6 + $0x120] sm:$0xff]
    %v2821 = vld [vmem:[#allocation6 + $0x128] sm:$0xff]
    %v2822 = vld [vmem:[#allocation6 + $0x130] sm:$0xff]
    %v2823 = vld [vmem:[#allocation6 + $0x138] sm:$0xff]
    %v2824 = vld [vmem:[#allocation6 + $0x140] sm:$0xff]
    %v2825 = vld [vmem:[#allocation6 + $0x148] sm:$0xff]
    %v2826 = vld [vmem:[#allocation6 + $0x150] sm:$0xff]
    %v2827 = vld [vmem:[#allocation6 + $0x158] sm:$0xff]
    %v2828 = vld [vmem:[#allocation6 + $0x160] sm:$0xff]
    %v2829 = vld [vmem:[#allocation6 + $0x168] sm:$0xff]
    %v2830 = vld [vmem:[#allocation6 + $0x170] sm:$0xff]
    %v2831 = vld [vmem:[#allocation6 + $0x178] sm:$0xff]
    %v2832 = vld [vmem:[#allocation6 + $0x180] sm:$0xff]
    %v2833 = vld [vmem:[#allocation6 + $0x188] sm:$0xff]
    %v2834 = vld [vmem:[#allocation6 + $0x190] sm:$0xff]
    %v2835 = vld [vmem:[#allocation6 + $0x198] sm:$0xff]
    %v2836 = vld [vmem:[#allocation6 + $0x1a0] sm:$0xff]
    %v2837 = vld [vmem:[#allocation6 + $0x1a8] sm:$0xff]
    %v2838 = vld [vmem:[#allocation6 + $0x1b0] sm:$0xff]
    %v2839 = vld [vmem:[#allocation6 + $0x1b8] sm:$0xff]
    %v2840 = vld [vmem:[#allocation6 + $0x1c0] sm:$0xff]
    %v2841 = vld [vmem:[#allocation6 + $0x1c8] sm:$0xff]
    %v2842 = vld [vmem:[#allocation6 + $0x1d0] sm:$0xff]
    %v2843 = vld [vmem:[#allocation6 + $0x1d8] sm:$0xff]
    %v2844 = vld [vmem:[#allocation6 + $0x1e0] sm:$0xff]
    %v2845 = vld [vmem:[#allocation6 + $0x1e8] sm:$0xff]
    %v2846 = vld [vmem:[#allocation6 + $0x1f0] sm:$0xff]
    %v2847 = vld [vmem:[#allocation6 + $0x1f8] sm:$0xff]
    %v2848 = vld [vmem:[#allocation6 + $0x200] sm:$0xff]
    %v2849 = vld [vmem:[#allocation6 + $0x208] sm:$0xff]
    %v2850 = vld [vmem:[#allocation6 + $0x210] sm:$0xff]
    %v2851 = vld [vmem:[#allocation6 + $0x218] sm:$0xff]
    %v2852 = vld [vmem:[#allocation6 + $0x220] sm:$0xff]
    %v2853 = vld [vmem:[#allocation6 + $0x228] sm:$0xff]
    %v2854 = vld [vmem:[#allocation6 + $0x230] sm:$0xff]
    %v2855 = vld [vmem:[#allocation6 + $0x238] sm:$0xff]
    %v2856 = vld [vmem:[#allocation6 + $0x240] sm:$0xff]
    %v2857 = vld [vmem:[#allocation6 + $0x248] sm:$0xff]
    %v2858 = vld [vmem:[#allocation6 + $0x250] sm:$0xff]
    %v2859 = vld [vmem:[#allocation6 + $0x258] sm:$0xff]
    %v2860 = vld [vmem:[#allocation6 + $0x260] sm:$0xff]
    %v2861 = vld [vmem:[#allocation6 + $0x268] sm:$0xff]
    %v2862 = vld [vmem:[#allocation6 + $0x270] sm:$0xff]
    %v2863 = vld [vmem:[#allocation6 + $0x278] sm:$0xff]
    %v2864 = vld [vmem:[#allocation6 + $0x280] sm:$0xff]
    %v2865 = vld [vmem:[#allocation6 + $0x288] sm:$0xff]
    %v2866 = vld [vmem:[#allocation6 + $0x290] sm:$0xff]
    %v2867 = vld [vmem:[#allocation6 + $0x298] sm:$0xff]
    %v2868 = vld [vmem:[#allocation6 + $0x2a0] sm:$0xff]
    %v2869 = vld [vmem:[#allocation6 + $0x2a8] sm:$0xff]
    %v2870 = vld [vmem:[#allocation6 + $0x2b0] sm:$0xff]
    %v2871 = vld [vmem:[#allocation6 + $0x2b8] sm:$0xff]
    %v2872 = vld [vmem:[#allocation6 + $0x2c0] sm:$0xff]
    %v2873 = vld [vmem:[#allocation6 + $0x2c8] sm:$0xff]
    %v2874 = vld [vmem:[#allocation6 + $0x2d0] sm:$0xff]
    %v2875 = vld [vmem:[#allocation6 + $0x2d8] sm:$0xff]
    %v2876 = vld [vmem:[#allocation6 + $0x2e0] sm:$0xff]
    %v2877 = vld [vmem:[#allocation6 + $0x2e8] sm:$0xff]
    %v2878 = vld [vmem:[#allocation6 + $0x2f0] sm:$0xff]
    %v2879 = vld [vmem:[#allocation6 + $0x2f8] sm:$0xff]
    %v2880 = vld [vmem:[#allocation6 + $0x300] sm:$0xff]
    %v2881 = vld [vmem:[#allocation6 + $0x308] sm:$0xff]
    %v2882 = vld [vmem:[#allocation6 + $0x310] sm:$0xff]
    %v2883 = vld [vmem:[#allocation6 + $0x318] sm:$0xff]
    %v2884 = vld [vmem:[#allocation6 + $0x320] sm:$0xff]
    %v2885 = vld [vmem:[#allocation6 + $0x328] sm:$0xff]
    %v2886 = vld [vmem:[#allocation6 + $0x330] sm:$0xff]
    %v2887 = vld [vmem:[#allocation6 + $0x338] sm:$0xff]
    %v2888 = vld [vmem:[#allocation6 + $0x340] sm:$0xff]
    %v2889 = vld [vmem:[#allocation6 + $0x348] sm:$0xff]
    %v2890 = vld [vmem:[#allocation6 + $0x350] sm:$0xff]
    %v2891 = vld [vmem:[#allocation6 + $0x358] sm:$0xff]
    %v2892 = vld [vmem:[#allocation6 + $0x360] sm:$0xff]
    %v2893 = vld [vmem:[#allocation6 + $0x368] sm:$0xff]
    %v2894 = vld [vmem:[#allocation6 + $0x370] sm:$0xff]
    %v2895 = vld [vmem:[#allocation6 + $0x378] sm:$0xff]
    %v2896 = vld [vmem:[#allocation6 + $0x380] sm:$0xff]
    %v2897 = vld [vmem:[#allocation6 + $0x388] sm:$0xff]
    %v2898 = vld [vmem:[#allocation6 + $0x390] sm:$0xff]
    %v2899 = vld [vmem:[#allocation6 + $0x398] sm:$0xff]
    %v2900 = vld [vmem:[#allocation6 + $0x3a0] sm:$0xff]
    %v2901 = vld [vmem:[#allocation6 + $0x3a8] sm:$0xff]
    %v2902 = vld [vmem:[#allocation6 + $0x3b0] sm:$0xff]
    %v2903 = vld [vmem:[#allocation6 + $0x3b8] sm:$0xff]
    %v2904 = vld [vmem:[#allocation6 + $0x3c0] sm:$0xff]
    %v2905 = vld [vmem:[#allocation6 + $0x3c8] sm:$0xff]
    %v2906 = vld [vmem:[#allocation6 + $0x3d0] sm:$0xff]
    %v2907 = vld [vmem:[#allocation6 + $0x3d8] sm:$0xff]
    %v2908 = vld [vmem:[#allocation6 + $0x3e0] sm:$0xff]
    %v2909 = vld [vmem:[#allocation6 + $0x3e8] sm:$0xff]
    %v2910 = vld [vmem:[#allocation6 + $0x3f0] sm:$0xff]
    %v2911 = vld [vmem:[#allocation6 + $0x3f8] sm:$0xff]
    %v2912 = vld [vmem:[%s6] sm:$0xf]
    %v2914 = vlaneseq
    %v2915 = vshrl.u32 %v2914, 7
    %v2916 = vsub.s32 0, %v2915
    %v2917 = vrot.slane %v2912, %v2916
    %v2918 = vlaneseq
    %v2919 = vshrl.u32 %v2918, 7
    %v2920 = vsub.s32 1, %v2919
    %v2921 = vrot.slane %v2912, %v2920
    %v2922 = vlaneseq
    %v2923 = vshrl.u32 %v2922, 7
    %v2924 = vsub.s32 2, %v2923
    %v2925 = vrot.slane %v2912, %v2924
    %v2926 = vlaneseq
    %v2927 = vshrl.u32 %v2926, 7
    %v2928 = vsub.s32 3, %v2927
    %v2929 = vrot.slane %v2912, %v2928
    %v3062 = vunpack.c.l.b16 %v2784
    %v3063 = vunpack.c.h.b16 %v2784
    %v3064 = vunpack.c.l.b16 %v2785
    %v3065 = vunpack.c.h.b16 %v2785
    %v3066 = vunpack.c.l.b16 %v2786
    %v3067 = vunpack.c.h.b16 %v2786
    %v3068 = vunpack.c.l.b16 %v2787
    %v3069 = vunpack.c.h.b16 %v2787
    %v3070 = vunpack.c.l.b16 %v2788
    %v3071 = vunpack.c.h.b16 %v2788
    %v3072 = vunpack.c.l.b16 %v2789
    %v3073 = vunpack.c.h.b16 %v2789
    %v3074 = vunpack.c.l.b16 %v2790
    %v3075 = vunpack.c.h.b16 %v2790
    %v3076 = vunpack.c.l.b16 %v2791
    %v3077 = vunpack.c.h.b16 %v2791
    %v3078 = vunpack.c.l.b16 %v2792
    %v3079 = vunpack.c.h.b16 %v2792
    %v3080 = vunpack.c.l.b16 %v2793
    %v3081 = vunpack.c.h.b16 %v2793
    %v3082 = vunpack.c.l.b16 %v2794
    %v3083 = vunpack.c.h.b16 %v2794
    %v3084 = vunpack.c.l.b16 %v2795
    %v3085 = vunpack.c.h.b16 %v2795
    %v3086 = vunpack.c.l.b16 %v2796
    %v3087 = vunpack.c.h.b16 %v2796
    %v3088 = vunpack.c.l.b16 %v2797
    %v3089 = vunpack.c.h.b16 %v2797
    %v3090 = vunpack.c.l.b16 %v2798
    %v3091 = vunpack.c.h.b16 %v2798
    %v3092 = vunpack.c.l.b16 %v2799
    %v3093 = vunpack.c.h.b16 %v2799
    %v3094 = vunpack.c.l.b16 %v2800
    %v3095 = vunpack.c.h.b16 %v2800
    %v3096 = vunpack.c.l.b16 %v2801
    %v3097 = vunpack.c.h.b16 %v2801
    %v3098 = vunpack.c.l.b16 %v2802
    %v3099 = vunpack.c.h.b16 %v2802
    %v3100 = vunpack.c.l.b16 %v2803
    %v3101 = vunpack.c.h.b16 %v2803
    %v3102 = vunpack.c.l.b16 %v2804
    %v3103 = vunpack.c.h.b16 %v2804
    %v3104 = vunpack.c.l.b16 %v2805
    %v3105 = vunpack.c.h.b16 %v2805
    %v3106 = vunpack.c.l.b16 %v2806
    %v3107 = vunpack.c.h.b16 %v2806
    %v3108 = vunpack.c.l.b16 %v2807
    %v3109 = vunpack.c.h.b16 %v2807
    %v3110 = vunpack.c.l.b16 %v2808
    %v3111 = vunpack.c.h.b16 %v2808
    %v3112 = vunpack.c.l.b16 %v2809
    %v3113 = vunpack.c.h.b16 %v2809
    %v3114 = vunpack.c.l.b16 %v2810
    %v3115 = vunpack.c.h.b16 %v2810
    %v3116 = vunpack.c.l.b16 %v2811
    %v3117 = vunpack.c.h.b16 %v2811
    %v3118 = vunpack.c.l.b16 %v2812
    %v3119 = vunpack.c.h.b16 %v2812
    %v3120 = vunpack.c.l.b16 %v2813
    %v3121 = vunpack.c.h.b16 %v2813
    %v3122 = vunpack.c.l.b16 %v2814
    %v3123 = vunpack.c.h.b16 %v2814
    %v3124 = vunpack.c.l.b16 %v2815
    %v3125 = vunpack.c.h.b16 %v2815
    %v3126 = vunpack.c.l.b16 %v2816
    %v3127 = vunpack.c.h.b16 %v2816
    %v3128 = vunpack.c.l.b16 %v2817
    %v3129 = vunpack.c.h.b16 %v2817
    %v3130 = vunpack.c.l.b16 %v2818
    %v3131 = vunpack.c.h.b16 %v2818
    %v3132 = vunpack.c.l.b16 %v2819
    %v3133 = vunpack.c.h.b16 %v2819
    %v3134 = vunpack.c.l.b16 %v2820
    %v3135 = vunpack.c.h.b16 %v2820
    %v3136 = vunpack.c.l.b16 %v2821
    %v3137 = vunpack.c.h.b16 %v2821
    %v3138 = vunpack.c.l.b16 %v2822
    %v3139 = vunpack.c.h.b16 %v2822
    %v3140 = vunpack.c.l.b16 %v2823
    %v3141 = vunpack.c.h.b16 %v2823
    %v3142 = vunpack.c.l.b16 %v2824
    %v3143 = vunpack.c.h.b16 %v2824
    %v3144 = vunpack.c.l.b16 %v2825
    %v3145 = vunpack.c.h.b16 %v2825
    %v3146 = vunpack.c.l.b16 %v2826
    %v3147 = vunpack.c.h.b16 %v2826
    %v3148 = vunpack.c.l.b16 %v2827
    %v3149 = vunpack.c.h.b16 %v2827
    %v3150 = vunpack.c.l.b16 %v2828
    %v3151 = vunpack.c.h.b16 %v2828
    %v3152 = vunpack.c.l.b16 %v2829
    %v3153 = vunpack.c.h.b16 %v2829
    %v3154 = vunpack.c.l.b16 %v2830
    %v3155 = vunpack.c.h.b16 %v2830
    %v3156 = vunpack.c.l.b16 %v2831
    %v3157 = vunpack.c.h.b16 %v2831
    %v3158 = vunpack.c.l.b16 %v2832
    %v3159 = vunpack.c.h.b16 %v2832
    %v3160 = vunpack.c.l.b16 %v2833
    %v3161 = vunpack.c.h.b16 %v2833
    %v3162 = vunpack.c.l.b16 %v2834
    %v3163 = vunpack.c.h.b16 %v2834
    %v3164 = vunpack.c.l.b16 %v2835
    %v3165 = vunpack.c.h.b16 %v2835
    %v3166 = vunpack.c.l.b16 %v2836
    %v3167 = vunpack.c.h.b16 %v2836
    %v3168 = vunpack.c.l.b16 %v2837
    %v3169 = vunpack.c.h.b16 %v2837
    %v3170 = vunpack.c.l.b16 %v2838
    %v3171 = vunpack.c.h.b16 %v2838
    %v3172 = vunpack.c.l.b16 %v2839
    %v3173 = vunpack.c.h.b16 %v2839
    %v3174 = vunpack.c.l.b16 %v2840
    %v3175 = vunpack.c.h.b16 %v2840
    %v3176 = vunpack.c.l.b16 %v2841
    %v3177 = vunpack.c.h.b16 %v2841
    %v3178 = vunpack.c.l.b16 %v2842
    %v3179 = vunpack.c.h.b16 %v2842
    %v3180 = vunpack.c.l.b16 %v2843
    %v3181 = vunpack.c.h.b16 %v2843
    %v3182 = vunpack.c.l.b16 %v2844
    %v3183 = vunpack.c.h.b16 %v2844
    %v3184 = vunpack.c.l.b16 %v2845
    %v3185 = vunpack.c.h.b16 %v2845
    %v3186 = vunpack.c.l.b16 %v2846
    %v3187 = vunpack.c.h.b16 %v2846
    %v3188 = vunpack.c.l.b16 %v2847
    %v3189 = vunpack.c.h.b16 %v2847
    %v3190 = vunpack.c.l.b16 %v2848
    %v3191 = vunpack.c.h.b16 %v2848
    %v3192 = vunpack.c.l.b16 %v2849
    %v3193 = vunpack.c.h.b16 %v2849
    %v3194 = vunpack.c.l.b16 %v2850
    %v3195 = vunpack.c.h.b16 %v2850
    %v3196 = vunpack.c.l.b16 %v2851
    %v3197 = vunpack.c.h.b16 %v2851
    %v3198 = vunpack.c.l.b16 %v2852
    %v3199 = vunpack.c.h.b16 %v2852
    %v3200 = vunpack.c.l.b16 %v2853
    %v3201 = vunpack.c.h.b16 %v2853
    %v3202 = vunpack.c.l.b16 %v2854
    %v3203 = vunpack.c.h.b16 %v2854
    %v3204 = vunpack.c.l.b16 %v2855
    %v3205 = vunpack.c.h.b16 %v2855
    %v3206 = vunpack.c.l.b16 %v2856
    %v3207 = vunpack.c.h.b16 %v2856
    %v3208 = vunpack.c.l.b16 %v2857
    %v3209 = vunpack.c.h.b16 %v2857
    %v3210 = vunpack.c.l.b16 %v2858
    %v3211 = vunpack.c.h.b16 %v2858
    %v3212 = vunpack.c.l.b16 %v2859
    %v3213 = vunpack.c.h.b16 %v2859
    %v3214 = vunpack.c.l.b16 %v2860
    %v3215 = vunpack.c.h.b16 %v2860
    %v3216 = vunpack.c.l.b16 %v2861
    %v3217 = vunpack.c.h.b16 %v2861
    %v3218 = vunpack.c.l.b16 %v2862
    %v3219 = vunpack.c.h.b16 %v2862
    %v3220 = vunpack.c.l.b16 %v2863
    %v3221 = vunpack.c.h.b16 %v2863
    %v3222 = vunpack.c.l.b16 %v2864
    %v3223 = vunpack.c.h.b16 %v2864
    %v3224 = vunpack.c.l.b16 %v2865
    %v3225 = vunpack.c.h.b16 %v2865
    %v3226 = vunpack.c.l.b16 %v2866
    %v3227 = vunpack.c.h.b16 %v2866
    %v3228 = vunpack.c.l.b16 %v2867
    %v3229 = vunpack.c.h.b16 %v2867
    %v3230 = vunpack.c.l.b16 %v2868
    %v3231 = vunpack.c.h.b16 %v2868
    %v3232 = vunpack.c.l.b16 %v2869
    %v3233 = vunpack.c.h.b16 %v2869
    %v3234 = vunpack.c.l.b16 %v2870
    %v3235 = vunpack.c.h.b16 %v2870
    %v3236 = vunpack.c.l.b16 %v2871
    %v3237 = vunpack.c.h.b16 %v2871
    %v3238 = vunpack.c.l.b16 %v2872
    %v3239 = vunpack.c.h.b16 %v2872
    %v3240 = vunpack.c.l.b16 %v2873
    %v3241 = vunpack.c.h.b16 %v2873
    %v3242 = vunpack.c.l.b16 %v2874
    %v3243 = vunpack.c.h.b16 %v2874
    %v3244 = vunpack.c.l.b16 %v2875
    %v3245 = vunpack.c.h.b16 %v2875
    %v3246 = vunpack.c.l.b16 %v2876
    %v3247 = vunpack.c.h.b16 %v2876
    %v3248 = vunpack.c.l.b16 %v2877
    %v3249 = vunpack.c.h.b16 %v2877
    %v3250 = vunpack.c.l.b16 %v2878
    %v3251 = vunpack.c.h.b16 %v2878
    %v3252 = vunpack.c.l.b16 %v2879
    %v3253 = vunpack.c.h.b16 %v2879
    %v3254 = vunpack.c.l.b16 %v2880
    %v3255 = vunpack.c.h.b16 %v2880
    %v3256 = vunpack.c.l.b16 %v2881
    %v3257 = vunpack.c.h.b16 %v2881
    %v3258 = vunpack.c.l.b16 %v2882
    %v3259 = vunpack.c.h.b16 %v2882
    %v3260 = vunpack.c.l.b16 %v2883
    %v3261 = vunpack.c.h.b16 %v2883
    %v3262 = vunpack.c.l.b16 %v2884
    %v3263 = vunpack.c.h.b16 %v2884
    %v3264 = vunpack.c.l.b16 %v2885
    %v3265 = vunpack.c.h.b16 %v2885
    %v3266 = vunpack.c.l.b16 %v2886
    %v3267 = vunpack.c.h.b16 %v2886
    %v3268 = vunpack.c.l.b16 %v2887
    %v3269 = vunpack.c.h.b16 %v2887
    %v3270 = vunpack.c.l.b16 %v2888
    %v3271 = vunpack.c.h.b16 %v2888
    %v3272 = vunpack.c.l.b16 %v2889
    %v3273 = vunpack.c.h.b16 %v2889
    %v3274 = vunpack.c.l.b16 %v2890
    %v3275 = vunpack.c.h.b16 %v2890
    %v3276 = vunpack.c.l.b16 %v2891
    %v3277 = vunpack.c.h.b16 %v2891
    %v3278 = vunpack.c.l.b16 %v2892
    %v3279 = vunpack.c.h.b16 %v2892
    %v3280 = vunpack.c.l.b16 %v2893
    %v3281 = vunpack.c.h.b16 %v2893
    %v3282 = vunpack.c.l.b16 %v2894
    %v3283 = vunpack.c.h.b16 %v2894
    %v3284 = vunpack.c.l.b16 %v2895
    %v3285 = vunpack.c.h.b16 %v2895
    %v3286 = vunpack.c.l.b16 %v2896
    %v3287 = vunpack.c.h.b16 %v2896
    %v3288 = vunpack.c.l.b16 %v2897
    %v3289 = vunpack.c.h.b16 %v2897
    %v3290 = vunpack.c.l.b16 %v2898
    %v3291 = vunpack.c.h.b16 %v2898
    %v3292 = vunpack.c.l.b16 %v2899
    %v3293 = vunpack.c.h.b16 %v2899
    %v3294 = vunpack.c.l.b16 %v2900
    %v3295 = vunpack.c.h.b16 %v2900
    %v3296 = vunpack.c.l.b16 %v2901
    %v3297 = vunpack.c.h.b16 %v2901
    %v3298 = vunpack.c.l.b16 %v2902
    %v3299 = vunpack.c.h.b16 %v2902
    %v3300 = vunpack.c.l.b16 %v2903
    %v3301 = vunpack.c.h.b16 %v2903
    %v3302 = vunpack.c.l.b16 %v2904
    %v3303 = vunpack.c.h.b16 %v2904
    %v3304 = vunpack.c.l.b16 %v2905
    %v3305 = vunpack.c.h.b16 %v2905
    %v3306 = vunpack.c.l.b16 %v2906
    %v3307 = vunpack.c.h.b16 %v2906
    %v3308 = vunpack.c.l.b16 %v2907
    %v3309 = vunpack.c.h.b16 %v2907
    %v3310 = vunpack.c.l.b16 %v2908
    %v3311 = vunpack.c.h.b16 %v2908
    %v3312 = vunpack.c.l.b16 %v2909
    %v3313 = vunpack.c.h.b16 %v2909
    %v3314 = vunpack.c.l.b16 %v2910
    %v3315 = vunpack.c.h.b16 %v2910
    %v3316 = vunpack.c.l.b16 %v2911
    %v3317 = vunpack.c.h.b16 %v2911
    %v3318 = vpack.c.b16 %v3066, %v3062
    %v3319 = vpack.c.b16 %v3067, %v3063
    %v3320 = vpack.c.b16 %v3068, %v3064
    %v3321 = vpack.c.b16 %v3069, %v3065
    %v3322 = vpack.c.b16 %v3074, %v3070
    %v3323 = vpack.c.b16 %v3075, %v3071
    %v3324 = vpack.c.b16 %v3076, %v3072
    %v3325 = vpack.c.b16 %v3077, %v3073
    %v3326 = vpack.c.b16 %v3082, %v3078
    %v3327 = vpack.c.b16 %v3083, %v3079
    %v3328 = vpack.c.b16 %v3084, %v3080
    %v3329 = vpack.c.b16 %v3085, %v3081
    %v3330 = vpack.c.b16 %v3090, %v3086
    %v3331 = vpack.c.b16 %v3091, %v3087
    %v3332 = vpack.c.b16 %v3092, %v3088
    %v3333 = vpack.c.b16 %v3093, %v3089
    %v3334 = vpack.c.b16 %v3098, %v3094
    %v3335 = vpack.c.b16 %v3099, %v3095
    %v3336 = vpack.c.b16 %v3100, %v3096
    %v3337 = vpack.c.b16 %v3101, %v3097
    %v3338 = vpack.c.b16 %v3106, %v3102
    %v3339 = vpack.c.b16 %v3107, %v3103
    %v3340 = vpack.c.b16 %v3108, %v3104
    %v3341 = vpack.c.b16 %v3109, %v3105
    %v3342 = vpack.c.b16 %v3114, %v3110
    %v3343 = vpack.c.b16 %v3115, %v3111
    %v3344 = vpack.c.b16 %v3116, %v3112
    %v3345 = vpack.c.b16 %v3117, %v3113
    %v3346 = vpack.c.b16 %v3122, %v3118
    %v3347 = vpack.c.b16 %v3123, %v3119
    %v3348 = vpack.c.b16 %v3124, %v3120
    %v3349 = vpack.c.b16 %v3125, %v3121
    %v3350 = vpack.c.b16 %v3130, %v3126
    %v3351 = vpack.c.b16 %v3131, %v3127
    %v3352 = vpack.c.b16 %v3132, %v3128
    %v3353 = vpack.c.b16 %v3133, %v3129
    %v3354 = vpack.c.b16 %v3138, %v3134
    %v3355 = vpack.c.b16 %v3139, %v3135
    %v3356 = vpack.c.b16 %v3140, %v3136
    %v3357 = vpack.c.b16 %v3141, %v3137
    %v3358 = vpack.c.b16 %v3146, %v3142
    %v3359 = vpack.c.b16 %v3147, %v3143
    %v3360 = vpack.c.b16 %v3148, %v3144
    %v3361 = vpack.c.b16 %v3149, %v3145
    %v3362 = vpack.c.b16 %v3154, %v3150
    %v3363 = vpack.c.b16 %v3155, %v3151
    %v3364 = vpack.c.b16 %v3156, %v3152
    %v3365 = vpack.c.b16 %v3157, %v3153
    %v3366 = vpack.c.b16 %v3162, %v3158
    %v3367 = vpack.c.b16 %v3163, %v3159
    %v3368 = vpack.c.b16 %v3164, %v3160
    %v3369 = vpack.c.b16 %v3165, %v3161
    %v3370 = vpack.c.b16 %v3170, %v3166
    %v3371 = vpack.c.b16 %v3171, %v3167
    %v3372 = vpack.c.b16 %v3172, %v3168
    %v3373 = vpack.c.b16 %v3173, %v3169
    %v3374 = vpack.c.b16 %v3178, %v3174
    %v3375 = vpack.c.b16 %v3179, %v3175
    %v3376 = vpack.c.b16 %v3180, %v3176
    %v3377 = vpack.c.b16 %v3181, %v3177
    %v3378 = vpack.c.b16 %v3186, %v3182
    %v3379 = vpack.c.b16 %v3187, %v3183
    %v3380 = vpack.c.b16 %v3188, %v3184
    %v3381 = vpack.c.b16 %v3189, %v3185
    %v3382 = vpack.c.b16 %v3194, %v3190
    %v3383 = vpack.c.b16 %v3195, %v3191
    %v3384 = vpack.c.b16 %v3196, %v3192
    %v3385 = vpack.c.b16 %v3197, %v3193
    %v3386 = vpack.c.b16 %v3202, %v3198
    %v3387 = vpack.c.b16 %v3203, %v3199
    %v3388 = vpack.c.b16 %v3204, %v3200
    %v3389 = vpack.c.b16 %v3205, %v3201
    %v3390 = vpack.c.b16 %v3210, %v3206
    %v3391 = vpack.c.b16 %v3211, %v3207
    %v3392 = vpack.c.b16 %v3212, %v3208
    %v3393 = vpack.c.b16 %v3213, %v3209
    %v3394 = vpack.c.b16 %v3218, %v3214
    %v3395 = vpack.c.b16 %v3219, %v3215
    %v3396 = vpack.c.b16 %v3220, %v3216
    %v3397 = vpack.c.b16 %v3221, %v3217
    %v3398 = vpack.c.b16 %v3226, %v3222
    %v3399 = vpack.c.b16 %v3227, %v3223
    %v3400 = vpack.c.b16 %v3228, %v3224
    %v3401 = vpack.c.b16 %v3229, %v3225
    %v3402 = vpack.c.b16 %v3234, %v3230
    %v3403 = vpack.c.b16 %v3235, %v3231
    %v3404 = vpack.c.b16 %v3236, %v3232
    %v3405 = vpack.c.b16 %v3237, %v3233
    %v3406 = vpack.c.b16 %v3242, %v3238
    %v3407 = vpack.c.b16 %v3243, %v3239
    %v3408 = vpack.c.b16 %v3244, %v3240
    %v3409 = vpack.c.b16 %v3245, %v3241
    %v3410 = vpack.c.b16 %v3250, %v3246
    %v3411 = vpack.c.b16 %v3251, %v3247
    %v3412 = vpack.c.b16 %v3252, %v3248
    %v3413 = vpack.c.b16 %v3253, %v3249
    %v3414 = vpack.c.b16 %v3258, %v3254
    %v3415 = vpack.c.b16 %v3259, %v3255
    %v3416 = vpack.c.b16 %v3260, %v3256
    %v3417 = vpack.c.b16 %v3261, %v3257
    %v3418 = vpack.c.b16 %v3266, %v3262
    %v3419 = vpack.c.b16 %v3267, %v3263
    %v3420 = vpack.c.b16 %v3268, %v3264
    %v3421 = vpack.c.b16 %v3269, %v3265
    %v3422 = vpack.c.b16 %v3274, %v3270
    %v3423 = vpack.c.b16 %v3275, %v3271
    %v3424 = vpack.c.b16 %v3276, %v3272
    %v3425 = vpack.c.b16 %v3277, %v3273
    %v3426 = vpack.c.b16 %v3282, %v3278
    %v3427 = vpack.c.b16 %v3283, %v3279
    %v3428 = vpack.c.b16 %v3284, %v3280
    %v3429 = vpack.c.b16 %v3285, %v3281
    %v3430 = vpack.c.b16 %v3290, %v3286
    %v3431 = vpack.c.b16 %v3291, %v3287
    %v3432 = vpack.c.b16 %v3292, %v3288
    %v3433 = vpack.c.b16 %v3293, %v3289
    %v3434 = vpack.c.b16 %v3298, %v3294
    %v3435 = vpack.c.b16 %v3299, %v3295
    %v3436 = vpack.c.b16 %v3300, %v3296
    %v3437 = vpack.c.b16 %v3301, %v3297
    %v3438 = vpack.c.b16 %v3306, %v3302
    %v3439 = vpack.c.b16 %v3307, %v3303
    %v3440 = vpack.c.b16 %v3308, %v3304
    %v3441 = vpack.c.b16 %v3309, %v3305
    %v3442 = vpack.c.b16 %v3314, %v3310
    %v3443 = vpack.c.b16 %v3315, %v3311
    %v3444 = vpack.c.b16 %v3316, %v3312
    %v3445 = vpack.c.b16 %v3317, %v3313
    %3574 = vmatprep.subr.bf16.mxu0 %v3347
    %3575 = vmatpush1.bf16.msra.mxu0 %v3346
    %3576 = vmatprep.subr.bf16.mxu0 %v3343
    %3577 = vmatpush1.bf16.msra.mxu0 %v3342
    %3578 = vmatprep.subr.bf16.mxu0 %v3339
    %3579 = vmatpush1.bf16.msra.mxu0 %v3338
    %3580 = vmatprep.subr.bf16.mxu0 %v3335
    %3581 = vmatpush1.bf16.msra.mxu0 %v3334
    %3582 = vmatprep.subr.bf16.mxu0 %v3331
    %3583 = vmatpush1.bf16.msra.mxu0 %v3330
    %3584 = vmatprep.subr.bf16.mxu0 %v3327
    %3585 = vmatpush1.bf16.msra.mxu0 %v3326
    %3586 = vmatprep.subr.bf16.mxu0 %v3323
    %3587 = vmatpush1.bf16.msra.mxu0 %v3322
    %3588 = vmatprep.subr.bf16.mxu0 %v3319
    %3589 = vmatpush1.bf16.msra.mxu0 %v3318
    %3590 = vmatprep.subr.bf16.mxu0 %v3379
    %3591 = vmatpush2.bf16.msra.mxu0 %v3378
    %3592 = vmatprep.subr.bf16.mxu0 %v3375
    %3593 = vmatpush2.bf16.msra.mxu0 %v3374
    %3594 = vmatprep.subr.bf16.mxu0 %v3371
    %3595 = vmatpush2.bf16.msra.mxu0 %v3370
    %3596 = vmatprep.subr.bf16.mxu0 %v3367
    %3597 = vmatpush2.bf16.msra.mxu0 %v3366
    %3598 = vmatprep.subr.bf16.mxu0 %v3363
    %3599 = vmatpush2.bf16.msra.mxu0 %v3362
    %3600 = vmatprep.subr.bf16.mxu0 %v3359
    %3601 = vmatpush2.bf16.msra.mxu0 %v3358
    %3602 = vmatprep.subr.bf16.mxu0 %v3355
    %3603 = vmatpush2.bf16.msra.mxu0 %v3354
    %3604 = vmatprep.subr.bf16.mxu0 %v3351
    %3605 = vmatpush2.bf16.msra.mxu0 %v3350
    %3606 = vmatprep.mubr.bf16.mxu0 %v2781
    %3607 = vmatmul.mubr.bf16.gmra.mxu0 %v2780
    %v3608 = vpop.f32.mrf.mxu0
    %v3609 = vadd.f32 %v2917, %v3608
    %v3610 = vpop.f32.mrf.mxu0
    %v3611 = vadd.f32 %v2921, %v3610
    %v3612 = vpop.f32.mrf.mxu0
    %v3613 = vpop.f32.mrf.mxu0
    %3614 = vdwg.mxu0
    %3615 = vmatprep.subr.bf16.mxu0 %v3411
    %3616 = vmatpush1.bf16.msra.mxu0 %v3410
    %3617 = vmatprep.subr.bf16.mxu0 %v3407
    %3618 = vmatpush1.bf16.msra.mxu0 %v3406
    %3619 = vmatprep.subr.bf16.mxu0 %v3403
    %3620 = vmatpush1.bf16.msra.mxu0 %v3402
    %3621 = vmatprep.subr.bf16.mxu0 %v3399
    %3622 = vmatpush1.bf16.msra.mxu0 %v3398
    %3623 = vmatprep.subr.bf16.mxu0 %v3395
    %3624 = vmatpush1.bf16.msra.mxu0 %v3394
    %3625 = vmatprep.subr.bf16.mxu0 %v3391
    %3626 = vmatpush1.bf16.msra.mxu0 %v3390
    %3627 = vmatprep.subr.bf16.mxu0 %v3387
    %3628 = vmatpush1.bf16.msra.mxu0 %v3386
    %3629 = vmatprep.subr.bf16.mxu0 %v3383
    %3630 = vmatpush1.bf16.msra.mxu0 %v3382
    %3631 = vmatprep.subr.bf16.mxu0 %v3443
    %3632 = vmatpush2.bf16.msra.mxu0 %v3442
    %3633 = vmatprep.subr.bf16.mxu0 %v3439
    %3634 = vmatpush2.bf16.msra.mxu0 %v3438
    %3635 = vmatprep.subr.bf16.mxu0 %v3435
    %3636 = vmatpush2.bf16.msra.mxu0 %v3434
    %3637 = vmatprep.subr.bf16.mxu0 %v3431
    %3638 = vmatpush2.bf16.msra.mxu0 %v3430
    %3639 = vmatprep.subr.bf16.mxu0 %v3427
    %3640 = vmatpush2.bf16.msra.mxu0 %v3426
    %3641 = vmatprep.subr.bf16.mxu0 %v3423
    %3642 = vmatpush2.bf16.msra.mxu0 %v3422
    %3643 = vmatprep.subr.bf16.mxu0 %v3419
    %3644 = vmatpush2.bf16.msra.mxu0 %v3418
    %3645 = vmatprep.subr.bf16.mxu0 %v3415
    %3646 = vmatpush2.bf16.msra.mxu0 %v3414
    %3647 = vmatprep.mubr.bf16.mxu0 %v2783
    %3648 = vmatmul.mubr.bf16.gmra.mxu0 %v2782
    %v3649 = vpop.f32.mrf.mxu0
    %v3650 = vadd.f32 %v3609, %v3649
    %v3651 = vpop.f32.mrf.mxu0
    %v3652 = vadd.f32 %v3611, %v3651
    %v3653 = vpop.f32.mrf.mxu0
    %v3654 = vpop.f32.mrf.mxu0
    %3655 = vdwg.mxu0
    %3656 = vmatprep.subr.bf16.mxu0 %v3349
    %3657 = vmatpush1.bf16.msra.mxu0 %v3348
    %3658 = vmatprep.subr.bf16.mxu0 %v3345
    %3659 = vmatpush1.bf16.msra.mxu0 %v3344
    %3660 = vmatprep.subr.bf16.mxu0 %v3341
    %3661 = vmatpush1.bf16.msra.mxu0 %v3340
    %3662 = vmatprep.subr.bf16.mxu0 %v3337
    %3663 = vmatpush1.bf16.msra.mxu0 %v3336
    %3664 = vmatprep.subr.bf16.mxu0 %v3333
    %3665 = vmatpush1.bf16.msra.mxu0 %v3332
    %3666 = vmatprep.subr.bf16.mxu0 %v3329
    %3667 = vmatpush1.bf16.msra.mxu0 %v3328
    %3668 = vmatprep.subr.bf16.mxu0 %v3325
    %3669 = vmatpush1.bf16.msra.mxu0 %v3324
    %3670 = vmatprep.subr.bf16.mxu0 %v3321
    %3671 = vmatpush1.bf16.msra.mxu0 %v3320
    %3672 = vmatprep.subr.bf16.mxu0 %v3381
    %3673 = vmatpush2.bf16.msra.mxu0 %v3380
    %3674 = vmatprep.subr.bf16.mxu0 %v3377
    %3675 = vmatpush2.bf16.msra.mxu0 %v3376
    %3676 = vmatprep.subr.bf16.mxu0 %v3373
    %3677 = vmatpush2.bf16.msra.mxu0 %v3372
    %3678 = vmatprep.subr.bf16.mxu0 %v3369
    %3679 = vmatpush2.bf16.msra.mxu0 %v3368
    %3680 = vmatprep.subr.bf16.mxu0 %v3365
    %3681 = vmatpush2.bf16.msra.mxu0 %v3364
    %3682 = vmatprep.subr.bf16.mxu0 %v3361
    %3683 = vmatpush2.bf16.msra.mxu0 %v3360
    %3684 = vmatprep.subr.bf16.mxu0 %v3357
    %3685 = vmatpush2.bf16.msra.mxu0 %v3356
    %3686 = vmatprep.subr.bf16.mxu0 %v3353
    %3687 = vmatpush2.bf16.msra.mxu0 %v3352
    %3688 = vmatprep.mubr.bf16.mxu0 %v2781
    %3689 = vmatmul.mubr.bf16.gmra.mxu0 %v2780
    %v3690 = vpop.f32.mrf.mxu0
    %v3691 = vadd.f32 %v2925, %v3690
    %v3692 = vpop.f32.mrf.mxu0
    %v3693 = vadd.f32 %v2929, %v3692
    %v3694 = vpop.f32.mrf.mxu0
    %v3695 = vpop.f32.mrf.mxu0
    %3696 = vdwg.mxu0
    %3697 = vmatprep.subr.bf16.mxu0 %v3413
    %3698 = vmatpush1.bf16.msra.mxu0 %v3412
    %3699 = vmatprep.subr.bf16.mxu0 %v3409
    %3700 = vmatpush1.bf16.msra.mxu0 %v3408
    %3701 = vmatprep.subr.bf16.mxu0 %v3405
    %3702 = vmatpush1.bf16.msra.mxu0 %v3404
    %3703 = vmatprep.subr.bf16.mxu0 %v3401
    %3704 = vmatpush1.bf16.msra.mxu0 %v3400
    %3705 = vmatprep.subr.bf16.mxu0 %v3397
    %3706 = vmatpush1.bf16.msra.mxu0 %v3396
    %3707 = vmatprep.subr.bf16.mxu0 %v3393
    %3708 = vmatpush1.bf16.msra.mxu0 %v3392
    %3709 = vmatprep.subr.bf16.mxu0 %v3389
    %3710 = vmatpush1.bf16.msra.mxu0 %v3388
    %3711 = vmatprep.subr.bf16.mxu0 %v3385
    %3712 = vmatpush1.bf16.msra.mxu0 %v3384
    %3713 = vmatprep.subr.bf16.mxu0 %v3445
    %3714 = vmatpush2.bf16.msra.mxu0 %v3444
    %3715 = vmatprep.subr.bf16.mxu0 %v3441
    %3716 = vmatpush2.bf16.msra.mxu0 %v3440
    %3717 = vmatprep.subr.bf16.mxu0 %v3437
    %3718 = vmatpush2.bf16.msra.mxu0 %v3436
    %3719 = vmatprep.subr.bf16.mxu0 %v3433
    %3720 = vmatpush2.bf16.msra.mxu0 %v3432
    %3721 = vmatprep.subr.bf16.mxu0 %v3429
    %3722 = vmatpush2.bf16.msra.mxu0 %v3428
    %3723 = vmatprep.subr.bf16.mxu0 %v3425
    %3724 = vmatpush2.bf16.msra.mxu0 %v3424
    %3725 = vmatprep.subr.bf16.mxu0 %v3421
    %3726 = vmatpush2.bf16.msra.mxu0 %v3420
    %3727 = vmatprep.subr.bf16.mxu0 %v3417
    %3728 = vmatpush2.bf16.msra.mxu0 %v3416
    %3729 = vmatprep.mubr.bf16.mxu0 %v2783
    %3730 = vmatmul.mubr.bf16.gmra.mxu0 %v2782
    %v3731 = vpop.f32.mrf.mxu0
    %v3732 = vadd.f32 %v3691, %v3731
    %v3733 = vpop.f32.mrf.mxu0
    %v3734 = vadd.f32 %v3693, %v3733
    %v3735 = vpop.f32.mrf.mxu0
    %v3736 = vpop.f32.mrf.mxu0
    %3737 = vdwg.mxu0
    %v3738 = vmax.f32 %v3650, 0.0
    %v3739 = vmax.f32 %v3652, 0.0
    %v3740 = vmax.f32 %v3732, 0.0
    %v3741 = vmax.f32 %v3734, 0.0
    %v3742 = vpack.c.bf16 %v3738, %v3738
    %v3743 = vpack.c.bf16 %v3739, %v3739
    %v3744 = vpack.c.bf16 %v3740, %v3740
    %v3745 = vpack.c.bf16 %v3741, %v3741
    %v3746 = vld [vmem:[#allocation7] sm:$0xf]
    %v3747 = vld [vmem:[#allocation7 + $0x4] sm:$0xf]
    %v3748 = vld [vmem:[#allocation7 + $0x8] sm:$0xf]
    %v3749 = vld [vmem:[#allocation7 + $0xc] sm:$0xf]
    %v3750 = vld [vmem:[#allocation7 + $0x10] sm:$0xf]
    %v3751 = vld [vmem:[#allocation7 + $0x14] sm:$0xf]
    %v3752 = vld [vmem:[#allocation7 + $0x18] sm:$0xf]
    %v3753 = vld [vmem:[#allocation7 + $0x1c] sm:$0xf]
    %v3754 = vld [vmem:[#allocation7 + $0x20] sm:$0xf]
    %v3755 = vld [vmem:[#allocation7 + $0x24] sm:$0xf]
    %v3756 = vld [vmem:[#allocation7 + $0x28] sm:$0xf]
    %v3757 = vld [vmem:[#allocation7 + $0x2c] sm:$0xf]
    %v3758 = vld [vmem:[#allocation7 + $0x30] sm:$0xf]
    %v3759 = vld [vmem:[#allocation7 + $0x34] sm:$0xf]
    %v3760 = vld [vmem:[#allocation7 + $0x38] sm:$0xf]
    %v3761 = vld [vmem:[#allocation7 + $0x3c] sm:$0xf]
    %v3762 = vld [vmem:[#allocation7 + $0x40] sm:$0xf]
    %v3763 = vld [vmem:[#allocation7 + $0x44] sm:$0xf]
    %v3764 = vld [vmem:[#allocation7 + $0x48] sm:$0xf]
    %v3765 = vld [vmem:[#allocation7 + $0x4c] sm:$0xf]
    %v3766 = vld [vmem:[#allocation7 + $0x50] sm:$0xf]
    %v3767 = vld [vmem:[#allocation7 + $0x54] sm:$0xf]
    %v3768 = vld [vmem:[#allocation7 + $0x58] sm:$0xf]
    %v3769 = vld [vmem:[#allocation7 + $0x5c] sm:$0xf]
    %v3770 = vld [vmem:[#allocation7 + $0x60] sm:$0xf]
    %v3771 = vld [vmem:[#allocation7 + $0x64] sm:$0xf]
    %v3772 = vld [vmem:[#allocation7 + $0x68] sm:$0xf]
    %v3773 = vld [vmem:[#allocation7 + $0x6c] sm:$0xf]
    %v3774 = vld [vmem:[#allocation7 + $0x70] sm:$0xf]
    %v3775 = vld [vmem:[#allocation7 + $0x74] sm:$0xf]
    %v3776 = vld [vmem:[#allocation7 + $0x78] sm:$0xf]
    %v3777 = vld [vmem:[#allocation7 + $0x7c] sm:$0xf]
    %v3778 = vld [vmem:[#allocation7 + $0x80] sm:$0xf]
    %v3779 = vld [vmem:[#allocation7 + $0x84] sm:$0xf]
    %v3780 = vld [vmem:[#allocation7 + $0x88] sm:$0xf]
    %v3781 = vld [vmem:[#allocation7 + $0x8c] sm:$0xf]
    %v3782 = vld [vmem:[#allocation7 + $0x90] sm:$0xf]
    %v3783 = vld [vmem:[#allocation7 + $0x94] sm:$0xf]
    %v3784 = vld [vmem:[#allocation7 + $0x98] sm:$0xf]
    %v3785 = vld [vmem:[#allocation7 + $0x9c] sm:$0xf]
    %v3786 = vld [vmem:[#allocation7 + $0xa0] sm:$0xf]
    %v3787 = vld [vmem:[#allocation7 + $0xa4] sm:$0xf]
    %v3788 = vld [vmem:[#allocation7 + $0xa8] sm:$0xf]
    %v3789 = vld [vmem:[#allocation7 + $0xac] sm:$0xf]
    %v3790 = vld [vmem:[#allocation7 + $0xb0] sm:$0xf]
    %v3791 = vld [vmem:[#allocation7 + $0xb4] sm:$0xf]
    %v3792 = vld [vmem:[#allocation7 + $0xb8] sm:$0xf]
    %v3793 = vld [vmem:[#allocation7 + $0xbc] sm:$0xf]
    %v3794 = vld [vmem:[#allocation7 + $0xc0] sm:$0xf]
    %v3795 = vld [vmem:[#allocation7 + $0xc4] sm:$0xf]
    %v3796 = vld [vmem:[#allocation7 + $0xc8] sm:$0xf]
    %v3797 = vld [vmem:[#allocation7 + $0xcc] sm:$0xf]
    %v3798 = vld [vmem:[#allocation7 + $0xd0] sm:$0xf]
    %v3799 = vld [vmem:[#allocation7 + $0xd4] sm:$0xf]
    %v3800 = vld [vmem:[#allocation7 + $0xd8] sm:$0xf]
    %v3801 = vld [vmem:[#allocation7 + $0xdc] sm:$0xf]
    %v3802 = vld [vmem:[#allocation7 + $0xe0] sm:$0xf]
    %v3803 = vld [vmem:[#allocation7 + $0xe4] sm:$0xf]
    %v3804 = vld [vmem:[#allocation7 + $0xe8] sm:$0xf]
    %v3805 = vld [vmem:[#allocation7 + $0xec] sm:$0xf]
    %v3806 = vld [vmem:[#allocation7 + $0xf0] sm:$0xf]
    %v3807 = vld [vmem:[#allocation7 + $0xf4] sm:$0xf]
    %v3808 = vld [vmem:[#allocation7 + $0xf8] sm:$0xf]
    %v3809 = vld [vmem:[#allocation7 + $0xfc] sm:$0xf]
    %v3810 = vld [vmem:[%s8] sm:$0x1]
    %v3812 = vlaneseq
    %v3813 = vshrl.u32 %v3812, 7
    %v3814 = vsub.s32 0, %v3813
    %v3815 = vrot.slane %v3810, %v3814
    %v3881 = vunpack.c.l.b16 %v3746
    %v3882 = vunpack.c.l.b16 %v3747
    %v3883 = vunpack.c.l.b16 %v3748
    %v3884 = vunpack.c.l.b16 %v3749
    %v3885 = vunpack.c.l.b16 %v3750
    %v3886 = vunpack.c.l.b16 %v3751
    %v3887 = vunpack.c.l.b16 %v3752
    %v3888 = vunpack.c.l.b16 %v3753
    %v3889 = vunpack.c.l.b16 %v3754
    %v3890 = vunpack.c.l.b16 %v3755
    %v3891 = vunpack.c.l.b16 %v3756
    %v3892 = vunpack.c.l.b16 %v3757
    %v3893 = vunpack.c.l.b16 %v3758
    %v3894 = vunpack.c.l.b16 %v3759
    %v3895 = vunpack.c.l.b16 %v3760
    %v3896 = vunpack.c.l.b16 %v3761
    %v3897 = vunpack.c.l.b16 %v3762
    %v3898 = vunpack.c.l.b16 %v3763
    %v3899 = vunpack.c.l.b16 %v3764
    %v3900 = vunpack.c.l.b16 %v3765
    %v3901 = vunpack.c.l.b16 %v3766
    %v3902 = vunpack.c.l.b16 %v3767
    %v3903 = vunpack.c.l.b16 %v3768
    %v3904 = vunpack.c.l.b16 %v3769
    %v3905 = vunpack.c.l.b16 %v3770
    %v3906 = vunpack.c.l.b16 %v3771
    %v3907 = vunpack.c.l.b16 %v3772
    %v3908 = vunpack.c.l.b16 %v3773
    %v3909 = vunpack.c.l.b16 %v3774
    %v3910 = vunpack.c.l.b16 %v3775
    %v3911 = vunpack.c.l.b16 %v3776
    %v3912 = vunpack.c.l.b16 %v3777
    %v3913 = vunpack.c.l.b16 %v3778
    %v3914 = vunpack.c.l.b16 %v3779
    %v3915 = vunpack.c.l.b16 %v3780
    %v3916 = vunpack.c.l.b16 %v3781
    %v3917 = vunpack.c.l.b16 %v3782
    %v3918 = vunpack.c.l.b16 %v3783
    %v3919 = vunpack.c.l.b16 %v3784
    %v3920 = vunpack.c.l.b16 %v3785
    %v3921 = vunpack.c.l.b16 %v3786
    %v3922 = vunpack.c.l.b16 %v3787
    %v3923 = vunpack.c.l.b16 %v3788
    %v3924 = vunpack.c.l.b16 %v3789
    %v3925 = vunpack.c.l.b16 %v3790
    %v3926 = vunpack.c.l.b16 %v3791
    %v3927 = vunpack.c.l.b16 %v3792
    %v3928 = vunpack.c.l.b16 %v3793
    %v3929 = vunpack.c.l.b16 %v3794
    %v3930 = vunpack.c.l.b16 %v3795
    %v3931 = vunpack.c.l.b16 %v3796
    %v3932 = vunpack.c.l.b16 %v3797
    %v3933 = vunpack.c.l.b16 %v3798
    %v3934 = vunpack.c.l.b16 %v3799
    %v3935 = vunpack.c.l.b16 %v3800
    %v3936 = vunpack.c.l.b16 %v3801
    %v3937 = vunpack.c.l.b16 %v3802
    %v3938 = vunpack.c.l.b16 %v3803
    %v3939 = vunpack.c.l.b16 %v3804
    %v3940 = vunpack.c.l.b16 %v3805
    %v3941 = vunpack.c.l.b16 %v3806
    %v3942 = vunpack.c.l.b16 %v3807
    %v3943 = vunpack.c.l.b16 %v3808
    %v3944 = vunpack.c.l.b16 %v3809
    %v3945 = vpack.c.b16 %v3882, %v3881
    %v3946 = vpack.c.b16 %v3884, %v3883
    %v3947 = vpack.c.b16 %v3886, %v3885
    %v3948 = vpack.c.b16 %v3888, %v3887
    %v3949 = vpack.c.b16 %v3890, %v3889
    %v3950 = vpack.c.b16 %v3892, %v3891
    %v3951 = vpack.c.b16 %v3894, %v3893
    %v3952 = vpack.c.b16 %v3896, %v3895
    %v3953 = vpack.c.b16 %v3898, %v3897
    %v3954 = vpack.c.b16 %v3900, %v3899
    %v3955 = vpack.c.b16 %v3902, %v3901
    %v3956 = vpack.c.b16 %v3904, %v3903
    %v3957 = vpack.c.b16 %v3906, %v3905
    %v3958 = vpack.c.b16 %v3908, %v3907
    %v3959 = vpack.c.b16 %v3910, %v3909
    %v3960 = vpack.c.b16 %v3912, %v3911
    %v3961 = vpack.c.b16 %v3914, %v3913
    %v3962 = vpack.c.b16 %v3916, %v3915
    %v3963 = vpack.c.b16 %v3918, %v3917
    %v3964 = vpack.c.b16 %v3920, %v3919
    %v3965 = vpack.c.b16 %v3922, %v3921
    %v3966 = vpack.c.b16 %v3924, %v3923
    %v3967 = vpack.c.b16 %v3926, %v3925
    %v3968 = vpack.c.b16 %v3928, %v3927
    %v3969 = vpack.c.b16 %v3930, %v3929
    %v3970 = vpack.c.b16 %v3932, %v3931
    %v3971 = vpack.c.b16 %v3934, %v3933
    %v3972 = vpack.c.b16 %v3936, %v3935
    %v3973 = vpack.c.b16 %v3938, %v3937
    %v3974 = vpack.c.b16 %v3940, %v3939
    %v3975 = vpack.c.b16 %v3942, %v3941
    %v3976 = vpack.c.b16 %v3944, %v3943
    %4009 = vmatprep.subr.bf16.mxu0 0
    %4010 = vmatpush1.bf16.msra.mxu0 %v3952
    %4011 = vmatprep.subr.bf16.mxu0 0
    %4012 = vmatpush1.bf16.msra.mxu0 %v3951
    %4013 = vmatprep.subr.bf16.mxu0 0
    %4014 = vmatpush1.bf16.msra.mxu0 %v3950
    %4015 = vmatprep.subr.bf16.mxu0 0
    %4016 = vmatpush1.bf16.msra.mxu0 %v3949
    %4017 = vmatprep.subr.bf16.mxu0 0
    %4018 = vmatpush1.bf16.msra.mxu0 %v3948
    %4019 = vmatprep.subr.bf16.mxu0 0
    %4020 = vmatpush1.bf16.msra.mxu0 %v3947
    %4021 = vmatprep.subr.bf16.mxu0 0
    %4022 = vmatpush1.bf16.msra.mxu0 %v3946
    %4023 = vmatprep.subr.bf16.mxu0 0
    %4024 = vmatpush1.bf16.msra.mxu0 %v3945
    %4025 = vmatprep.subr.bf16.mxu0 0
    %4026 = vmatpush2.bf16.msra.mxu0 %v3960
    %4027 = vmatprep.subr.bf16.mxu0 0
    %4028 = vmatpush2.bf16.msra.mxu0 %v3959
    %4029 = vmatprep.subr.bf16.mxu0 0
    %4030 = vmatpush2.bf16.msra.mxu0 %v3958
    %4031 = vmatprep.subr.bf16.mxu0 0
    %4032 = vmatpush2.bf16.msra.mxu0 %v3957
    %4033 = vmatprep.subr.bf16.mxu0 0
    %4034 = vmatpush2.bf16.msra.mxu0 %v3956
    %4035 = vmatprep.subr.bf16.mxu0 0
    %4036 = vmatpush2.bf16.msra.mxu0 %v3955
    %4037 = vmatprep.subr.bf16.mxu0 0
    %4038 = vmatpush2.bf16.msra.mxu0 %v3954
    %4039 = vmatprep.subr.bf16.mxu0 0
    %4040 = vmatpush2.bf16.msra.mxu0 %v3953
    %4041 = vmatprep.mubr.bf16.mxu0 %v3743
    %4042 = vmatmul.mubr.bf16.gmra.mxu0 %v3742
    %v4043 = vpop.f32.mrf.mxu0
    %v4044 = vadd.f32 %v3815, %v4043
    %v4045 = vpop.f32.mrf.mxu0
    %v4046 = vpop.f32.mrf.mxu0
    %v4047 = vpop.f32.mrf.mxu0
    %4048 = vdwg.mxu0
    %4049 = vmatprep.subr.bf16.mxu0 0
    %4050 = vmatpush1.bf16.msra.mxu0 %v3968
    %4051 = vmatprep.subr.bf16.mxu0 0
    %4052 = vmatpush1.bf16.msra.mxu0 %v3967
    %4053 = vmatprep.subr.bf16.mxu0 0
    %4054 = vmatpush1.bf16.msra.mxu0 %v3966
    %4055 = vmatprep.subr.bf16.mxu0 0
    %4056 = vmatpush1.bf16.msra.mxu0 %v3965
    %4057 = vmatprep.subr.bf16.mxu0 0
    %4058 = vmatpush1.bf16.msra.mxu0 %v3964
    %4059 = vmatprep.subr.bf16.mxu0 0
    %4060 = vmatpush1.bf16.msra.mxu0 %v3963
    %4061 = vmatprep.subr.bf16.mxu0 0
    %4062 = vmatpush1.bf16.msra.mxu0 %v3962
    %4063 = vmatprep.subr.bf16.mxu0 0
    %4064 = vmatpush1.bf16.msra.mxu0 %v3961
    %4065 = vmatprep.subr.bf16.mxu0 0
    %4066 = vmatpush2.bf16.msra.mxu0 %v3976
    %4067 = vmatprep.subr.bf16.mxu0 0
    %4068 = vmatpush2.bf16.msra.mxu0 %v3975
    %4069 = vmatprep.subr.bf16.mxu0 0
    %4070 = vmatpush2.bf16.msra.mxu0 %v3974
    %4071 = vmatprep.subr.bf16.mxu0 0
    %4072 = vmatpush2.bf16.msra.mxu0 %v3973
    %4073 = vmatprep.subr.bf16.mxu0 0
    %4074 = vmatpush2.bf16.msra.mxu0 %v3972
    %4075 = vmatprep.subr.bf16.mxu0 0
    %4076 = vmatpush2.bf16.msra.mxu0 %v3971
    %4077 = vmatprep.subr.bf16.mxu0 0
    %4078 = vmatpush2.bf16.msra.mxu0 %v3970
    %4079 = vmatprep.subr.bf16.mxu0 0
    %4080 = vmatpush2.bf16.msra.mxu0 %v3969
    %4081 = vmatprep.mubr.bf16.mxu0 %v3745
    %4082 = vmatmul.mubr.bf16.gmra.mxu0 %v3744
    %v4083 = vpop.f32.mrf.mxu0
    %v4084 = vadd.f32 %v4044, %v4083
    %v4085 = vpop.f32.mrf.mxu0
    %v4086 = vpop.f32.mrf.mxu0
    %v4087 = vpop.f32.mrf.mxu0
    %4088 = vdwg.mxu0
    %v4089 = vld [vmem:[%s9] sm:$0x1]
    %v4091 = vlaneseq
    %v4092 = vshrl.u32 %v4091, 7
    %v4093 = vsub.s32 0, %v4092
    %v4094 = vrot.slane %v4089, %v4093
    %v4096 = vmul.f32 %v4084, %v4094
    %4097 = vst [vmem:[%s10] sm:$0xff] %v4096
    // Predicated region
    $region58: #{_mlp_forward_full.1} parent=1 // pred_check
      _
    $region59: #{_mlp_forward_full.1} parent=1 // pred_check_branch
      %4099 = sbr.rel (0) target = $region61
    $region60: #{_mlp_forward_full.1} parent=1 // pred_region
      _
    $region61: #{_mlp_forward_full.1} parent=1 // pred_fallthru
      _
    // Predicated region
    $region62: #{_mlp_forward_full.1} parent=1 // pred_check
      _
    $region63: #{_mlp_forward_full.1} parent=1 // pred_check_branch
      %4101 = sbr.rel (0) target = $region65
    $region64: #{_mlp_forward_full.1} parent=1 // pred_region
      _
    $region65: #{_mlp_forward_full.1} parent=1 // pred_fallthru
      _
    %4102 = vsyncpa [#allocation3], 1
    %4103 = vsyncpa [#allocation5], 1
    %4104 = vsyncpa [#allocation8], 1

</llo_original>
